<compile_context>
chip_gen: v6e
topology: v6e:2x2x1
jax: 0.10.0
libtpu: 0.0.40
codegen_flags: <defaults>
</compile_context>

<pallas_src>
import jax
import jax.numpy as jnp
from jax.experimental import pallas as pl
from jax.experimental.pallas import tpu as pltpu  # noqa: F401  (TPU backend)


# ----------------------------------------------------------------------------
# Fused kernel: whole Generator forward in one invocation (no grid).
# ----------------------------------------------------------------------------
def generator_kernel(
    # inputs (full-array VMEM blocks)
    lang_ref,
    img_w1_ref, img_b1_ref, img_w2_ref, img_b2_ref,
    st_w1_ref, st_b1_ref, st_w2_ref, st_b2_ref,
    li_wih_ref, li_whh_ref, li_b_ref,
    ls_wih_ref, ls_whh_ref, ls_b_ref,
    fin_w_ref, fin_b_ref,
    # output: (B, T, n_out) with n_out a multiple of 128 (image | state | pad)
    out_ref,
):
    f32 = jnp.float32
    lang = lang_ref[...]                                   # (B, t5)
    B = lang.shape[0]
    H = li_whh_ref.shape[0]                                # lstm hidden
    T = out_ref.shape[1]
    n_out = out_ref.shape[2]
    img_flat = img_w2_ref.shape[1]

    # ---- time-invariant part (runs once) ------------------------------------
    # image_fc: Linear -> ReLU -> Linear -> Tanh
    h_i = jnp.maximum(
        jnp.dot(lang, img_w1_ref[...], preferred_element_type=f32)
        + img_b1_ref[...], 0.0)
    img = jnp.tanh(
        jnp.dot(h_i, img_w2_ref[...], preferred_element_type=f32)
        + img_b2_ref[...])                                 # (B, 3*D*D)

    # state_fc: Linear -> ReLU -> Linear
    h_s = jnp.maximum(
        jnp.dot(lang, st_w1_ref[...], preferred_element_type=f32)
        + st_b1_ref[...], 0.0)
    st = (jnp.dot(h_s, st_w2_ref[...], preferred_element_type=f32)
          + st_b2_ref[...])                                # (B, state)

    # Hoisted input projections of both LSTMs (LSTM input is time-invariant).
    xw_img = (jnp.dot(img, li_wih_ref[...], preferred_element_type=f32)
              + li_b_ref[...])                             # (B, 4H)
    xw_st = (jnp.dot(st, ls_wih_ref[...], preferred_element_type=f32)
             + ls_b_ref[...])                              # (B, 4H)

    # Lane masks (2-D iota; gate order [i, f, g, o] packed along lanes).
    gate_lane = jax.lax.broadcasted_iota(jnp.int32, (B, 4 * H), 1)
    g_mask = (gate_lane >= 2 * H) & (gate_lane < 3 * H)    # tanh gate lanes
    out_lane = jax.lax.broadcasted_iota(jnp.int32, (B, n_out), 1)
    img_mask = out_lane < img_flat                         # tanh only on image lanes

    li_whh = li_whh_ref[...]                               # (H, 4H), hoisted loads
    ls_whh = ls_whh_ref[...]
    fin_w = fin_w_ref[...]                                 # (2H, n_out)
    fin_b = fin_b_ref[...]                                 # (1, n_out)

    def lstm_step(xw, whh, h, c):
        # One packed recurrent matmul -> all 4 gate pre-activations (B, 4H).
        pre = xw + jnp.dot(h, whh, preferred_element_type=f32)
        act = jnp.where(g_mask, jnp.tanh(pre), jax.nn.sigmoid(pre))
        i_g = act[:, 0 * H:1 * H]
        f_g = act[:, 1 * H:2 * H]
        g_g = act[:, 2 * H:3 * H]
        o_g = act[:, 3 * H:4 * H]
        c_new = f_g * c + i_g * g_g
        h_new = o_g * jnp.tanh(c_new)
        return h_new, c_new

    h_img = jnp.zeros((B, H), f32)
    c_img = jnp.zeros((B, H), f32)
    h_st = jnp.zeros((B, H), f32)
    c_st = jnp.zeros((B, H), f32)

    # ---- recurrence: fully unrolled over the (small, static) T timesteps ----
    for t in range(T):
        h_img, c_img = lstm_step(xw_img, li_whh, h_img, c_img)
        h_st, c_st = lstm_step(xw_st, ls_whh, h_st, c_st)

        # Fused final projections: block-diagonal (2H, n_out) weight ->
        # one lane-dense matmul gives [tanh(image) | state | pad] per step.
        h_cat = jnp.concatenate([h_img, h_st], axis=-1)          # (B, 2H)
        fin = (jnp.dot(h_cat, fin_w, preferred_element_type=f32)
               + fin_b)                                          # (B, n_out)
        out = jnp.where(img_mask, jnp.tanh(fin), fin)
        out_ref[:, t:t + 1, :] = out[:, None, :]                 # VMEM-resident store


# ----------------------------------------------------------------------------
# Wrapper
# ----------------------------------------------------------------------------
def generator_forward(params, lang_features, seq_len, *, state_dim, image_dim,
                      lstm_hidden_dim):
    B = lang_features.shape[0]
    T = seq_len
    D = image_dim
    H = lstm_hidden_dim
    img_flat = 3 * D * D
    # Lane-dense padded output width (image | state | zero pad).
    n_out = pl.cdiv(img_flat + state_dim, 128) * 128

    # Fused block-diagonal final projection: rows 0:H -> image cols,
    # rows H:2H -> state cols, everything else zero.
    fin_w = jnp.zeros((2 * H, n_out), jnp.float32)
    fin_w = fin_w.at[:H, :img_flat].set(params["fi_w"])
    fin_w = fin_w.at[H:, img_flat:img_flat + state_dim].set(params["fs_w"])
    fin_b = jnp.zeros((1, n_out), jnp.float32)
    fin_b = fin_b.at[:, :img_flat].set(params["fi_b"])
    fin_b = fin_b.at[:, img_flat:img_flat + state_dim].set(params["fs_b"])

    inputs = (
        lang_features,
        params["img_w1"], params["img_b1"], params["img_w2"], params["img_b2"],
        params["st_w1"], params["st_b1"], params["st_w2"], params["st_b2"],
        params["li_wih"], params["li_whh"], params["li_b"],
        params["ls_wih"], params["ls_whh"], params["ls_b"],
        fin_w, fin_b,
    )

    # No grid: full arrays are single VMEM-resident blocks; the recurrence is
    # internal to the kernel, so no dimension_semantics are needed.
    out = pl.pallas_call(
        generator_kernel,
        out_shape=jax.ShapeDtypeStruct((B, T, n_out), jnp.float32),
    )(*inputs)

    final_image_seq = out[..., :img_flat].reshape(B, T, 3, D, D)
    final_state_seq = out[..., img_flat:img_flat + state_dim]
    return final_state_seq, final_image_seq


# ----------------------------------------------------------------------------
# Parameter construction (deterministic, synthetic)
# ----------------------------------------------------------------------------
def init_params(key, *, state_dim, hidden_dim, t5_dim, image_dim, lstm_hidden_dim):
    img_flat = 3 * image_dim * image_dim
    H = lstm_hidden_dim

    def nrm(k, shape, scale=0.05):
        return (scale * jax.random.normal(k, shape)).astype(jnp.float32)

    ks = jax.random.split(key, 18)
    return {
        # image_fc: Linear(t5, hidden) -> ReLU -> Linear(hidden, 3*D*D) -> Tanh
        "img_w1": nrm(ks[0], (t5_dim, hidden_dim)),
        "img_b1": nrm(ks[1], (1, hidden_dim)),
        "img_w2": nrm(ks[2], (hidden_dim, img_flat)),
        "img_b2": nrm(ks[3], (1, img_flat)),
        # state_fc: Linear(t5, hidden) -> ReLU -> Linear(hidden, state_dim)
        "st_w1": nrm(ks[4], (t5_dim, hidden_dim)),
        "st_b1": nrm(ks[5], (1, hidden_dim)),
        "st_w2": nrm(ks[6], (hidden_dim, state_dim)),
        "st_b2": nrm(ks[7], (1, state_dim)),
        # LSTM weights with the 4 gates packed along the last (lane) axis,
        # torch gate order [i, f, g, o]:
        #   li_wih == weight_ih_l0.T   (In, 4H),  li_whh == weight_hh_l0.T (H, 4H)
        #   li_b   == bias_ih_l0 + bias_hh_l0 pre-summed, shape (1, 4H)
        "li_wih": nrm(ks[8], (img_flat, 4 * H)),
        "li_whh": nrm(ks[9], (H, 4 * H)),
        "li_b": nrm(ks[10], (1, 4 * H)),
        "ls_wih": nrm(ks[11], (state_dim, 4 * H)),
        "ls_whh": nrm(ks[12], (H, 4 * H)),
        "ls_b": nrm(ks[13], (1, 4 * H)),
        # final_image_fc: Linear(H, 3*D*D) -> Tanh
        "fi_w": nrm(ks[14], (H, img_flat)),
        "fi_b": nrm(ks[15], (1, img_flat)),
        # final_state_fc: Linear(H, state_dim)
        "fs_w": nrm(ks[16], (H, state_dim)),
        "fs_b": nrm(ks[17], (1, state_dim)),
    }


# ----------------------------------------------------------------------------
# Pure-JAX reference (same math, no Pallas) for a correctness check.
# ----------------------------------------------------------------------------
def generator_reference(params, lang, seq_len, *, state_dim, image_dim,
                        lstm_hidden_dim):
    B = lang.shape[0]
    T = seq_len
    D = image_dim
    H = lstm_hidden_dim

    h1 = jnp.maximum(lang @ params["img_w1"] + params["img_b1"], 0.0)
    img = jnp.tanh(h1 @ params["img_w2"] + params["img_b2"])
    h2 = jnp.maximum(lang @ params["st_w1"] + params["st_b1"], 0.0)
    st = h2 @ params["st_w2"] + params["st_b2"]

    def run_lstm(x, wih, whh, b):
        h = jnp.zeros((B, H), jnp.float32)
        c = jnp.zeros((B, H), jnp.float32)
        xw = x @ wih + b
        hs = []
        for _ in range(T):
            pre = xw + h @ whh
            i = jax.nn.sigmoid(pre[:, 0 * H:1 * H])
            f = jax.nn.sigmoid(pre[:, 1 * H:2 * H])
            g = jnp.tanh(pre[:, 2 * H:3 * H])
            o = jax.nn.sigmoid(pre[:, 3 * H:4 * H])
            c = f * c + i * g
            h = o * jnp.tanh(c)
            hs.append(h)
        return jnp.stack(hs, axis=1)                      # (B, T, H)

    inv_img = run_lstm(img, params["li_wih"], params["li_whh"], params["li_b"])
    inv_st = run_lstm(st, params["ls_wih"], params["ls_whh"], params["ls_b"])

    fin_img = jnp.tanh(inv_img @ params["fi_w"] + params["fi_b"])
    fin_st = inv_st @ params["fs_w"] + params["fs_b"]
    return fin_st, fin_img.reshape(B, T, 3, D, D)


# ----------------------------------------------------------------------------
if __name__ == "__main__":
    STATE_DIM = 9
    HIDDEN_DIM = 32
    T5_DIM = 64
    IMAGE_DIM = 8
    LSTM_HIDDEN_DIM = 32
    BATCH = 2
    SEQ_LEN = 8

    key = jax.random.PRNGKey(0)
    pkey, xkey = jax.random.split(key)

    params = init_params(pkey, state_dim=STATE_DIM, hidden_dim=HIDDEN_DIM,
                         t5_dim=T5_DIM, image_dim=IMAGE_DIM,
                         lstm_hidden_dim=LSTM_HIDDEN_DIM)

    # Stand-in for T5Encoder.embed_text(lang): deterministic (B, t5_dim) features.
    lang_features = jax.random.normal(xkey, (BATCH, T5_DIM), dtype=jnp.float32)

    final_state_seq, final_image_seq = generator_forward(
        params, lang_features, SEQ_LEN,
        state_dim=STATE_DIM, image_dim=IMAGE_DIM,
        lstm_hidden_dim=LSTM_HIDDEN_DIM)
    jax.block_until_ready((final_state_seq, final_image_seq))

    assert final_state_seq.shape == (BATCH, SEQ_LEN, STATE_DIM)
    assert final_image_seq.shape == (BATCH, SEQ_LEN, 3, IMAGE_DIM, IMAGE_DIM)
    assert bool(jnp.all(jnp.isfinite(final_state_seq)))
    assert bool(jnp.all(jnp.isfinite(final_image_seq)))

    ref_state, ref_image = generator_reference(
        params, lang_features, SEQ_LEN,
        state_dim=STATE_DIM, image_dim=IMAGE_DIM,
        lstm_hidden_dim=LSTM_HIDDEN_DIM)
    assert float(jnp.max(jnp.abs(final_state_seq - ref_state))) < 2e-3
    assert float(jnp.max(jnp.abs(final_image_seq - ref_image))) < 2e-3

    print("KERNEL_OK")
</pallas_src>

<mosaic_0001>
module attributes {stable_mosaic.version = 11 : i64} {
  func.func @generator_kernel(%arg0: memref<2x64xf32, #tpu.memory_space<vmem>>, %arg1: memref<64x32xf32, #tpu.memory_space<vmem>>, %arg2: memref<1x32xf32, #tpu.memory_space<vmem>>, %arg3: memref<32x192xf32, #tpu.memory_space<vmem>>, %arg4: memref<1x192xf32, #tpu.memory_space<vmem>>, %arg5: memref<64x32xf32, #tpu.memory_space<vmem>>, %arg6: memref<1x32xf32, #tpu.memory_space<vmem>>, %arg7: memref<32x9xf32, #tpu.memory_space<vmem>>, %arg8: memref<1x9xf32, #tpu.memory_space<vmem>>, %arg9: memref<192x128xf32, #tpu.memory_space<vmem>>, %arg10: memref<32x128xf32, #tpu.memory_space<vmem>>, %arg11: memref<1x128xf32, #tpu.memory_space<vmem>>, %arg12: memref<9x128xf32, #tpu.memory_space<vmem>>, %arg13: memref<32x128xf32, #tpu.memory_space<vmem>>, %arg14: memref<1x128xf32, #tpu.memory_space<vmem>>, %arg15: memref<64x256xf32, #tpu.memory_space<vmem>>, %arg16: memref<1x256xf32, #tpu.memory_space<vmem>>, %arg17: memref<2x8x256xf32, #tpu.memory_space<vmem>>) attributes {dimension_semantics = [], scalar_prefetch = 0 : i64, scratch_operands = 0 : i64, tpu.core_type = #tpu.core_type<tc>} {
    %c0 = arith.constant 0 : index
    %c0_0 = arith.constant 0 : index
    %0 = vector.load %arg0[%c0, %c0_0] : memref<2x64xf32, #tpu.memory_space<vmem>>, vector<2x64xf32>
    %c0_1 = arith.constant 0 : index
    %c0_2 = arith.constant 0 : index
    %1 = vector.load %arg1[%c0_1, %c0_2] : memref<64x32xf32, #tpu.memory_space<vmem>>, vector<64x32xf32>
    %cst = arith.constant dense<0.000000e+00> : vector<2x32xf32>
    %2 = tpu.matmul %0, %1, %cst {dimension_numbers = #tpu.dot_dimension_numbers<[1], [0], [0], [1], [0, 0, 1, 1], [], []>} : vector<2x64xf32>, vector<64x32xf32>, vector<2x32xf32> -> vector<2x32xf32>
    %c0_3 = arith.constant 0 : index
    %c0_4 = arith.constant 0 : index
    %3 = vector.load %arg2[%c0_3, %c0_4] : memref<1x32xf32, #tpu.memory_space<vmem>>, vector<1x32xf32>
    %4 = vector.broadcast %3 : vector<1x32xf32> to vector<2x32xf32>
    %5 = arith.addf %2, %4 : vector<2x32xf32>
    %cst_5 = arith.constant 0.000000e+00 : f32
    %6 = vector.broadcast %cst_5 : f32 to vector<2x32xf32>
    %7 = arith.maximumf %5, %6 : vector<2x32xf32>
    %c0_6 = arith.constant 0 : index
    %c0_7 = arith.constant 0 : index
    %8 = vector.load %arg3[%c0_6, %c0_7] : memref<32x192xf32, #tpu.memory_space<vmem>>, vector<32x192xf32>
    %cst_8 = arith.constant dense<0.000000e+00> : vector<2x192xf32>
    %9 = tpu.matmul %7, %8, %cst_8 {dimension_numbers = #tpu.dot_dimension_numbers<[1], [0], [0], [1], [0, 0, 1, 1], [], []>} : vector<2x32xf32>, vector<32x192xf32>, vector<2x192xf32> -> vector<2x192xf32>
    %c0_9 = arith.constant 0 : index
    %c0_10 = arith.constant 0 : index
    %10 = vector.load %arg4[%c0_9, %c0_10] : memref<1x192xf32, #tpu.memory_space<vmem>>, vector<1x192xf32>
    %11 = vector.broadcast %10 : vector<1x192xf32> to vector<2x192xf32>
    %12 = arith.addf %9, %11 : vector<2x192xf32>
    %13 = math.tanh %12 : vector<2x192xf32>
    %c0_11 = arith.constant 0 : index
    %c0_12 = arith.constant 0 : index
    %14 = vector.load %arg5[%c0_11, %c0_12] : memref<64x32xf32, #tpu.memory_space<vmem>>, vector<64x32xf32>
    %cst_13 = arith.constant dense<0.000000e+00> : vector<2x32xf32>
    %15 = tpu.matmul %0, %14, %cst_13 {dimension_numbers = #tpu.dot_dimension_numbers<[1], [0], [0], [1], [0, 0, 1, 1], [], []>} : vector<2x64xf32>, vector<64x32xf32>, vector<2x32xf32> -> vector<2x32xf32>
    %c0_14 = arith.constant 0 : index
    %c0_15 = arith.constant 0 : index
    %16 = vector.load %arg6[%c0_14, %c0_15] : memref<1x32xf32, #tpu.memory_space<vmem>>, vector<1x32xf32>
    %17 = vector.broadcast %16 : vector<1x32xf32> to vector<2x32xf32>
    %18 = arith.addf %15, %17 : vector<2x32xf32>
    %cst_16 = arith.constant 0.000000e+00 : f32
    %19 = vector.broadcast %cst_16 : f32 to vector<2x32xf32>
    %20 = arith.maximumf %18, %19 : vector<2x32xf32>
    %c0_17 = arith.constant 0 : index
    %c0_18 = arith.constant 0 : index
    %21 = vector.load %arg7[%c0_17, %c0_18] : memref<32x9xf32, #tpu.memory_space<vmem>>, vector<32x9xf32>
    %cst_19 = arith.constant dense<0.000000e+00> : vector<2x9xf32>
    %22 = tpu.matmul %20, %21, %cst_19 {dimension_numbers = #tpu.dot_dimension_numbers<[1], [0], [0], [1], [0, 0, 1, 1], [], []>} : vector<2x32xf32>, vector<32x9xf32>, vector<2x9xf32> -> vector<2x9xf32>
    %c0_20 = arith.constant 0 : index
    %c0_21 = arith.constant 0 : index
    %23 = vector.load %arg8[%c0_20, %c0_21] : memref<1x9xf32, #tpu.memory_space<vmem>>, vector<1x9xf32>
    %24 = vector.broadcast %23 : vector<1x9xf32> to vector<2x9xf32>
    %25 = arith.addf %22, %24 : vector<2x9xf32>
    %c0_22 = arith.constant 0 : index
    %c0_23 = arith.constant 0 : index
    %26 = vector.load %arg9[%c0_22, %c0_23] : memref<192x128xf32, #tpu.memory_space<vmem>>, vector<192x128xf32>
    %cst_24 = arith.constant dense<0.000000e+00> : vector<2x128xf32>
    %27 = tpu.matmul %13, %26, %cst_24 {dimension_numbers = #tpu.dot_dimension_numbers<[1], [0], [0], [1], [0, 0, 1, 1], [], []>} : vector<2x192xf32>, vector<192x128xf32>, vector<2x128xf32> -> vector<2x128xf32>
    %c0_25 = arith.constant 0 : index
    %c0_26 = arith.constant 0 : index
    %28 = vector.load %arg11[%c0_25, %c0_26] : memref<1x128xf32, #tpu.memory_space<vmem>>, vector<1x128xf32>
    %29 = vector.broadcast %28 : vector<1x128xf32> to vector<2x128xf32>
    %30 = arith.addf %27, %29 : vector<2x128xf32>
    %c0_27 = arith.constant 0 : index
    %c0_28 = arith.constant 0 : index
    %31 = vector.load %arg12[%c0_27, %c0_28] : memref<9x128xf32, #tpu.memory_space<vmem>>, vector<9x128xf32>
    %cst_29 = arith.constant dense<0.000000e+00> : vector<2x128xf32>
    %32 = tpu.matmul %25, %31, %cst_29 {dimension_numbers = #tpu.dot_dimension_numbers<[1], [0], [0], [1], [0, 0, 1, 1], [], []>} : vector<2x9xf32>, vector<9x128xf32>, vector<2x128xf32> -> vector<2x128xf32>
    %c0_30 = arith.constant 0 : index
    %c0_31 = arith.constant 0 : index
    %33 = vector.load %arg14[%c0_30, %c0_31] : memref<1x128xf32, #tpu.memory_space<vmem>>, vector<1x128xf32>
    %34 = vector.broadcast %33 : vector<1x128xf32> to vector<2x128xf32>
    %35 = arith.addf %32, %34 : vector<2x128xf32>
    %36 = tpu.iota {dimensions = array<i32: 1>} : vector<2x128xi32>
    %c64_i32 = arith.constant 64 : i32
    %37 = vector.broadcast %c64_i32 : i32 to vector<2x128xi32>
    %38 = arith.cmpi sge, %36, %37 : vector<2x128xi32>
    %c96_i32 = arith.constant 96 : i32
    %39 = vector.broadcast %c96_i32 : i32 to vector<2x128xi32>
    %40 = arith.cmpi slt, %36, %39 : vector<2x128xi32>
    %41 = arith.andi %38, %40 : vector<2x128xi1>
    %42 = tpu.iota {dimensions = array<i32: 1>} : vector<2x256xi32>
    %c192_i32 = arith.constant 192 : i32
    %43 = vector.broadcast %c192_i32 : i32 to vector<2x256xi32>
    %44 = arith.cmpi slt, %42, %43 : vector<2x256xi32>
    %c0_32 = arith.constant 0 : index
    %c0_33 = arith.constant 0 : index
    %45 = vector.load %arg10[%c0_32, %c0_33] : memref<32x128xf32, #tpu.memory_space<vmem>>, vector<32x128xf32>
    %c0_34 = arith.constant 0 : index
    %c0_35 = arith.constant 0 : index
    %46 = vector.load %arg13[%c0_34, %c0_35] : memref<32x128xf32, #tpu.memory_space<vmem>>, vector<32x128xf32>
    %c0_36 = arith.constant 0 : index
    %c0_37 = arith.constant 0 : index
    %47 = vector.load %arg15[%c0_36, %c0_37] : memref<64x256xf32, #tpu.memory_space<vmem>>, vector<64x256xf32>
    %c0_38 = arith.constant 0 : index
    %c0_39 = arith.constant 0 : index
    %48 = vector.load %arg16[%c0_38, %c0_39] : memref<1x256xf32, #tpu.memory_space<vmem>>, vector<1x256xf32>
    %cst_40 = arith.constant 0.000000e+00 : f32
    %49 = vector.broadcast %cst_40 : f32 to vector<2x32xf32>
    %cst_41 = arith.constant 0.000000e+00 : f32
    %50 = vector.broadcast %cst_41 : f32 to vector<2x32xf32>
    %cst_42 = arith.constant 0.000000e+00 : f32
    %51 = vector.broadcast %cst_42 : f32 to vector<2x32xf32>
    %cst_43 = arith.constant 0.000000e+00 : f32
    %52 = vector.broadcast %cst_43 : f32 to vector<2x32xf32>
    %cst_44 = arith.constant dense<0.000000e+00> : vector<2x128xf32>
    %53 = tpu.matmul %49, %45, %cst_44 {dimension_numbers = #tpu.dot_dimension_numbers<[1], [0], [0], [1], [0, 0, 1, 1], [], []>} : vector<2x32xf32>, vector<32x128xf32>, vector<2x128xf32> -> vector<2x128xf32>
    %54 = arith.addf %30, %53 : vector<2x128xf32>
    %55 = math.tanh %54 : vector<2x128xf32>
    %56 = arith.negf %54 : vector<2x128xf32>
    %57 = math.exp %56 : vector<2x128xf32>
    %cst_45 = arith.constant 1.000000e+00 : f32
    %58 = vector.broadcast %cst_45 : f32 to vector<2x128xf32>
    %59 = arith.addf %58, %57 : vector<2x128xf32>
    %60 = arith.divf %58, %59 : vector<2x128xf32>
    %61 = arith.select %41, %55, %60 : vector<2x128xi1>, vector<2x128xf32>
    %62 = vector.extract_strided_slice %61 {offsets = [0, 0], sizes = [2, 32], strides = [1, 1]} : vector<2x128xf32> to vector<2x32xf32>
    %63 = vector.extract_strided_slice %61 {offsets = [0, 32], sizes = [2, 32], strides = [1, 1]} : vector<2x128xf32> to vector<2x32xf32>
    %64 = vector.extract_strided_slice %61 {offsets = [0, 64], sizes = [2, 32], strides = [1, 1]} : vector<2x128xf32> to vector<2x32xf32>
    %65 = vector.extract_strided_slice %61 {offsets = [0, 96], sizes = [2, 32], strides = [1, 1]} : vector<2x128xf32> to vector<2x32xf32>
    %66 = arith.mulf %63, %50 : vector<2x32xf32>
    %67 = arith.mulf %62, %64 : vector<2x32xf32>
    %68 = arith.addf %66, %67 : vector<2x32xf32>
    %69 = math.tanh %68 : vector<2x32xf32>
    %70 = arith.mulf %65, %69 : vector<2x32xf32>
    %cst_46 = arith.constant dense<0.000000e+00> : vector<2x128xf32>
    %71 = tpu.matmul %51, %46, %cst_46 {dimension_numbers = #tpu.dot_dimension_numbers<[1], [0], [0], [1], [0, 0, 1, 1], [], []>} : vector<2x32xf32>, vector<32x128xf32>, vector<2x128xf32> -> vector<2x128xf32>
    %72 = arith.addf %35, %71 : vector<2x128xf32>
    %73 = math.tanh %72 : vector<2x128xf32>
    %74 = arith.negf %72 : vector<2x128xf32>
    %75 = math.exp %74 : vector<2x128xf32>
    %cst_47 = arith.constant 1.000000e+00 : f32
    %76 = vector.broadcast %cst_47 : f32 to vector<2x128xf32>
    %77 = arith.addf %76, %75 : vector<2x128xf32>
    %78 = arith.divf %76, %77 : vector<2x128xf32>
    %79 = arith.select %41, %73, %78 : vector<2x128xi1>, vector<2x128xf32>
    %80 = vector.extract_strided_slice %79 {offsets = [0, 0], sizes = [2, 32], strides = [1, 1]} : vector<2x128xf32> to vector<2x32xf32>
    %81 = vector.extract_strided_slice %79 {offsets = [0, 32], sizes = [2, 32], strides = [1, 1]} : vector<2x128xf32> to vector<2x32xf32>
    %82 = vector.extract_strided_slice %79 {offsets = [0, 64], sizes = [2, 32], strides = [1, 1]} : vector<2x128xf32> to vector<2x32xf32>
    %83 = vector.extract_strided_slice %79 {offsets = [0, 96], sizes = [2, 32], strides = [1, 1]} : vector<2x128xf32> to vector<2x32xf32>
    %84 = arith.mulf %81, %52 : vector<2x32xf32>
    %85 = arith.mulf %80, %82 : vector<2x32xf32>
    %86 = arith.addf %84, %85 : vector<2x32xf32>
    %87 = math.tanh %86 : vector<2x32xf32>
    %88 = arith.mulf %83, %87 : vector<2x32xf32>
    %89 = tpu.concatenate %70, %88 in 1 : vector<2x32xf32>, vector<2x32xf32> -> vector<2x64xf32>
    %cst_48 = arith.constant dense<0.000000e+00> : vector<2x256xf32>
    %90 = tpu.matmul %89, %47, %cst_48 {dimension_numbers = #tpu.dot_dimension_numbers<[1], [0], [0], [1], [0, 0, 1, 1], [], []>} : vector<2x64xf32>, vector<64x256xf32>, vector<2x256xf32> -> vector<2x256xf32>
    %91 = vector.broadcast %48 : vector<1x256xf32> to vector<2x256xf32>
    %92 = arith.addf %90, %91 : vector<2x256xf32>
    %93 = math.tanh %92 : vector<2x256xf32>
    %94 = arith.select %44, %93, %92 : vector<2x256xi1>, vector<2x256xf32>
    %95 = vector.shape_cast %94 : vector<2x256xf32> to vector<2x1x256xf32>
    %c0_49 = arith.constant 0 : index
    %c0_50 = arith.constant 0 : index
    %c0_51 = arith.constant 0 : index
    %96 = vector.load %arg17[%c0_49, %c0_50, %c0_51] : memref<2x8x256xf32, #tpu.memory_space<vmem>>, vector<2x1x256xf32>
    tpu.vector_store %arg17[%c0_49, %c0_50, %c0_51], %95 {strides = array<i32>} : memref<2x8x256xf32, #tpu.memory_space<vmem>>, vector<2x1x256xf32>,
    %cst_52 = arith.constant dense<0.000000e+00> : vector<2x128xf32>
    %97 = tpu.matmul %70, %45, %cst_52 {dimension_numbers = #tpu.dot_dimension_numbers<[1], [0], [0], [1], [0, 0, 1, 1], [], []>} : vector<2x32xf32>, vector<32x128xf32>, vector<2x128xf32> -> vector<2x128xf32>
    %98 = arith.addf %30, %97 : vector<2x128xf32>
    %99 = math.tanh %98 : vector<2x128xf32>
    %100 = arith.negf %98 : vector<2x128xf32>
    %101 = math.exp %100 : vector<2x128xf32>
    %cst_53 = arith.constant 1.000000e+00 : f32
    %102 = vector.broadcast %cst_53 : f32 to vector<2x128xf32>
    %103 = arith.addf %102, %101 : vector<2x128xf32>
    %104 = arith.divf %102, %103 : vector<2x128xf32>
    %105 = arith.select %41, %99, %104 : vector<2x128xi1>, vector<2x128xf32>
    %106 = vector.extract_strided_slice %105 {offsets = [0, 0], sizes = [2, 32], strides = [1, 1]} : vector<2x128xf32> to vector<2x32xf32>
    %107 = vector.extract_strided_slice %105 {offsets = [0, 32], sizes = [2, 32], strides = [1, 1]} : vector<2x128xf32> to vector<2x32xf32>
    %108 = vector.extract_strided_slice %105 {offsets = [0, 64], sizes = [2, 32], strides = [1, 1]} : vector<2x128xf32> to vector<2x32xf32>
    %109 = vector.extract_strided_slice %105 {offsets = [0, 96], sizes = [2, 32], strides = [1, 1]} : vector<2x128xf32> to vector<2x32xf32>
    %110 = arith.mulf %107, %68 : vector<2x32xf32>
    %111 = arith.mulf %106, %108 : vector<2x32xf32>
    %112 = arith.addf %110, %111 : vector<2x32xf32>
    %113 = math.tanh %112 : vector<2x32xf32>
    %114 = arith.mulf %109, %113 : vector<2x32xf32>
    %cst_54 = arith.constant dense<0.000000e+00> : vector<2x128xf32>
    %115 = tpu.matmul %88, %46, %cst_54 {dimension_numbers = #tpu.dot_dimension_numbers<[1], [0], [0], [1], [0, 0, 1, 1], [], []>} : vector<2x32xf32>, vector<32x128xf32>, vector<2x128xf32> -> vector<2x128xf32>
    %116 = arith.addf %35, %115 : vector<2x128xf32>
    %117 = math.tanh %116 : vector<2x128xf32>
    %118 = arith.negf %116 : vector<2x128xf32>
    %119 = math.exp %118 : vector<2x128xf32>
    %cst_55 = arith.constant 1.000000e+00 : f32
    %120 = vector.broadcast %cst_55 : f32 to vector<2x128xf32>
    %121 = arith.addf %120, %119 : vector<2x128xf32>
    %122 = arith.divf %120, %121 : vector<2x128xf32>
    %123 = arith.select %41, %117, %122 : vector<2x128xi1>, vector<2x128xf32>
    %124 = vector.extract_strided_slice %123 {offsets = [0, 0], sizes = [2, 32], strides = [1, 1]} : vector<2x128xf32> to vector<2x32xf32>
    %125 = vector.extract_strided_slice %123 {offsets = [0, 32], sizes = [2, 32], strides = [1, 1]} : vector<2x128xf32> to vector<2x32xf32>
    %126 = vector.extract_strided_slice %123 {offsets = [0, 64], sizes = [2, 32], strides = [1, 1]} : vector<2x128xf32> to vector<2x32xf32>
    %127 = vector.extract_strided_slice %123 {offsets = [0, 96], sizes = [2, 32], strides = [1, 1]} : vector<2x128xf32> to vector<2x32xf32>
    %128 = arith.mulf %125, %86 : vector<2x32xf32>
    %129 = arith.mulf %124, %126 : vector<2x32xf32>
    %130 = arith.addf %128, %129 : vector<2x32xf32>
    %131 = math.tanh %130 : vector<2x32xf32>
    %132 = arith.mulf %127, %131 : vector<2x32xf32>
    %133 = tpu.concatenate %114, %132 in 1 : vector<2x32xf32>, vector<2x32xf32> -> vector<2x64xf32>
    %cst_56 = arith.constant dense<0.000000e+00> : vector<2x256xf32>
    %134 = tpu.matmul %133, %47, %cst_56 {dimension_numbers = #tpu.dot_dimension_numbers<[1], [0], [0], [1], [0, 0, 1, 1], [], []>} : vector<2x64xf32>, vector<64x256xf32>, vector<2x256xf32> -> vector<2x256xf32>
    %135 = vector.broadcast %48 : vector<1x256xf32> to vector<2x256xf32>
    %136 = arith.addf %134, %135 : vector<2x256xf32>
    %137 = math.tanh %136 : vector<2x256xf32>
    %138 = arith.select %44, %137, %136 : vector<2x256xi1>, vector<2x256xf32>
    %139 = vector.shape_cast %138 : vector<2x256xf32> to vector<2x1x256xf32>
    %c0_57 = arith.constant 0 : index
    %c1 = arith.constant 1 : index
    %c0_58 = arith.constant 0 : index
    %140 = vector.load %arg17[%c0_57, %c1, %c0_58] : memref<2x8x256xf32, #tpu.memory_space<vmem>>, vector<2x1x256xf32>
    tpu.vector_store %arg17[%c0_57, %c1, %c0_58], %139 {strides = array<i32>} : memref<2x8x256xf32, #tpu.memory_space<vmem>>, vector<2x1x256xf32>,
    %cst_59 = arith.constant dense<0.000000e+00> : vector<2x128xf32>
    %141 = tpu.matmul %114, %45, %cst_59 {dimension_numbers = #tpu.dot_dimension_numbers<[1], [0], [0], [1], [0, 0, 1, 1], [], []>} : vector<2x32xf32>, vector<32x128xf32>, vector<2x128xf32> -> vector<2x128xf32>
    %142 = arith.addf %30, %141 : vector<2x128xf32>
    %143 = math.tanh %142 : vector<2x128xf32>
    %144 = arith.negf %142 : vector<2x128xf32>
    %145 = math.exp %144 : vector<2x128xf32>
    %cst_60 = arith.constant 1.000000e+00 : f32
    %146 = vector.broadcast %cst_60 : f32 to vector<2x128xf32>
    %147 = arith.addf %146, %145 : vector<2x128xf32>
    %148 = arith.divf %146, %147 : vector<2x128xf32>
    %149 = arith.select %41, %143, %148 : vector<2x128xi1>, vector<2x128xf32>
    %150 = vector.extract_strided_slice %149 {offsets = [0, 0], sizes = [2, 32], strides = [1, 1]} : vector<2x128xf32> to vector<2x32xf32>
    %151 = vector.extract_strided_slice %149 {offsets = [0, 32], sizes = [2, 32], strides = [1, 1]} : vector<2x128xf32> to vector<2x32xf32>
    %152 = vector.extract_strided_slice %149 {offsets = [0, 64], sizes = [2, 32], strides = [1, 1]} : vector<2x128xf32> to vector<2x32xf32>
    %153 = vector.extract_strided_slice %149 {offsets = [0, 96], sizes = [2, 32], strides = [1, 1]} : vector<2x128xf32> to vector<2x32xf32>
    %154 = arith.mulf %151, %112 : vector<2x32xf32>
    %155 = arith.mulf %150, %152 : vector<2x32xf32>
    %156 = arith.addf %154, %155 : vector<2x32xf32>
    %157 = math.tanh %156 : vector<2x32xf32>
    %158 = arith.mulf %153, %157 : vector<2x32xf32>
    %cst_61 = arith.constant dense<0.000000e+00> : vector<2x128xf32>
    %159 = tpu.matmul %132, %46, %cst_61 {dimension_numbers = #tpu.dot_dimension_numbers<[1], [0], [0], [1], [0, 0, 1, 1], [], []>} : vector<2x32xf32>, vector<32x128xf32>, vector<2x128xf32> -> vector<2x128xf32>
    %160 = arith.addf %35, %159 : vector<2x128xf32>
    %161 = math.tanh %160 : vector<2x128xf32>
    %162 = arith.negf %160 : vector<2x128xf32>
    %163 = math.exp %162 : vector<2x128xf32>
    %cst_62 = arith.constant 1.000000e+00 : f32
    %164 = vector.broadcast %cst_62 : f32 to vector<2x128xf32>
    %165 = arith.addf %164, %163 : vector<2x128xf32>
    %166 = arith.divf %164, %165 : vector<2x128xf32>
    %167 = arith.select %41, %161, %166 : vector<2x128xi1>, vector<2x128xf32>
    %168 = vector.extract_strided_slice %167 {offsets = [0, 0], sizes = [2, 32], strides = [1, 1]} : vector<2x128xf32> to vector<2x32xf32>
    %169 = vector.extract_strided_slice %167 {offsets = [0, 32], sizes = [2, 32], strides = [1, 1]} : vector<2x128xf32> to vector<2x32xf32>
    %170 = vector.extract_strided_slice %167 {offsets = [0, 64], sizes = [2, 32], strides = [1, 1]} : vector<2x128xf32> to vector<2x32xf32>
    %171 = vector.extract_strided_slice %167 {offsets = [0, 96], sizes = [2, 32], strides = [1, 1]} : vector<2x128xf32> to vector<2x32xf32>
    %172 = arith.mulf %169, %130 : vector<2x32xf32>
    %173 = arith.mulf %168, %170 : vector<2x32xf32>
    %174 = arith.addf %172, %173 : vector<2x32xf32>
    %175 = math.tanh %174 : vector<2x32xf32>
    %176 = arith.mulf %171, %175 : vector<2x32xf32>
    %177 = tpu.concatenate %158, %176 in 1 : vector<2x32xf32>, vector<2x32xf32> -> vector<2x64xf32>
    %cst_63 = arith.constant dense<0.000000e+00> : vector<2x256xf32>
    %178 = tpu.matmul %177, %47, %cst_63 {dimension_numbers = #tpu.dot_dimension_numbers<[1], [0], [0], [1], [0, 0, 1, 1], [], []>} : vector<2x64xf32>, vector<64x256xf32>, vector<2x256xf32> -> vector<2x256xf32>
    %179 = vector.broadcast %48 : vector<1x256xf32> to vector<2x256xf32>
    %180 = arith.addf %178, %179 : vector<2x256xf32>
    %181 = math.tanh %180 : vector<2x256xf32>
    %182 = arith.select %44, %181, %180 : vector<2x256xi1>, vector<2x256xf32>
    %183 = vector.shape_cast %182 : vector<2x256xf32> to vector<2x1x256xf32>
    %c0_64 = arith.constant 0 : index
    %c2 = arith.constant 2 : index
    %c0_65 = arith.constant 0 : index
    %184 = vector.load %arg17[%c0_64, %c2, %c0_65] : memref<2x8x256xf32, #tpu.memory_space<vmem>>, vector<2x1x256xf32>
    tpu.vector_store %arg17[%c0_64, %c2, %c0_65], %183 {strides = array<i32>} : memref<2x8x256xf32, #tpu.memory_space<vmem>>, vector<2x1x256xf32>,
    %cst_66 = arith.constant dense<0.000000e+00> : vector<2x128xf32>
    %185 = tpu.matmul %158, %45, %cst_66 {dimension_numbers = #tpu.dot_dimension_numbers<[1], [0], [0], [1], [0, 0, 1, 1], [], []>} : vector<2x32xf32>, vector<32x128xf32>, vector<2x128xf32> -> vector<2x128xf32>
    %186 = arith.addf %30, %185 : vector<2x128xf32>
    %187 = math.tanh %186 : vector<2x128xf32>
    %188 = arith.negf %186 : vector<2x128xf32>
    %189 = math.exp %188 : vector<2x128xf32>
    %cst_67 = arith.constant 1.000000e+00 : f32
    %190 = vector.broadcast %cst_67 : f32 to vector<2x128xf32>
    %191 = arith.addf %190, %189 : vector<2x128xf32>
    %192 = arith.divf %190, %191 : vector<2x128xf32>
    %193 = arith.select %41, %187, %192 : vector<2x128xi1>, vector<2x128xf32>
    %194 = vector.extract_strided_slice %193 {offsets = [0, 0], sizes = [2, 32], strides = [1, 1]} : vector<2x128xf32> to vector<2x32xf32>
    %195 = vector.extract_strided_slice %193 {offsets = [0, 32], sizes = [2, 32], strides = [1, 1]} : vector<2x128xf32> to vector<2x32xf32>
    %196 = vector.extract_strided_slice %193 {offsets = [0, 64], sizes = [2, 32], strides = [1, 1]} : vector<2x128xf32> to vector<2x32xf32>
    %197 = vector.extract_strided_slice %193 {offsets = [0, 96], sizes = [2, 32], strides = [1, 1]} : vector<2x128xf32> to vector<2x32xf32>
    %198 = arith.mulf %195, %156 : vector<2x32xf32>
    %199 = arith.mulf %194, %196 : vector<2x32xf32>
    %200 = arith.addf %198, %199 : vector<2x32xf32>
    %201 = math.tanh %200 : vector<2x32xf32>
    %202 = arith.mulf %197, %201 : vector<2x32xf32>
    %cst_68 = arith.constant dense<0.000000e+00> : vector<2x128xf32>
    %203 = tpu.matmul %176, %46, %cst_68 {dimension_numbers = #tpu.dot_dimension_numbers<[1], [0], [0], [1], [0, 0, 1, 1], [], []>} : vector<2x32xf32>, vector<32x128xf32>, vector<2x128xf32> -> vector<2x128xf32>
    %204 = arith.addf %35, %203 : vector<2x128xf32>
    %205 = math.tanh %204 : vector<2x128xf32>
    %206 = arith.negf %204 : vector<2x128xf32>
    %207 = math.exp %206 : vector<2x128xf32>
    %cst_69 = arith.constant 1.000000e+00 : f32
    %208 = vector.broadcast %cst_69 : f32 to vector<2x128xf32>
    %209 = arith.addf %208, %207 : vector<2x128xf32>
    %210 = arith.divf %208, %209 : vector<2x128xf32>
    %211 = arith.select %41, %205, %210 : vector<2x128xi1>, vector<2x128xf32>
    %212 = vector.extract_strided_slice %211 {offsets = [0, 0], sizes = [2, 32], strides = [1, 1]} : vector<2x128xf32> to vector<2x32xf32>
    %213 = vector.extract_strided_slice %211 {offsets = [0, 32], sizes = [2, 32], strides = [1, 1]} : vector<2x128xf32> to vector<2x32xf32>
    %214 = vector.extract_strided_slice %211 {offsets = [0, 64], sizes = [2, 32], strides = [1, 1]} : vector<2x128xf32> to vector<2x32xf32>
    %215 = vector.extract_strided_slice %211 {offsets = [0, 96], sizes = [2, 32], strides = [1, 1]} : vector<2x128xf32> to vector<2x32xf32>
    %216 = arith.mulf %213, %174 : vector<2x32xf32>
    %217 = arith.mulf %212, %214 : vector<2x32xf32>
    %218 = arith.addf %216, %217 : vector<2x32xf32>
    %219 = math.tanh %218 : vector<2x32xf32>
    %220 = arith.mulf %215, %219 : vector<2x32xf32>
    %221 = tpu.concatenate %202, %220 in 1 : vector<2x32xf32>, vector<2x32xf32> -> vector<2x64xf32>
    %cst_70 = arith.constant dense<0.000000e+00> : vector<2x256xf32>
    %222 = tpu.matmul %221, %47, %cst_70 {dimension_numbers = #tpu.dot_dimension_numbers<[1], [0], [0], [1], [0, 0, 1, 1], [], []>} : vector<2x64xf32>, vector<64x256xf32>, vector<2x256xf32> -> vector<2x256xf32>
    %223 = vector.broadcast %48 : vector<1x256xf32> to vector<2x256xf32>
    %224 = arith.addf %222, %223 : vector<2x256xf32>
    %225 = math.tanh %224 : vector<2x256xf32>
    %226 = arith.select %44, %225, %224 : vector<2x256xi1>, vector<2x256xf32>
    %227 = vector.shape_cast %226 : vector<2x256xf32> to vector<2x1x256xf32>
    %c0_71 = arith.constant 0 : index
    %c3 = arith.constant 3 : index
    %c0_72 = arith.constant 0 : index
    %228 = vector.load %arg17[%c0_71, %c3, %c0_72] : memref<2x8x256xf32, #tpu.memory_space<vmem>>, vector<2x1x256xf32>
    tpu.vector_store %arg17[%c0_71, %c3, %c0_72], %227 {strides = array<i32>} : memref<2x8x256xf32, #tpu.memory_space<vmem>>, vector<2x1x256xf32>,
    %cst_73 = arith.constant dense<0.000000e+00> : vector<2x128xf32>
    %229 = tpu.matmul %202, %45, %cst_73 {dimension_numbers = #tpu.dot_dimension_numbers<[1], [0], [0], [1], [0, 0, 1, 1], [], []>} : vector<2x32xf32>, vector<32x128xf32>, vector<2x128xf32> -> vector<2x128xf32>
    %230 = arith.addf %30, %229 : vector<2x128xf32>
    %231 = math.tanh %230 : vector<2x128xf32>
    %232 = arith.negf %230 : vector<2x128xf32>
    %233 = math.exp %232 : vector<2x128xf32>
    %cst_74 = arith.constant 1.000000e+00 : f32
    %234 = vector.broadcast %cst_74 : f32 to vector<2x128xf32>
    %235 = arith.addf %234, %233 : vector<2x128xf32>
    %236 = arith.divf %234, %235 : vector<2x128xf32>
    %237 = arith.select %41, %231, %236 : vector<2x128xi1>, vector<2x128xf32>
    %238 = vector.extract_strided_slice %237 {offsets = [0, 0], sizes = [2, 32], strides = [1, 1]} : vector<2x128xf32> to vector<2x32xf32>
    %239 = vector.extract_strided_slice %237 {offsets = [0, 32], sizes = [2, 32], strides = [1, 1]} : vector<2x128xf32> to vector<2x32xf32>
    %240 = vector.extract_strided_slice %237 {offsets = [0, 64], sizes = [2, 32], strides = [1, 1]} : vector<2x128xf32> to vector<2x32xf32>
    %241 = vector.extract_strided_slice %237 {offsets = [0, 96], sizes = [2, 32], strides = [1, 1]} : vector<2x128xf32> to vector<2x32xf32>
    %242 = arith.mulf %239, %200 : vector<2x32xf32>
    %243 = arith.mulf %238, %240 : vector<2x32xf32>
    %244 = arith.addf %242, %243 : vector<2x32xf32>
    %245 = math.tanh %244 : vector<2x32xf32>
    %246 = arith.mulf %241, %245 : vector<2x32xf32>
    %cst_75 = arith.constant dense<0.000000e+00> : vector<2x128xf32>
    %247 = tpu.matmul %220, %46, %cst_75 {dimension_numbers = #tpu.dot_dimension_numbers<[1], [0], [0], [1], [0, 0, 1, 1], [], []>} : vector<2x32xf32>, vector<32x128xf32>, vector<2x128xf32> -> vector<2x128xf32>
    %248 = arith.addf %35, %247 : vector<2x128xf32>
    %249 = math.tanh %248 : vector<2x128xf32>
    %250 = arith.negf %248 : vector<2x128xf32>
    %251 = math.exp %250 : vector<2x128xf32>
    %cst_76 = arith.constant 1.000000e+00 : f32
    %252 = vector.broadcast %cst_76 : f32 to vector<2x128xf32>
    %253 = arith.addf %252, %251 : vector<2x128xf32>
    %254 = arith.divf %252, %253 : vector<2x128xf32>
    %255 = arith.select %41, %249, %254 : vector<2x128xi1>, vector<2x128xf32>
    %256 = vector.extract_strided_slice %255 {offsets = [0, 0], sizes = [2, 32], strides = [1, 1]} : vector<2x128xf32> to vector<2x32xf32>
    %257 = vector.extract_strided_slice %255 {offsets = [0, 32], sizes = [2, 32], strides = [1, 1]} : vector<2x128xf32> to vector<2x32xf32>
    %258 = vector.extract_strided_slice %255 {offsets = [0, 64], sizes = [2, 32], strides = [1, 1]} : vector<2x128xf32> to vector<2x32xf32>
    %259 = vector.extract_strided_slice %255 {offsets = [0, 96], sizes = [2, 32], strides = [1, 1]} : vector<2x128xf32> to vector<2x32xf32>
    %260 = arith.mulf %257, %218 : vector<2x32xf32>
    %261 = arith.mulf %256, %258 : vector<2x32xf32>
    %262 = arith.addf %260, %261 : vector<2x32xf32>
    %263 = math.tanh %262 : vector<2x32xf32>
    %264 = arith.mulf %259, %263 : vector<2x32xf32>
    %265 = tpu.concatenate %246, %264 in 1 : vector<2x32xf32>, vector<2x32xf32> -> vector<2x64xf32>
    %cst_77 = arith.constant dense<0.000000e+00> : vector<2x256xf32>
    %266 = tpu.matmul %265, %47, %cst_77 {dimension_numbers = #tpu.dot_dimension_numbers<[1], [0], [0], [1], [0, 0, 1, 1], [], []>} : vector<2x64xf32>, vector<64x256xf32>, vector<2x256xf32> -> vector<2x256xf32>
    %267 = vector.broadcast %48 : vector<1x256xf32> to vector<2x256xf32>
    %268 = arith.addf %266, %267 : vector<2x256xf32>
    %269 = math.tanh %268 : vector<2x256xf32>
    %270 = arith.select %44, %269, %268 : vector<2x256xi1>, vector<2x256xf32>
    %271 = vector.shape_cast %270 : vector<2x256xf32> to vector<2x1x256xf32>
    %c0_78 = arith.constant 0 : index
    %c4 = arith.constant 4 : index
    %c0_79 = arith.constant 0 : index
    %272 = vector.load %arg17[%c0_78, %c4, %c0_79] : memref<2x8x256xf32, #tpu.memory_space<vmem>>, vector<2x1x256xf32>
    tpu.vector_store %arg17[%c0_78, %c4, %c0_79], %271 {strides = array<i32>} : memref<2x8x256xf32, #tpu.memory_space<vmem>>, vector<2x1x256xf32>,
    %cst_80 = arith.constant dense<0.000000e+00> : vector<2x128xf32>
    %273 = tpu.matmul %246, %45, %cst_80 {dimension_numbers = #tpu.dot_dimension_numbers<[1], [0], [0], [1], [0, 0, 1, 1], [], []>} : vector<2x32xf32>, vector<32x128xf32>, vector<2x128xf32> -> vector<2x128xf32>
    %274 = arith.addf %30, %273 : vector<2x128xf32>
    %275 = math.tanh %274 : vector<2x128xf32>
    %276 = arith.negf %274 : vector<2x128xf32>
    %277 = math.exp %276 : vector<2x128xf32>
    %cst_81 = arith.constant 1.000000e+00 : f32
    %278 = vector.broadcast %cst_81 : f32 to vector<2x128xf32>
    %279 = arith.addf %278, %277 : vector<2x128xf32>
    %280 = arith.divf %278, %279 : vector<2x128xf32>
    %281 = arith.select %41, %275, %280 : vector<2x128xi1>, vector<2x128xf32>
    %282 = vector.extract_strided_slice %281 {offsets = [0, 0], sizes = [2, 32], strides = [1, 1]} : vector<2x128xf32> to vector<2x32xf32>
    %283 = vector.extract_strided_slice %281 {offsets = [0, 32], sizes = [2, 32], strides = [1, 1]} : vector<2x128xf32> to vector<2x32xf32>
    %284 = vector.extract_strided_slice %281 {offsets = [0, 64], sizes = [2, 32], strides = [1, 1]} : vector<2x128xf32> to vector<2x32xf32>
    %285 = vector.extract_strided_slice %281 {offsets = [0, 96], sizes = [2, 32], strides = [1, 1]} : vector<2x128xf32> to vector<2x32xf32>
    %286 = arith.mulf %283, %244 : vector<2x32xf32>
    %287 = arith.mulf %282, %284 : vector<2x32xf32>
    %288 = arith.addf %286, %287 : vector<2x32xf32>
    %289 = math.tanh %288 : vector<2x32xf32>
    %290 = arith.mulf %285, %289 : vector<2x32xf32>
    %cst_82 = arith.constant dense<0.000000e+00> : vector<2x128xf32>
    %291 = tpu.matmul %264, %46, %cst_82 {dimension_numbers = #tpu.dot_dimension_numbers<[1], [0], [0], [1], [0, 0, 1, 1], [], []>} : vector<2x32xf32>, vector<32x128xf32>, vector<2x128xf32> -> vector<2x128xf32>
    %292 = arith.addf %35, %291 : vector<2x128xf32>
    %293 = math.tanh %292 : vector<2x128xf32>
    %294 = arith.negf %292 : vector<2x128xf32>
    %295 = math.exp %294 : vector<2x128xf32>
    %cst_83 = arith.constant 1.000000e+00 : f32
    %296 = vector.broadcast %cst_83 : f32 to vector<2x128xf32>
    %297 = arith.addf %296, %295 : vector<2x128xf32>
    %298 = arith.divf %296, %297 : vector<2x128xf32>
    %299 = arith.select %41, %293, %298 : vector<2x128xi1>, vector<2x128xf32>
    %300 = vector.extract_strided_slice %299 {offsets = [0, 0], sizes = [2, 32], strides = [1, 1]} : vector<2x128xf32> to vector<2x32xf32>
    %301 = vector.extract_strided_slice %299 {offsets = [0, 32], sizes = [2, 32], strides = [1, 1]} : vector<2x128xf32> to vector<2x32xf32>
    %302 = vector.extract_strided_slice %299 {offsets = [0, 64], sizes = [2, 32], strides = [1, 1]} : vector<2x128xf32> to vector<2x32xf32>
    %303 = vector.extract_strided_slice %299 {offsets = [0, 96], sizes = [2, 32], strides = [1, 1]} : vector<2x128xf32> to vector<2x32xf32>
    %304 = arith.mulf %301, %262 : vector<2x32xf32>
    %305 = arith.mulf %300, %302 : vector<2x32xf32>
    %306 = arith.addf %304, %305 : vector<2x32xf32>
    %307 = math.tanh %306 : vector<2x32xf32>
    %308 = arith.mulf %303, %307 : vector<2x32xf32>
    %309 = tpu.concatenate %290, %308 in 1 : vector<2x32xf32>, vector<2x32xf32> -> vector<2x64xf32>
    %cst_84 = arith.constant dense<0.000000e+00> : vector<2x256xf32>
    %310 = tpu.matmul %309, %47, %cst_84 {dimension_numbers = #tpu.dot_dimension_numbers<[1], [0], [0], [1], [0, 0, 1, 1], [], []>} : vector<2x64xf32>, vector<64x256xf32>, vector<2x256xf32> -> vector<2x256xf32>
    %311 = vector.broadcast %48 : vector<1x256xf32> to vector<2x256xf32>
    %312 = arith.addf %310, %311 : vector<2x256xf32>
    %313 = math.tanh %312 : vector<2x256xf32>
    %314 = arith.select %44, %313, %312 : vector<2x256xi1>, vector<2x256xf32>
    %315 = vector.shape_cast %314 : vector<2x256xf32> to vector<2x1x256xf32>
    %c0_85 = arith.constant 0 : index
    %c5 = arith.constant 5 : index
    %c0_86 = arith.constant 0 : index
    %316 = vector.load %arg17[%c0_85, %c5, %c0_86] : memref<2x8x256xf32, #tpu.memory_space<vmem>>, vector<2x1x256xf32>
    tpu.vector_store %arg17[%c0_85, %c5, %c0_86], %315 {strides = array<i32>} : memref<2x8x256xf32, #tpu.memory_space<vmem>>, vector<2x1x256xf32>,
    %cst_87 = arith.constant dense<0.000000e+00> : vector<2x128xf32>
    %317 = tpu.matmul %290, %45, %cst_87 {dimension_numbers = #tpu.dot_dimension_numbers<[1], [0], [0], [1], [0, 0, 1, 1], [], []>} : vector<2x32xf32>, vector<32x128xf32>, vector<2x128xf32> -> vector<2x128xf32>
    %318 = arith.addf %30, %317 : vector<2x128xf32>
    %319 = math.tanh %318 : vector<2x128xf32>
    %320 = arith.negf %318 : vector<2x128xf32>
    %321 = math.exp %320 : vector<2x128xf32>
    %cst_88 = arith.constant 1.000000e+00 : f32
    %322 = vector.broadcast %cst_88 : f32 to vector<2x128xf32>
    %323 = arith.addf %322, %321 : vector<2x128xf32>
    %324 = arith.divf %322, %323 : vector<2x128xf32>
    %325 = arith.select %41, %319, %324 : vector<2x128xi1>, vector<2x128xf32>
    %326 = vector.extract_strided_slice %325 {offsets = [0, 0], sizes = [2, 32], strides = [1, 1]} : vector<2x128xf32> to vector<2x32xf32>
    %327 = vector.extract_strided_slice %325 {offsets = [0, 32], sizes = [2, 32], strides = [1, 1]} : vector<2x128xf32> to vector<2x32xf32>
    %328 = vector.extract_strided_slice %325 {offsets = [0, 64], sizes = [2, 32], strides = [1, 1]} : vector<2x128xf32> to vector<2x32xf32>
    %329 = vector.extract_strided_slice %325 {offsets = [0, 96], sizes = [2, 32], strides = [1, 1]} : vector<2x128xf32> to vector<2x32xf32>
    %330 = arith.mulf %327, %288 : vector<2x32xf32>
    %331 = arith.mulf %326, %328 : vector<2x32xf32>
    %332 = arith.addf %330, %331 : vector<2x32xf32>
    %333 = math.tanh %332 : vector<2x32xf32>
    %334 = arith.mulf %329, %333 : vector<2x32xf32>
    %cst_89 = arith.constant dense<0.000000e+00> : vector<2x128xf32>
    %335 = tpu.matmul %308, %46, %cst_89 {dimension_numbers = #tpu.dot_dimension_numbers<[1], [0], [0], [1], [0, 0, 1, 1], [], []>} : vector<2x32xf32>, vector<32x128xf32>, vector<2x128xf32> -> vector<2x128xf32>
    %336 = arith.addf %35, %335 : vector<2x128xf32>
    %337 = math.tanh %336 : vector<2x128xf32>
    %338 = arith.negf %336 : vector<2x128xf32>
    %339 = math.exp %338 : vector<2x128xf32>
    %cst_90 = arith.constant 1.000000e+00 : f32
    %340 = vector.broadcast %cst_90 : f32 to vector<2x128xf32>
    %341 = arith.addf %340, %339 : vector<2x128xf32>
    %342 = arith.divf %340, %341 : vector<2x128xf32>
    %343 = arith.select %41, %337, %342 : vector<2x128xi1>, vector<2x128xf32>
    %344 = vector.extract_strided_slice %343 {offsets = [0, 0], sizes = [2, 32], strides = [1, 1]} : vector<2x128xf32> to vector<2x32xf32>
    %345 = vector.extract_strided_slice %343 {offsets = [0, 32], sizes = [2, 32], strides = [1, 1]} : vector<2x128xf32> to vector<2x32xf32>
    %346 = vector.extract_strided_slice %343 {offsets = [0, 64], sizes = [2, 32], strides = [1, 1]} : vector<2x128xf32> to vector<2x32xf32>
    %347 = vector.extract_strided_slice %343 {offsets = [0, 96], sizes = [2, 32], strides = [1, 1]} : vector<2x128xf32> to vector<2x32xf32>
    %348 = arith.mulf %345, %306 : vector<2x32xf32>
    %349 = arith.mulf %344, %346 : vector<2x32xf32>
    %350 = arith.addf %348, %349 : vector<2x32xf32>
    %351 = math.tanh %350 : vector<2x32xf32>
    %352 = arith.mulf %347, %351 : vector<2x32xf32>
    %353 = tpu.concatenate %334, %352 in 1 : vector<2x32xf32>, vector<2x32xf32> -> vector<2x64xf32>
    %cst_91 = arith.constant dense<0.000000e+00> : vector<2x256xf32>
    %354 = tpu.matmul %353, %47, %cst_91 {dimension_numbers = #tpu.dot_dimension_numbers<[1], [0], [0], [1], [0, 0, 1, 1], [], []>} : vector<2x64xf32>, vector<64x256xf32>, vector<2x256xf32> -> vector<2x256xf32>
    %355 = vector.broadcast %48 : vector<1x256xf32> to vector<2x256xf32>
    %356 = arith.addf %354, %355 : vector<2x256xf32>
    %357 = math.tanh %356 : vector<2x256xf32>
    %358 = arith.select %44, %357, %356 : vector<2x256xi1>, vector<2x256xf32>
    %359 = vector.shape_cast %358 : vector<2x256xf32> to vector<2x1x256xf32>
    %c0_92 = arith.constant 0 : index
    %c6 = arith.constant 6 : index
    %c0_93 = arith.constant 0 : index
    %360 = vector.load %arg17[%c0_92, %c6, %c0_93] : memref<2x8x256xf32, #tpu.memory_space<vmem>>, vector<2x1x256xf32>
    tpu.vector_store %arg17[%c0_92, %c6, %c0_93], %359 {strides = array<i32>} : memref<2x8x256xf32, #tpu.memory_space<vmem>>, vector<2x1x256xf32>,
    %cst_94 = arith.constant dense<0.000000e+00> : vector<2x128xf32>
    %361 = tpu.matmul %334, %45, %cst_94 {dimension_numbers = #tpu.dot_dimension_numbers<[1], [0], [0], [1], [0, 0, 1, 1], [], []>} : vector<2x32xf32>, vector<32x128xf32>, vector<2x128xf32> -> vector<2x128xf32>
    %362 = arith.addf %30, %361 : vector<2x128xf32>
    %363 = math.tanh %362 : vector<2x128xf32>
    %364 = arith.negf %362 : vector<2x128xf32>
    %365 = math.exp %364 : vector<2x128xf32>
    %cst_95 = arith.constant 1.000000e+00 : f32
    %366 = vector.broadcast %cst_95 : f32 to vector<2x128xf32>
    %367 = arith.addf %366, %365 : vector<2x128xf32>
    %368 = arith.divf %366, %367 : vector<2x128xf32>
    %369 = arith.select %41, %363, %368 : vector<2x128xi1>, vector<2x128xf32>
    %370 = vector.extract_strided_slice %369 {offsets = [0, 0], sizes = [2, 32], strides = [1, 1]} : vector<2x128xf32> to vector<2x32xf32>
    %371 = vector.extract_strided_slice %369 {offsets = [0, 32], sizes = [2, 32], strides = [1, 1]} : vector<2x128xf32> to vector<2x32xf32>
    %372 = vector.extract_strided_slice %369 {offsets = [0, 64], sizes = [2, 32], strides = [1, 1]} : vector<2x128xf32> to vector<2x32xf32>
    %373 = vector.extract_strided_slice %369 {offsets = [0, 96], sizes = [2, 32], strides = [1, 1]} : vector<2x128xf32> to vector<2x32xf32>
    %374 = arith.mulf %371, %332 : vector<2x32xf32>
    %375 = arith.mulf %370, %372 : vector<2x32xf32>
    %376 = arith.addf %374, %375 : vector<2x32xf32>
    %377 = math.tanh %376 : vector<2x32xf32>
    %378 = arith.mulf %373, %377 : vector<2x32xf32>
    %cst_96 = arith.constant dense<0.000000e+00> : vector<2x128xf32>
    %379 = tpu.matmul %352, %46, %cst_96 {dimension_numbers = #tpu.dot_dimension_numbers<[1], [0], [0], [1], [0, 0, 1, 1], [], []>} : vector<2x32xf32>, vector<32x128xf32>, vector<2x128xf32> -> vector<2x128xf32>
    %380 = arith.addf %35, %379 : vector<2x128xf32>
    %381 = math.tanh %380 : vector<2x128xf32>
    %382 = arith.negf %380 : vector<2x128xf32>
    %383 = math.exp %382 : vector<2x128xf32>
    %cst_97 = arith.constant 1.000000e+00 : f32
    %384 = vector.broadcast %cst_97 : f32 to vector<2x128xf32>
    %385 = arith.addf %384, %383 : vector<2x128xf32>
    %386 = arith.divf %384, %385 : vector<2x128xf32>
    %387 = arith.select %41, %381, %386 : vector<2x128xi1>, vector<2x128xf32>
    %388 = vector.extract_strided_slice %387 {offsets = [0, 0], sizes = [2, 32], strides = [1, 1]} : vector<2x128xf32> to vector<2x32xf32>
    %389 = vector.extract_strided_slice %387 {offsets = [0, 32], sizes = [2, 32], strides = [1, 1]} : vector<2x128xf32> to vector<2x32xf32>
    %390 = vector.extract_strided_slice %387 {offsets = [0, 64], sizes = [2, 32], strides = [1, 1]} : vector<2x128xf32> to vector<2x32xf32>
    %391 = vector.extract_strided_slice %387 {offsets = [0, 96], sizes = [2, 32], strides = [1, 1]} : vector<2x128xf32> to vector<2x32xf32>
    %392 = arith.mulf %389, %350 : vector<2x32xf32>
    %393 = arith.mulf %388, %390 : vector<2x32xf32>
    %394 = arith.addf %392, %393 : vector<2x32xf32>
    %395 = math.tanh %394 : vector<2x32xf32>
    %396 = arith.mulf %391, %395 : vector<2x32xf32>
    %397 = tpu.concatenate %378, %396 in 1 : vector<2x32xf32>, vector<2x32xf32> -> vector<2x64xf32>
    %cst_98 = arith.constant dense<0.000000e+00> : vector<2x256xf32>
    %398 = tpu.matmul %397, %47, %cst_98 {dimension_numbers = #tpu.dot_dimension_numbers<[1], [0], [0], [1], [0, 0, 1, 1], [], []>} : vector<2x64xf32>, vector<64x256xf32>, vector<2x256xf32> -> vector<2x256xf32>
    %399 = vector.broadcast %48 : vector<1x256xf32> to vector<2x256xf32>
    %400 = arith.addf %398, %399 : vector<2x256xf32>
    %401 = math.tanh %400 : vector<2x256xf32>
    %402 = arith.select %44, %401, %400 : vector<2x256xi1>, vector<2x256xf32>
    %403 = vector.shape_cast %402 : vector<2x256xf32> to vector<2x1x256xf32>
    %c0_99 = arith.constant 0 : index
    %c7 = arith.constant 7 : index
    %c0_100 = arith.constant 0 : index
    %404 = vector.load %arg17[%c0_99, %c7, %c0_100] : memref<2x8x256xf32, #tpu.memory_space<vmem>>, vector<2x1x256xf32>
    tpu.vector_store %arg17[%c0_99, %c7, %c0_100], %403 {strides = array<i32>} : memref<2x8x256xf32, #tpu.memory_space<vmem>>, vector<2x1x256xf32>,
    return
  }
}

</mosaic_0001>

<llo_original>
// kernel: tpu_custom_call.1
$region0: #{tpu_custom_call.1}
  #allocation0 [shape = 'u32[]', space=smem, size = 0x4, offset = 0x4, fixed_abs, tag = 'smem constant byte address 0x4 - core index']
  #allocation1 [shape = 'u32[144,128]{1,0:T(1,128)}', space=vmem, size = 0x12000, scoped, tag = 'internal scratch']
  %s0 = inlined_call_operand.hbm [shape: f32[2,64], index: 0, kind: input, shape index: {}]
  %s1 = inlined_call_operand.vmem [shape: f32[64,32], index: 1, kind: input, shape index: {}]
  %s2 = inlined_call_operand.hbm [shape: f32[1,32], index: 2, kind: input, shape index: {}]
  %s3 = inlined_call_operand.vmem [shape: f32[32,192], index: 3, kind: input, shape index: {}]
  %s4 = inlined_call_operand.hbm [shape: f32[1,192], index: 4, kind: input, shape index: {}]
  %s5 = inlined_call_operand.vmem [shape: f32[64,32], index: 5, kind: input, shape index: {}]
  %s6 = inlined_call_operand.hbm [shape: f32[1,32], index: 6, kind: input, shape index: {}]
  %s7 = inlined_call_operand.vmem [shape: f32[32,9], index: 7, kind: input, shape index: {}]
  %s8 = inlined_call_operand.hbm [shape: f32[1,9], index: 8, kind: input, shape index: {}]
  %s9 = inlined_call_operand.vmem [shape: f32[192,128], index: 9, kind: input, shape index: {}]
  %s10 = inlined_call_operand.hbm [shape: f32[32,128], index: 10, kind: input, shape index: {}]
  %s11 = inlined_call_operand.hbm [shape: f32[1,128], index: 11, kind: input, shape index: {}]
  %s12 = inlined_call_operand.hbm [shape: f32[9,128], index: 12, kind: input, shape index: {}]
  %s13 = inlined_call_operand.hbm [shape: f32[32,128], index: 13, kind: input, shape index: {}]
  %s14 = inlined_call_operand.vmem [shape: f32[1,128], index: 14, kind: input, shape index: {}]
  %s15 = inlined_call_operand.hbm [shape: f32[64,256], index: 15, kind: input, shape index: {}]
  %s16 = inlined_call_operand.vmem [shape: f32[1,256], index: 16, kind: input, shape index: {}]
  %s17 = inlined_call_operand.hbm [shape: f32[2,8,256], index: 17, kind: output, shape index: {}]
  %s18 = sld [smem:[#allocation0]]
  $region118: #{tpu_custom_call.1} parent=0
    _
  %s20 = ssub.s32 1, %s18
  %s21 = scalar_select 0, %s20, %s18
  $region1: #{tpu_custom_call.1} parent=0
    #allocation2 [shape = 'u8[1024]{0}', space=vmem, size = 0x400, scoped, tag = 'input window, operand 0, single buffered']
    #allocation3 [shape = 's32[1]{0}', space=sflag, size = 0x4, scoped, tag = 'scoped memory for tpu_custom_call.1']
    #allocation4 [shape = 's32[1]{0}', space=sflag, size = 0x4, scoped, tag = 'scoped memory for tpu_custom_call.1']
    #allocation5 [shape = 'u8[512]{0}', space=vmem, size = 0x400, scoped, tag = 'input window, operand 2, single buffered']
    #allocation6 [shape = 's32[1]{0}', space=sflag, size = 0x4, scoped, tag = 'scoped memory for tpu_custom_call.1']
    #allocation7 [shape = 'u8[1024]{0}', space=vmem, size = 0x400, scoped, tag = 'input window, operand 4, single buffered']
    #allocation8 [shape = 'u8[512]{0}', space=vmem, size = 0x400, scoped, tag = 'input window, operand 6, single buffered']
    #allocation9 [shape = 's32[1]{0}', space=sflag, size = 0x4, scoped, tag = 'scoped memory for tpu_custom_call.1']
    #allocation10 [shape = 'u8[512]{0}', space=vmem, size = 0x400, scoped, tag = 'input window, operand 8, single buffered']
    #allocation11 [shape = 'u8[16384]{0}', space=vmem, size = 0x4000, scoped, tag = 'input window, operand 10, single buffered']
    #allocation12 [shape = 's32[1]{0}', space=sflag, size = 0x4, scoped, tag = 'scoped memory for tpu_custom_call.1']
    #allocation13 [shape = 'u8[512]{0}', space=vmem, size = 0x400, scoped, tag = 'input window, operand 11, single buffered']
    #allocation14 [shape = 'u8[8192]{0}', space=vmem, size = 0x2000, scoped, tag = 'input window, operand 12, single buffered']
    #allocation15 [shape = 's32[1]{0}', space=sflag, size = 0x4, scoped, tag = 'scoped memory for tpu_custom_call.1']
    #allocation16 [shape = 'u8[16384]{0}', space=vmem, size = 0x4000, scoped, tag = 'input window, operand 13, single buffered']
    #allocation17 [shape = 'u8[65536]{0}', space=vmem, size = 0x10000, scoped, tag = 'input window, operand 15, single buffered']
    #allocation18 [shape = 's32[1]{0}', space=sflag, size = 0x4, scoped, tag = 'scoped memory for tpu_custom_call.1']
    #allocation19 [shape = 'u8[16384]{0}', space=vmem, size = 0x4000, scoped, tag = 'output window, operand 0, single buffered']
    %22 = vsyncpa [#allocation3], 0
    %23 = vsyncpa [#allocation6], 0
    %24 = vsyncpa [#allocation9], 0
    %25 = vsyncpa [#allocation12], 0
    %26 = vsyncpa [#allocation15], 0
    %27 = vsyncpa [#allocation18], 0
    %28 = vsyncpa [#allocation4], 0
    // Predicated region
    $region2: #{tpu_custom_call.1} parent=1 // pred_check
      _
    $region3: #{tpu_custom_call.1} parent=1 // pred_check_branch
      %30 = sbr.rel (0) target = $region5
    $region4: #{tpu_custom_call.1} parent=1 // pred_region
      %s32 = ssub.s32 32, 32
      %33 = vsyncadd [#allocation3], %s32
      %s35 = sshll.u32 [#allocation2], 4
      %s36 = int_to_ptr.vmem [resolvable:$true] %s35
      %38 = dma.hbm_to_vmem [thread:$0]  %s0, 32, %s36, [#allocation3]
    $region5: #{tpu_custom_call.1} parent=1 // pred_fallthru
      _
    // Predicated region
    $region6: #{tpu_custom_call.1} parent=1 // pred_check
      _
    $region7: #{tpu_custom_call.1} parent=1 // pred_check_branch
      %40 = sbr.rel (0) target = $region9
    $region8: #{tpu_custom_call.1} parent=1 // pred_region
      _
    $region9: #{tpu_custom_call.1} parent=1 // pred_fallthru
      _
    // Predicated region
    $region10: #{tpu_custom_call.1} parent=1 // pred_check
      _
    $region11: #{tpu_custom_call.1} parent=1 // pred_check_branch
      %42 = sbr.rel (0) target = $region13
    $region12: #{tpu_custom_call.1} parent=1 // pred_region
      %s44 = ssub.s32 16, 16
      %45 = vsyncadd [#allocation6], %s44
      %s47 = sshll.u32 [#allocation5], 4
      %s48 = int_to_ptr.vmem [resolvable:$true] %s47
      %50 = dma.hbm_to_vmem [thread:$0]  %s2, 16, %s48, [#allocation6]
    $region13: #{tpu_custom_call.1} parent=1 // pred_fallthru
      _
    // Predicated region
    $region14: #{tpu_custom_call.1} parent=1 // pred_check
      _
    $region15: #{tpu_custom_call.1} parent=1 // pred_check_branch
      %52 = sbr.rel (0) target = $region17
    $region16: #{tpu_custom_call.1} parent=1 // pred_region
      _
    $region17: #{tpu_custom_call.1} parent=1 // pred_fallthru
      _
    // Predicated region
    $region18: #{tpu_custom_call.1} parent=1 // pred_check
      _
    $region19: #{tpu_custom_call.1} parent=1 // pred_check_branch
      %54 = sbr.rel (0) target = $region21
    $region20: #{tpu_custom_call.1} parent=1 // pred_region
      %s56 = ssub.s32 32, 32
      %57 = vsyncadd [#allocation6], %s56
      %s59 = sshll.u32 [#allocation7], 4
      %s60 = int_to_ptr.vmem [resolvable:$true] %s59
      %62 = dma.hbm_to_vmem [thread:$0]  %s4, 32, %s60, [#allocation6]
    $region21: #{tpu_custom_call.1} parent=1 // pred_fallthru
      _
    // Predicated region
    $region22: #{tpu_custom_call.1} parent=1 // pred_check
      _
    $region23: #{tpu_custom_call.1} parent=1 // pred_check_branch
      %64 = sbr.rel (0) target = $region25
    $region24: #{tpu_custom_call.1} parent=1 // pred_region
      _
    $region25: #{tpu_custom_call.1} parent=1 // pred_fallthru
      _
    // Predicated region
    $region26: #{tpu_custom_call.1} parent=1 // pred_check
      _
    $region27: #{tpu_custom_call.1} parent=1 // pred_check_branch
      %66 = sbr.rel (0) target = $region29
    $region28: #{tpu_custom_call.1} parent=1 // pred_region
      %s68 = ssub.s32 16, 16
      %69 = vsyncadd [#allocation9], %s68
      %s71 = sshll.u32 [#allocation8], 4
      %s72 = int_to_ptr.vmem [resolvable:$true] %s71
      %74 = dma.hbm_to_vmem [thread:$0]  %s6, 16, %s72, [#allocation9]
    $region29: #{tpu_custom_call.1} parent=1 // pred_fallthru
      _
    // Predicated region
    $region30: #{tpu_custom_call.1} parent=1 // pred_check
      _
    $region31: #{tpu_custom_call.1} parent=1 // pred_check_branch
      %76 = sbr.rel (0) target = $region33
    $region32: #{tpu_custom_call.1} parent=1 // pred_region
      _
    $region33: #{tpu_custom_call.1} parent=1 // pred_fallthru
      _
    // Predicated region
    $region34: #{tpu_custom_call.1} parent=1 // pred_check
      _
    $region35: #{tpu_custom_call.1} parent=1 // pred_check_branch
      %78 = sbr.rel (0) target = $region37
    $region36: #{tpu_custom_call.1} parent=1 // pred_region
      %s80 = ssub.s32 16, 16
      %81 = vsyncadd [#allocation9], %s80
      %s83 = sshll.u32 [#allocation10], 4
      %s84 = int_to_ptr.vmem [resolvable:$true] %s83
      %86 = dma.hbm_to_vmem [thread:$0]  %s8, 16, %s84, [#allocation9]
    $region37: #{tpu_custom_call.1} parent=1 // pred_fallthru
      _
    // Predicated region
    $region38: #{tpu_custom_call.1} parent=1 // pred_check
      _
    $region39: #{tpu_custom_call.1} parent=1 // pred_check_branch
      %88 = sbr.rel (0) target = $region41
    $region40: #{tpu_custom_call.1} parent=1 // pred_region
      _
    $region41: #{tpu_custom_call.1} parent=1 // pred_fallthru
      _
    // Predicated region
    $region42: #{tpu_custom_call.1} parent=1 // pred_check
      _
    $region43: #{tpu_custom_call.1} parent=1 // pred_check_branch
      %90 = sbr.rel (0) target = $region45
    $region44: #{tpu_custom_call.1} parent=1 // pred_region
      %s92 = ssub.s32 512, 512
      %93 = vsyncadd [#allocation12], %s92
      %s94 = sshll.u32 [#allocation11], 4
      %s95 = int_to_ptr.vmem [resolvable:$true] %s94
      %100 = dma.hbm_to_vmem [thread:$0]  %s10, 512, %s95, [#allocation12], 128, 128, 8
    $region45: #{tpu_custom_call.1} parent=1 // pred_fallthru
      _
    // Predicated region
    $region46: #{tpu_custom_call.1} parent=1 // pred_check
      _
    $region47: #{tpu_custom_call.1} parent=1 // pred_check_branch
      %102 = sbr.rel (0) target = $region49
    $region48: #{tpu_custom_call.1} parent=1 // pred_region
      %s104 = ssub.s32 16, 16
      %105 = vsyncadd [#allocation12], %s104
      %s107 = sshll.u32 [#allocation13], 4
      %s108 = int_to_ptr.vmem [resolvable:$true] %s107
      %110 = dma.hbm_to_vmem [thread:$0]  %s11, 16, %s108, [#allocation12]
    $region49: #{tpu_custom_call.1} parent=1 // pred_fallthru
      _
    // Predicated region
    $region50: #{tpu_custom_call.1} parent=1 // pred_check
      _
    $region51: #{tpu_custom_call.1} parent=1 // pred_check_branch
      %112 = sbr.rel (0) target = $region53
    $region52: #{tpu_custom_call.1} parent=1 // pred_region
      %s114 = ssub.s32 256, 256
      %115 = vsyncadd [#allocation15], %s114
      %s116 = sshll.u32 [#allocation14], 4
      %s117 = int_to_ptr.vmem [resolvable:$true] %s116
      %122 = dma.hbm_to_vmem [thread:$0]  %s12, 256, %s117, [#allocation15], 128, 128, 8
    $region53: #{tpu_custom_call.1} parent=1 // pred_fallthru
      _
    // Predicated region
    $region54: #{tpu_custom_call.1} parent=1 // pred_check
      _
    $region55: #{tpu_custom_call.1} parent=1 // pred_check_branch
      %124 = sbr.rel (0) target = $region57
    $region56: #{tpu_custom_call.1} parent=1 // pred_region
      %s126 = ssub.s32 512, 512
      %127 = vsyncadd [#allocation15], %s126
      %s128 = sshll.u32 [#allocation16], 4
      %s129 = int_to_ptr.vmem [resolvable:$true] %s128
      %134 = dma.hbm_to_vmem [thread:$0]  %s13, 512, %s129, [#allocation15], 128, 128, 8
    $region57: #{tpu_custom_call.1} parent=1 // pred_fallthru
      _
    // Predicated region
    $region58: #{tpu_custom_call.1} parent=1 // pred_check
      _
    $region59: #{tpu_custom_call.1} parent=1 // pred_check_branch
      %136 = sbr.rel (0) target = $region61
    $region60: #{tpu_custom_call.1} parent=1 // pred_region
      _
    $region61: #{tpu_custom_call.1} parent=1 // pred_fallthru
      _
    // Predicated region
    $region62: #{tpu_custom_call.1} parent=1 // pred_check
      _
    $region63: #{tpu_custom_call.1} parent=1 // pred_check_branch
      %138 = sbr.rel (0) target = $region65
    $region64: #{tpu_custom_call.1} parent=1 // pred_region
      %s140 = ssub.s32 2048, 2048
      %141 = vsyncadd [#allocation18], %s140
      %s142 = sshll.u32 [#allocation17], 4
      %s143 = int_to_ptr.vmem [resolvable:$true] %s142
      %148 = dma.hbm_to_vmem [thread:$0]  %s15, 2048, %s143, [#allocation18], 256, 256, 16
    $region65: #{tpu_custom_call.1} parent=1 // pred_fallthru
      _
    // Predicated region
    $region66: #{tpu_custom_call.1} parent=1 // pred_check
      _
    $region67: #{tpu_custom_call.1} parent=1 // pred_check_branch
      %150 = sbr.rel (0) target = $region69
    $region68: #{tpu_custom_call.1} parent=1 // pred_region
      _
    $region69: #{tpu_custom_call.1} parent=1 // pred_fallthru
      _
    // Predicated region
    $region70: #{tpu_custom_call.1} parent=1 // pred_check
      _
    $region71: #{tpu_custom_call.1} parent=1 // pred_check_branch
      %152 = sbr.rel (0) target = $region73
    $region72: #{tpu_custom_call.1} parent=1 // pred_region
      %153 = dma.done [#allocation3], 32
    $region73: #{tpu_custom_call.1} parent=1 // pred_fallthru
      _
    // Predicated region
    $region74: #{tpu_custom_call.1} parent=1 // pred_check
      _
    $region75: #{tpu_custom_call.1} parent=1 // pred_check_branch
      %155 = sbr.rel (0) target = $region77
    $region76: #{tpu_custom_call.1} parent=1 // pred_region
      %156 = dma.done [#allocation6], 16
    $region77: #{tpu_custom_call.1} parent=1 // pred_fallthru
      _
    // Predicated region
    $region78: #{tpu_custom_call.1} parent=1 // pred_check
      _
    $region79: #{tpu_custom_call.1} parent=1 // pred_check_branch
      %158 = sbr.rel (0) target = $region81
    $region80: #{tpu_custom_call.1} parent=1 // pred_region
      %159 = dma.done [#allocation6], 32
    $region81: #{tpu_custom_call.1} parent=1 // pred_fallthru
      _
    // Predicated region
    $region82: #{tpu_custom_call.1} parent=1 // pred_check
      _
    $region83: #{tpu_custom_call.1} parent=1 // pred_check_branch
      %161 = sbr.rel (0) target = $region85
    $region84: #{tpu_custom_call.1} parent=1 // pred_region
      %162 = dma.done [#allocation9], 16
    $region85: #{tpu_custom_call.1} parent=1 // pred_fallthru
      _
    // Predicated region
    $region86: #{tpu_custom_call.1} parent=1 // pred_check
      _
    $region87: #{tpu_custom_call.1} parent=1 // pred_check_branch
      %164 = sbr.rel (0) target = $region89
    $region88: #{tpu_custom_call.1} parent=1 // pred_region
      %165 = dma.done [#allocation9], 16
    $region89: #{tpu_custom_call.1} parent=1 // pred_fallthru
      _
    // Predicated region
    $region90: #{tpu_custom_call.1} parent=1 // pred_check
      _
    $region91: #{tpu_custom_call.1} parent=1 // pred_check_branch
      %167 = sbr.rel (0) target = $region93
    $region92: #{tpu_custom_call.1} parent=1 // pred_region
      %168 = dma.done [#allocation12], 512
    $region93: #{tpu_custom_call.1} parent=1 // pred_fallthru
      _
    // Predicated region
    $region94: #{tpu_custom_call.1} parent=1 // pred_check
      _
    $region95: #{tpu_custom_call.1} parent=1 // pred_check_branch
      %170 = sbr.rel (0) target = $region97
    $region96: #{tpu_custom_call.1} parent=1 // pred_region
      %171 = dma.done [#allocation12], 16
    $region97: #{tpu_custom_call.1} parent=1 // pred_fallthru
      _
    // Predicated region
    $region98: #{tpu_custom_call.1} parent=1 // pred_check
      _
    $region99: #{tpu_custom_call.1} parent=1 // pred_check_branch
      %173 = sbr.rel (0) target = $region101
    $region100: #{tpu_custom_call.1} parent=1 // pred_region
      %174 = dma.done [#allocation15], 256
    $region101: #{tpu_custom_call.1} parent=1 // pred_fallthru
      _
    // Predicated region
    $region102: #{tpu_custom_call.1} parent=1 // pred_check
      _
    $region103: #{tpu_custom_call.1} parent=1 // pred_check_branch
      %176 = sbr.rel (0) target = $region105
    $region104: #{tpu_custom_call.1} parent=1 // pred_region
      %177 = dma.done [#allocation15], 512
    $region105: #{tpu_custom_call.1} parent=1 // pred_fallthru
      _
    // Predicated region
    $region106: #{tpu_custom_call.1} parent=1 // pred_check
      _
    $region107: #{tpu_custom_call.1} parent=1 // pred_check_branch
      %179 = sbr.rel (0) target = $region109
    $region108: #{tpu_custom_call.1} parent=1 // pred_region
      %180 = dma.done [#allocation18], 2048
    $region109: #{tpu_custom_call.1} parent=1 // pred_fallthru
      _
    %v181 = vld [vmem:[#allocation2] sm:$0x3]
    %v182 = vld [vmem:[%s1] sm:$0xff]
    %v183 = vld [vmem:[%s1 + $0x8] sm:$0xff]
    %v184 = vld [vmem:[%s1 + $0x10] sm:$0xff]
    %v185 = vld [vmem:[%s1 + $0x18] sm:$0xff]
    %v186 = vld [vmem:[%s1 + $0x20] sm:$0xff]
    %v187 = vld [vmem:[%s1 + $0x28] sm:$0xff]
    %v188 = vld [vmem:[%s1 + $0x30] sm:$0xff]
    %v189 = vld [vmem:[%s1 + $0x38] sm:$0xff]
    %v190 = vld [vmem:[#allocation5] sm:$0x1]
    %v192 = vlaneseq
    %v193 = vshrl.u32 %v192, 7
    %v194 = vsub.s32 0, %v193
    %v195 = vrot.slane %v190, %v194
    %vm197 = vcmask 523264
    %v199 = vsel %vm197, %v181, 0
    %201 = vmatprep.subr.mxu0 0.0
    %202 = vmatpush1.msra.mxu0 0.0
    %203 = vmatprep.subr.mxu0 0.0
    %204 = vmatpush1.msra.mxu0 0.0
    %205 = vmatprep.subr.mxu0 0.0
    %206 = vmatpush1.msra.mxu0 0.0
    %207 = vmatprep.subr.mxu0 0.0
    %208 = vmatpush1.msra.mxu0 0.0
    %209 = vmatprep.subr.mxu0 0.0
    %210 = vmatpush1.msra.mxu0 0.0
    %211 = vmatprep.subr.mxu0 0.0
    %212 = vmatpush1.msra.mxu0 0.0
    %213 = vmatprep.subr.mxu0 0.0
    %214 = vmatpush1.msra.mxu0 0.0
    %215 = vmatprep.subr.mxu0 0.0
    %216 = vmatpush1.msra.mxu0 0.0
    %217 = vmatprep.subr.mxu0 0.0
    %218 = vmatpush1.msra.mxu0 %v189
    %219 = vmatprep.subr.mxu0 0.0
    %220 = vmatpush1.msra.mxu0 %v188
    %221 = vmatprep.subr.mxu0 0.0
    %222 = vmatpush1.msra.mxu0 %v187
    %223 = vmatprep.subr.mxu0 0.0
    %224 = vmatpush1.msra.mxu0 %v186
    %225 = vmatprep.subr.mxu0 0.0
    %226 = vmatpush1.msra.mxu0 %v185
    %227 = vmatprep.subr.mxu0 0.0
    %228 = vmatpush1.msra.mxu0 %v184
    %229 = vmatprep.subr.mxu0 0.0
    %230 = vmatpush1.msra.mxu0 %v183
    %231 = vmatprep.subr.mxu0 0.0
    %232 = vmatpush1.msra.mxu0 %v182
    %233 = vmatprep.subr.mxu0 0.0
    %234 = vmatpush2.msra.mxu0 0.0
    %235 = vmatprep.subr.mxu0 0.0
    %236 = vmatpush2.msra.mxu0 0.0
    %237 = vmatprep.subr.mxu0 0.0
    %238 = vmatpush2.msra.mxu0 0.0
    %239 = vmatprep.subr.mxu0 0.0
    %240 = vmatpush2.msra.mxu0 0.0
    %241 = vmatprep.subr.mxu0 0.0
    %242 = vmatpush2.msra.mxu0 0.0
    %243 = vmatprep.subr.mxu0 0.0
    %244 = vmatpush2.msra.mxu0 0.0
    %245 = vmatprep.subr.mxu0 0.0
    %246 = vmatpush2.msra.mxu0 0.0
    %247 = vmatprep.subr.mxu0 0.0
    %248 = vmatpush2.msra.mxu0 0.0
    %249 = vmatprep.subr.mxu0 0.0
    %250 = vmatpush2.msra.mxu0 0.0
    %251 = vmatprep.subr.mxu0 0.0
    %252 = vmatpush2.msra.mxu0 0.0
    %253 = vmatprep.subr.mxu0 0.0
    %254 = vmatpush2.msra.mxu0 0.0
    %255 = vmatprep.subr.mxu0 0.0
    %256 = vmatpush2.msra.mxu0 0.0
    %257 = vmatprep.subr.mxu0 0.0
    %258 = vmatpush2.msra.mxu0 0.0
    %259 = vmatprep.subr.mxu0 0.0
    %260 = vmatpush2.msra.mxu0 0.0
    %261 = vmatprep.subr.mxu0 0.0
    %262 = vmatpush2.msra.mxu0 0.0
    %263 = vmatprep.subr.mxu0 0.0
    %264 = vmatpush2.msra.mxu0 0.0
    %265 = vmatprep.mubr.f32.mxu0 0.0
    %266 = vmatmul.mubr.f32.gmra.mxu0 %v199
    %v267 = vpop.f32.mrf.mxu0
    %v268 = vadd.f32 %v195, %v267
    %v269 = vpop.f32.mrf.mxu0
    %270 = vdwg.mxu0
    %v271 = vmax.f32 %v268, 0.0
    %v272 = vld [vmem:[%s3] sm:$0xff]
    %v273 = vld [vmem:[%s3 + $0x8] sm:$0xff]
    %v274 = vld [vmem:[%s3 + $0x10] sm:$0xff]
    %v275 = vld [vmem:[%s3 + $0x18] sm:$0xff]
    %v276 = vld [vmem:[%s3 + $0x20] sm:$0xff]
    %v277 = vld [vmem:[%s3 + $0x28] sm:$0xff]
    %v278 = vld [vmem:[%s3 + $0x30] sm:$0xff]
    %v279 = vld [vmem:[%s3 + $0x38] sm:$0xff]
    %v280 = vld [vmem:[#allocation7] sm:$0x3]
    %v282 = vlaneseq
    %v283 = vshrl.u32 %v282, 7
    %v284 = vsub.s32 0, %v283
    %v285 = vrot.slane %v280, %v284
    %v286 = vlaneseq
    %v287 = vshrl.u32 %v286, 7
    %v288 = vsub.s32 1, %v287
    %v289 = vrot.slane %v280, %v288
    %vm292 = vcmask 261120
    %v294 = vsel %vm292, %v271, 0
    %296 = vmatprep.subr.mxu0 0.0
    %297 = vmatpush1.msra.mxu0 0.0
    %298 = vmatprep.subr.mxu0 0.0
    %299 = vmatpush1.msra.mxu0 0.0
    %300 = vmatprep.subr.mxu0 0.0
    %301 = vmatpush1.msra.mxu0 0.0
    %302 = vmatprep.subr.mxu0 0.0
    %303 = vmatpush1.msra.mxu0 0.0
    %304 = vmatprep.subr.mxu0 0.0
    %305 = vmatpush1.msra.mxu0 0.0
    %306 = vmatprep.subr.mxu0 0.0
    %307 = vmatpush1.msra.mxu0 0.0
    %308 = vmatprep.subr.mxu0 0.0
    %309 = vmatpush1.msra.mxu0 0.0
    %310 = vmatprep.subr.mxu0 0.0
    %311 = vmatpush1.msra.mxu0 0.0
    %312 = vmatprep.subr.mxu0 0.0
    %313 = vmatpush1.msra.mxu0 0.0
    %314 = vmatprep.subr.mxu0 0.0
    %315 = vmatpush1.msra.mxu0 0.0
    %316 = vmatprep.subr.mxu0 0.0
    %317 = vmatpush1.msra.mxu0 0.0
    %318 = vmatprep.subr.mxu0 0.0
    %319 = vmatpush1.msra.mxu0 0.0
    %320 = vmatprep.subr.mxu0 %v279
    %321 = vmatpush1.msra.mxu0 %v278
    %322 = vmatprep.subr.mxu0 %v277
    %323 = vmatpush1.msra.mxu0 %v276
    %324 = vmatprep.subr.mxu0 %v275
    %325 = vmatpush1.msra.mxu0 %v274
    %326 = vmatprep.subr.mxu0 %v273
    %327 = vmatpush1.msra.mxu0 %v272
    %328 = vmatprep.subr.mxu0 0.0
    %329 = vmatpush2.msra.mxu0 0.0
    %330 = vmatprep.subr.mxu0 0.0
    %331 = vmatpush2.msra.mxu0 0.0
    %332 = vmatprep.subr.mxu0 0.0
    %333 = vmatpush2.msra.mxu0 0.0
    %334 = vmatprep.subr.mxu0 0.0
    %335 = vmatpush2.msra.mxu0 0.0
    %336 = vmatprep.subr.mxu0 0.0
    %337 = vmatpush2.msra.mxu0 0.0
    %338 = vmatprep.subr.mxu0 0.0
    %339 = vmatpush2.msra.mxu0 0.0
    %340 = vmatprep.subr.mxu0 0.0
    %341 = vmatpush2.msra.mxu0 0.0
    %342 = vmatprep.subr.mxu0 0.0
    %343 = vmatpush2.msra.mxu0 0.0
    %344 = vmatprep.subr.mxu0 0.0
    %345 = vmatpush2.msra.mxu0 0.0
    %346 = vmatprep.subr.mxu0 0.0
    %347 = vmatpush2.msra.mxu0 0.0
    %348 = vmatprep.subr.mxu0 0.0
    %349 = vmatpush2.msra.mxu0 0.0
    %350 = vmatprep.subr.mxu0 0.0
    %351 = vmatpush2.msra.mxu0 0.0
    %352 = vmatprep.subr.mxu0 0.0
    %353 = vmatpush2.msra.mxu0 0.0
    %354 = vmatprep.subr.mxu0 0.0
    %355 = vmatpush2.msra.mxu0 0.0
    %356 = vmatprep.subr.mxu0 0.0
    %357 = vmatpush2.msra.mxu0 0.0
    %358 = vmatprep.subr.mxu0 0.0
    %359 = vmatpush2.msra.mxu0 0.0
    %360 = vmatprep.mubr.f32.mxu0 0.0
    %361 = vmatmul.mubr.f32.gmra.mxu0 %v294
    %v362 = vpop.f32.mrf.mxu0
    %v363 = vadd.f32 %v285, %v362
    %v364 = vpop.f32.mrf.mxu0
    %v365 = vadd.f32 %v289, %v364
    %366 = vdwg.mxu0
    %v367 = vtanh.pop %v363
    %v368 = vtanh.pop %v365
    %v369 = vld [vmem:[%s5] sm:$0xff]
    %v370 = vld [vmem:[%s5 + $0x8] sm:$0xff]
    %v371 = vld [vmem:[%s5 + $0x10] sm:$0xff]
    %v372 = vld [vmem:[%s5 + $0x18] sm:$0xff]
    %v373 = vld [vmem:[%s5 + $0x20] sm:$0xff]
    %v374 = vld [vmem:[%s5 + $0x28] sm:$0xff]
    %v375 = vld [vmem:[%s5 + $0x30] sm:$0xff]
    %v376 = vld [vmem:[%s5 + $0x38] sm:$0xff]
    %v377 = vld [vmem:[#allocation8] sm:$0x1]
    %v379 = vlaneseq
    %v380 = vshrl.u32 %v379, 7
    %v381 = vsub.s32 0, %v380
    %v382 = vrot.slane %v377, %v381
    %384 = vmatprep.subr.mxu0 0.0
    %385 = vmatpush1.msra.mxu0 0.0
    %386 = vmatprep.subr.mxu0 0.0
    %387 = vmatpush1.msra.mxu0 0.0
    %388 = vmatprep.subr.mxu0 0.0
    %389 = vmatpush1.msra.mxu0 0.0
    %390 = vmatprep.subr.mxu0 0.0
    %391 = vmatpush1.msra.mxu0 0.0
    %392 = vmatprep.subr.mxu0 0.0
    %393 = vmatpush1.msra.mxu0 0.0
    %394 = vmatprep.subr.mxu0 0.0
    %395 = vmatpush1.msra.mxu0 0.0
    %396 = vmatprep.subr.mxu0 0.0
    %397 = vmatpush1.msra.mxu0 0.0
    %398 = vmatprep.subr.mxu0 0.0
    %399 = vmatpush1.msra.mxu0 0.0
    %400 = vmatprep.subr.mxu0 0.0
    %401 = vmatpush1.msra.mxu0 %v376
    %402 = vmatprep.subr.mxu0 0.0
    %403 = vmatpush1.msra.mxu0 %v375
    %404 = vmatprep.subr.mxu0 0.0
    %405 = vmatpush1.msra.mxu0 %v374
    %406 = vmatprep.subr.mxu0 0.0
    %407 = vmatpush1.msra.mxu0 %v373
    %408 = vmatprep.subr.mxu0 0.0
    %409 = vmatpush1.msra.mxu0 %v372
    %410 = vmatprep.subr.mxu0 0.0
    %411 = vmatpush1.msra.mxu0 %v371
    %412 = vmatprep.subr.mxu0 0.0
    %413 = vmatpush1.msra.mxu0 %v370
    %414 = vmatprep.subr.mxu0 0.0
    %415 = vmatpush1.msra.mxu0 %v369
    %416 = vmatprep.subr.mxu0 0.0
    %417 = vmatpush2.msra.mxu0 0.0
    %418 = vmatprep.subr.mxu0 0.0
    %419 = vmatpush2.msra.mxu0 0.0
    %420 = vmatprep.subr.mxu0 0.0
    %421 = vmatpush2.msra.mxu0 0.0
    %422 = vmatprep.subr.mxu0 0.0
    %423 = vmatpush2.msra.mxu0 0.0
    %424 = vmatprep.subr.mxu0 0.0
    %425 = vmatpush2.msra.mxu0 0.0
    %426 = vmatprep.subr.mxu0 0.0
    %427 = vmatpush2.msra.mxu0 0.0
    %428 = vmatprep.subr.mxu0 0.0
    %429 = vmatpush2.msra.mxu0 0.0
    %430 = vmatprep.subr.mxu0 0.0
    %431 = vmatpush2.msra.mxu0 0.0
    %432 = vmatprep.subr.mxu0 0.0
    %433 = vmatpush2.msra.mxu0 0.0
    %434 = vmatprep.subr.mxu0 0.0
    %435 = vmatpush2.msra.mxu0 0.0
    %436 = vmatprep.subr.mxu0 0.0
    %437 = vmatpush2.msra.mxu0 0.0
    %438 = vmatprep.subr.mxu0 0.0
    %439 = vmatpush2.msra.mxu0 0.0
    %440 = vmatprep.subr.mxu0 0.0
    %441 = vmatpush2.msra.mxu0 0.0
    %442 = vmatprep.subr.mxu0 0.0
    %443 = vmatpush2.msra.mxu0 0.0
    %444 = vmatprep.subr.mxu0 0.0
    %445 = vmatpush2.msra.mxu0 0.0
    %446 = vmatprep.subr.mxu0 0.0
    %447 = vmatpush2.msra.mxu0 0.0
    %448 = vmatprep.mubr.f32.mxu0 0.0
    %449 = vmatmul.mubr.f32.gmra.mxu0 %v199
    %v450 = vpop.f32.mrf.mxu0
    %v451 = vadd.f32 %v382, %v450
    %v452 = vpop.f32.mrf.mxu0
    %453 = vdwg.mxu0
    %v454 = vmax.f32 %v451, 0.0
    %v455 = vld [vmem:[%s7] sm:$0xff]
    %v456 = vld [vmem:[%s7 + $0x8] sm:$0xff]
    %v457 = vld [vmem:[%s7 + $0x10] sm:$0xff]
    %v458 = vld [vmem:[%s7 + $0x18] sm:$0xff]
    %v459 = vld [vmem:[#allocation10] sm:$0x1]
    %v461 = vlaneseq
    %v462 = vshrl.u32 %v461, 7
    %v463 = vsub.s32 0, %v462
    %v464 = vrot.slane %v459, %v463
    %v467 = vsel %vm292, %v454, 0
    %469 = vmatprep.subr.mxu0 0.0
    %470 = vmatpush1.msra.mxu0 0.0
    %471 = vmatprep.subr.mxu0 0.0
    %472 = vmatpush1.msra.mxu0 0.0
    %473 = vmatprep.subr.mxu0 0.0
    %474 = vmatpush1.msra.mxu0 0.0
    %475 = vmatprep.subr.mxu0 0.0
    %476 = vmatpush1.msra.mxu0 0.0
    %477 = vmatprep.subr.mxu0 0.0
    %478 = vmatpush1.msra.mxu0 0.0
    %479 = vmatprep.subr.mxu0 0.0
    %480 = vmatpush1.msra.mxu0 0.0
    %481 = vmatprep.subr.mxu0 0.0
    %482 = vmatpush1.msra.mxu0 0.0
    %483 = vmatprep.subr.mxu0 0.0
    %484 = vmatpush1.msra.mxu0 0.0
    %485 = vmatprep.subr.mxu0 0.0
    %486 = vmatpush1.msra.mxu0 0.0
    %487 = vmatprep.subr.mxu0 0.0
    %488 = vmatpush1.msra.mxu0 0.0
    %489 = vmatprep.subr.mxu0 0.0
    %490 = vmatpush1.msra.mxu0 0.0
    %491 = vmatprep.subr.mxu0 0.0
    %492 = vmatpush1.msra.mxu0 0.0
    %493 = vmatprep.subr.mxu0 0.0
    %494 = vmatpush1.msra.mxu0 %v458
    %495 = vmatprep.subr.mxu0 0.0
    %496 = vmatpush1.msra.mxu0 %v457
    %497 = vmatprep.subr.mxu0 0.0
    %498 = vmatpush1.msra.mxu0 %v456
    %499 = vmatprep.subr.mxu0 0.0
    %500 = vmatpush1.msra.mxu0 %v455
    %501 = vmatprep.subr.mxu0 0.0
    %502 = vmatpush2.msra.mxu0 0.0
    %503 = vmatprep.subr.mxu0 0.0
    %504 = vmatpush2.msra.mxu0 0.0
    %505 = vmatprep.subr.mxu0 0.0
    %506 = vmatpush2.msra.mxu0 0.0
    %507 = vmatprep.subr.mxu0 0.0
    %508 = vmatpush2.msra.mxu0 0.0
    %509 = vmatprep.subr.mxu0 0.0
    %510 = vmatpush2.msra.mxu0 0.0
    %511 = vmatprep.subr.mxu0 0.0
    %512 = vmatpush2.msra.mxu0 0.0
    %513 = vmatprep.subr.mxu0 0.0
    %514 = vmatpush2.msra.mxu0 0.0
    %515 = vmatprep.subr.mxu0 0.0
    %516 = vmatpush2.msra.mxu0 0.0
    %517 = vmatprep.subr.mxu0 0.0
    %518 = vmatpush2.msra.mxu0 0.0
    %519 = vmatprep.subr.mxu0 0.0
    %520 = vmatpush2.msra.mxu0 0.0
    %521 = vmatprep.subr.mxu0 0.0
    %522 = vmatpush2.msra.mxu0 0.0
    %523 = vmatprep.subr.mxu0 0.0
    %524 = vmatpush2.msra.mxu0 0.0
    %525 = vmatprep.subr.mxu0 0.0
    %526 = vmatpush2.msra.mxu0 0.0
    %527 = vmatprep.subr.mxu0 0.0
    %528 = vmatpush2.msra.mxu0 0.0
    %529 = vmatprep.subr.mxu0 0.0
    %530 = vmatpush2.msra.mxu0 0.0
    %531 = vmatprep.subr.mxu0 0.0
    %532 = vmatpush2.msra.mxu0 0.0
    %533 = vmatprep.mubr.f32.mxu0 0.0
    %534 = vmatmul.mubr.f32.gmra.mxu0 %v467
    %v535 = vpop.f32.mrf.mxu0
    %v536 = vadd.f32 %v464, %v535
    %v537 = vpop.f32.mrf.mxu0
    %538 = vdwg.mxu0
    %v539 = vld [vmem:[%s9] sm:$0xff]
    %v540 = vld [vmem:[%s9 + $0x8] sm:$0xff]
    %v541 = vld [vmem:[%s9 + $0x10] sm:$0xff]
    %v542 = vld [vmem:[%s9 + $0x18] sm:$0xff]
    %v543 = vld [vmem:[%s9 + $0x20] sm:$0xff]
    %v544 = vld [vmem:[%s9 + $0x28] sm:$0xff]
    %v545 = vld [vmem:[%s9 + $0x30] sm:$0xff]
    %v546 = vld [vmem:[%s9 + $0x38] sm:$0xff]
    %v547 = vld [vmem:[%s9 + $0x40] sm:$0xff]
    %v548 = vld [vmem:[%s9 + $0x48] sm:$0xff]
    %v549 = vld [vmem:[%s9 + $0x50] sm:$0xff]
    %v550 = vld [vmem:[%s9 + $0x58] sm:$0xff]
    %v551 = vld [vmem:[%s9 + $0x60] sm:$0xff]
    %v552 = vld [vmem:[%s9 + $0x68] sm:$0xff]
    %v553 = vld [vmem:[%s9 + $0x70] sm:$0xff]
    %v554 = vld [vmem:[%s9 + $0x78] sm:$0xff]
    %v555 = vld [vmem:[%s9 + $0x80] sm:$0xff]
    %v556 = vld [vmem:[%s9 + $0x88] sm:$0xff]
    %v557 = vld [vmem:[%s9 + $0x90] sm:$0xff]
    %v558 = vld [vmem:[%s9 + $0x98] sm:$0xff]
    %v559 = vld [vmem:[%s9 + $0xa0] sm:$0xff]
    %v560 = vld [vmem:[%s9 + $0xa8] sm:$0xff]
    %v561 = vld [vmem:[%s9 + $0xb0] sm:$0xff]
    %v562 = vld [vmem:[%s9 + $0xb8] sm:$0xff]
    %v563 = vld [vmem:[#allocation13] sm:$0x1]
    %v565 = vlaneseq
    %v566 = vshrl.u32 %v565, 7
    %v567 = vsub.s32 0, %v566
    %v568 = vrot.slane %v563, %v567
    %v571 = vsel %vm197, %v368, 0
    %573 = vmatprep.subr.mxu0 0.0
    %574 = vmatpush1.msra.mxu0 %v554
    %575 = vmatprep.subr.mxu0 0.0
    %576 = vmatpush1.msra.mxu0 %v553
    %577 = vmatprep.subr.mxu0 0.0
    %578 = vmatpush1.msra.mxu0 %v552
    %579 = vmatprep.subr.mxu0 0.0
    %580 = vmatpush1.msra.mxu0 %v551
    %581 = vmatprep.subr.mxu0 0.0
    %582 = vmatpush1.msra.mxu0 %v550
    %583 = vmatprep.subr.mxu0 0.0
    %584 = vmatpush1.msra.mxu0 %v549
    %585 = vmatprep.subr.mxu0 0.0
    %586 = vmatpush1.msra.mxu0 %v548
    %587 = vmatprep.subr.mxu0 0.0
    %588 = vmatpush1.msra.mxu0 %v547
    %589 = vmatprep.subr.mxu0 0.0
    %590 = vmatpush1.msra.mxu0 %v546
    %591 = vmatprep.subr.mxu0 0.0
    %592 = vmatpush1.msra.mxu0 %v545
    %593 = vmatprep.subr.mxu0 0.0
    %594 = vmatpush1.msra.mxu0 %v544
    %595 = vmatprep.subr.mxu0 0.0
    %596 = vmatpush1.msra.mxu0 %v543
    %597 = vmatprep.subr.mxu0 0.0
    %598 = vmatpush1.msra.mxu0 %v542
    %599 = vmatprep.subr.mxu0 0.0
    %600 = vmatpush1.msra.mxu0 %v541
    %601 = vmatprep.subr.mxu0 0.0
    %602 = vmatpush1.msra.mxu0 %v540
    %603 = vmatprep.subr.mxu0 0.0
    %604 = vmatpush1.msra.mxu0 %v539
    %605 = vmatprep.subr.mxu0 0.0
    %606 = vmatpush2.msra.mxu0 0.0
    %607 = vmatprep.subr.mxu0 0.0
    %608 = vmatpush2.msra.mxu0 0.0
    %609 = vmatprep.subr.mxu0 0.0
    %610 = vmatpush2.msra.mxu0 0.0
    %611 = vmatprep.subr.mxu0 0.0
    %612 = vmatpush2.msra.mxu0 0.0
    %613 = vmatprep.subr.mxu0 0.0
    %614 = vmatpush2.msra.mxu0 0.0
    %615 = vmatprep.subr.mxu0 0.0
    %616 = vmatpush2.msra.mxu0 0.0
    %617 = vmatprep.subr.mxu0 0.0
    %618 = vmatpush2.msra.mxu0 0.0
    %619 = vmatprep.subr.mxu0 0.0
    %620 = vmatpush2.msra.mxu0 0.0
    %621 = vmatprep.subr.mxu0 0.0
    %622 = vmatpush2.msra.mxu0 %v562
    %623 = vmatprep.subr.mxu0 0.0
    %624 = vmatpush2.msra.mxu0 %v561
    %625 = vmatprep.subr.mxu0 0.0
    %626 = vmatpush2.msra.mxu0 %v560
    %627 = vmatprep.subr.mxu0 0.0
    %628 = vmatpush2.msra.mxu0 %v559
    %629 = vmatprep.subr.mxu0 0.0
    %630 = vmatpush2.msra.mxu0 %v558
    %631 = vmatprep.subr.mxu0 0.0
    %632 = vmatpush2.msra.mxu0 %v557
    %633 = vmatprep.subr.mxu0 0.0
    %634 = vmatpush2.msra.mxu0 %v556
    %635 = vmatprep.subr.mxu0 0.0
    %636 = vmatpush2.msra.mxu0 %v555
    %637 = vmatprep.mubr.f32.mxu0 %v571
    %638 = vmatmul.mubr.f32.gmra.mxu0 %v367
    %v639 = vpop.f32.mrf.mxu0
    %v640 = vadd.f32 %v568, %v639
    %v641 = vpop.f32.mrf.mxu0
    %642 = vdwg.mxu0
    %v643 = vld [vmem:[#allocation14] sm:$0xff]
    %v644 = vld [vmem:[#allocation14 + $0x8] sm:$0x1]
    %v645 = vld [vmem:[%s14] sm:$0x1]
    %v647 = vlaneseq
    %v648 = vshrl.u32 %v647, 7
    %v649 = vsub.s32 0, %v648
    %v650 = vrot.slane %v645, %v649
    %vm652 = vcmask 72704
    %v654 = vsel %vm652, %v536, 0
    %vm656 = vcmask 1040384
    %v658 = vsel %vm656, %v644, 0
    %660 = vmatprep.subr.mxu0 0.0
    %661 = vmatpush1.msra.mxu0 0.0
    %662 = vmatprep.subr.mxu0 0.0
    %663 = vmatpush1.msra.mxu0 0.0
    %664 = vmatprep.subr.mxu0 0.0
    %665 = vmatpush1.msra.mxu0 0.0
    %666 = vmatprep.subr.mxu0 0.0
    %667 = vmatpush1.msra.mxu0 0.0
    %668 = vmatprep.subr.mxu0 0.0
    %669 = vmatpush1.msra.mxu0 0.0
    %670 = vmatprep.subr.mxu0 0.0
    %671 = vmatpush1.msra.mxu0 0.0
    %672 = vmatprep.subr.mxu0 0.0
    %673 = vmatpush1.msra.mxu0 0.0
    %674 = vmatprep.subr.mxu0 0.0
    %675 = vmatpush1.msra.mxu0 0.0
    %676 = vmatprep.subr.mxu0 0.0
    %677 = vmatpush1.msra.mxu0 0.0
    %678 = vmatprep.subr.mxu0 0.0
    %679 = vmatpush1.msra.mxu0 0.0
    %680 = vmatprep.subr.mxu0 0.0
    %681 = vmatpush1.msra.mxu0 0.0
    %682 = vmatprep.subr.mxu0 0.0
    %683 = vmatpush1.msra.mxu0 0.0
    %684 = vmatprep.subr.mxu0 0.0
    %685 = vmatpush1.msra.mxu0 0.0
    %686 = vmatprep.subr.mxu0 0.0
    %687 = vmatpush1.msra.mxu0 0.0
    %688 = vmatprep.subr.mxu0 0.0
    %689 = vmatpush1.msra.mxu0 %v658
    %690 = vmatprep.subr.mxu0 0.0
    %691 = vmatpush1.msra.mxu0 %v643
    %692 = vmatprep.subr.mxu0 0.0
    %693 = vmatpush2.msra.mxu0 0.0
    %694 = vmatprep.subr.mxu0 0.0
    %695 = vmatpush2.msra.mxu0 0.0
    %696 = vmatprep.subr.mxu0 0.0
    %697 = vmatpush2.msra.mxu0 0.0
    %698 = vmatprep.subr.mxu0 0.0
    %699 = vmatpush2.msra.mxu0 0.0
    %700 = vmatprep.subr.mxu0 0.0
    %701 = vmatpush2.msra.mxu0 0.0
    %702 = vmatprep.subr.mxu0 0.0
    %703 = vmatpush2.msra.mxu0 0.0
    %704 = vmatprep.subr.mxu0 0.0
    %705 = vmatpush2.msra.mxu0 0.0
    %706 = vmatprep.subr.mxu0 0.0
    %707 = vmatpush2.msra.mxu0 0.0
    %708 = vmatprep.subr.mxu0 0.0
    %709 = vmatpush2.msra.mxu0 0.0
    %710 = vmatprep.subr.mxu0 0.0
    %711 = vmatpush2.msra.mxu0 0.0
    %712 = vmatprep.subr.mxu0 0.0
    %713 = vmatpush2.msra.mxu0 0.0
    %714 = vmatprep.subr.mxu0 0.0
    %715 = vmatpush2.msra.mxu0 0.0
    %716 = vmatprep.subr.mxu0 0.0
    %717 = vmatpush2.msra.mxu0 0.0
    %718 = vmatprep.subr.mxu0 0.0
    %719 = vmatpush2.msra.mxu0 0.0
    %720 = vmatprep.subr.mxu0 0.0
    %721 = vmatpush2.msra.mxu0 0.0
    %722 = vmatprep.subr.mxu0 0.0
    %723 = vmatpush2.msra.mxu0 0.0
    %724 = vmatprep.mubr.f32.mxu0 0.0
    %725 = vmatmul.mubr.f32.gmra.mxu0 %v654
    %v726 = vpop.f32.mrf.mxu0
    %v727 = vadd.f32 %v650, %v726
    %v728 = vpop.f32.mrf.mxu0
    %729 = vdwg.mxu0
    %v730 = vlaneseq
    %v731 = vand.u32 %v730, 127
    %vm732 = vcmp.ge.s32.totalorder %v731, 64
    %vm733 = vcmp.lt.s32.totalorder %v731, 96
    %vm734 = vmand %vm732, %vm733
    %v735 = vadd.s32 %v731, 128
    %vm736 = vcmp.lt.s32.totalorder %v731, 192
    %vm737 = vcmp.lt.s32.totalorder %v735, 192
    %v738 = vld [vmem:[#allocation11] sm:$0xff]
    %v739 = vld [vmem:[#allocation11 + $0x8] sm:$0xff]
    %v740 = vld [vmem:[#allocation11 + $0x10] sm:$0xff]
    %v741 = vld [vmem:[#allocation11 + $0x18] sm:$0xff]
    %v742 = vld [vmem:[#allocation16] sm:$0xff]
    %v743 = vld [vmem:[#allocation16 + $0x8] sm:$0xff]
    %v744 = vld [vmem:[#allocation16 + $0x10] sm:$0xff]
    %v745 = vld [vmem:[#allocation16 + $0x18] sm:$0xff]
    %v746 = vld [vmem:[#allocation17] sm:$0xff]
    %v747 = vld [vmem:[#allocation17 + $0x8] sm:$0xff]
    %v748 = vld [vmem:[#allocation17 + $0x10] sm:$0xff]
    %v749 = vld [vmem:[#allocation17 + $0x18] sm:$0xff]
    %v750 = vld [vmem:[#allocation17 + $0x20] sm:$0xff]
    %v751 = vld [vmem:[#allocation17 + $0x28] sm:$0xff]
    %v752 = vld [vmem:[#allocation17 + $0x30] sm:$0xff]
    %v753 = vld [vmem:[#allocation17 + $0x38] sm:$0xff]
    %v754 = vld [vmem:[#allocation17 + $0x40] sm:$0xff]
    %v755 = vld [vmem:[#allocation17 + $0x48] sm:$0xff]
    %v756 = vld [vmem:[#allocation17 + $0x50] sm:$0xff]
    %v757 = vld [vmem:[#allocation17 + $0x58] sm:$0xff]
    %v758 = vld [vmem:[#allocation17 + $0x60] sm:$0xff]
    %v759 = vld [vmem:[#allocation17 + $0x68] sm:$0xff]
    %v760 = vld [vmem:[#allocation17 + $0x70] sm:$0xff]
    %v761 = vld [vmem:[#allocation17 + $0x78] sm:$0xff]
    %v762 = vld [vmem:[%s16] sm:$0x3]
    %v764 = vsel %vm292, 0.0, 0
    %766 = vmatprep.subr.mxu0 0.0
    %767 = vmatpush1.msra.mxu0 0.0
    %768 = vmatprep.subr.mxu0 0.0
    %769 = vmatpush1.msra.mxu0 0.0
    %770 = vmatprep.subr.mxu0 0.0
    %771 = vmatpush1.msra.mxu0 0.0
    %772 = vmatprep.subr.mxu0 0.0
    %773 = vmatpush1.msra.mxu0 0.0
    %774 = vmatprep.subr.mxu0 0.0
    %775 = vmatpush1.msra.mxu0 0.0
    %776 = vmatprep.subr.mxu0 0.0
    %777 = vmatpush1.msra.mxu0 0.0
    %778 = vmatprep.subr.mxu0 0.0
    %779 = vmatpush1.msra.mxu0 0.0
    %780 = vmatprep.subr.mxu0 0.0
    %781 = vmatpush1.msra.mxu0 0.0
    %782 = vmatprep.subr.mxu0 0.0
    %783 = vmatpush1.msra.mxu0 0.0
    %784 = vmatprep.subr.mxu0 0.0
    %785 = vmatpush1.msra.mxu0 0.0
    %786 = vmatprep.subr.mxu0 0.0
    %787 = vmatpush1.msra.mxu0 0.0
    %788 = vmatprep.subr.mxu0 0.0
    %789 = vmatpush1.msra.mxu0 0.0
    %790 = vmatprep.subr.mxu0 0.0
    %791 = vmatpush1.msra.mxu0 %v741
    %792 = vmatprep.subr.mxu0 0.0
    %793 = vmatpush1.msra.mxu0 %v740
    %794 = vmatprep.subr.mxu0 0.0
    %795 = vmatpush1.msra.mxu0 %v739
    %796 = vmatprep.subr.mxu0 0.0
    %797 = vmatpush1.msra.mxu0 %v738
    %798 = vmatprep.subr.mxu0 0.0
    %799 = vmatpush2.msra.mxu0 0.0
    %800 = vmatprep.subr.mxu0 0.0
    %801 = vmatpush2.msra.mxu0 0.0
    %802 = vmatprep.subr.mxu0 0.0
    %803 = vmatpush2.msra.mxu0 0.0
    %804 = vmatprep.subr.mxu0 0.0
    %805 = vmatpush2.msra.mxu0 0.0
    %806 = vmatprep.subr.mxu0 0.0
    %807 = vmatpush2.msra.mxu0 0.0
    %808 = vmatprep.subr.mxu0 0.0
    %809 = vmatpush2.msra.mxu0 0.0
    %810 = vmatprep.subr.mxu0 0.0
    %811 = vmatpush2.msra.mxu0 0.0
    %812 = vmatprep.subr.mxu0 0.0
    %813 = vmatpush2.msra.mxu0 0.0
    %814 = vmatprep.subr.mxu0 0.0
    %815 = vmatpush2.msra.mxu0 0.0
    %816 = vmatprep.subr.mxu0 0.0
    %817 = vmatpush2.msra.mxu0 0.0
    %818 = vmatprep.subr.mxu0 0.0
    %819 = vmatpush2.msra.mxu0 0.0
    %820 = vmatprep.subr.mxu0 0.0
    %821 = vmatpush2.msra.mxu0 0.0
    %822 = vmatprep.subr.mxu0 0.0
    %823 = vmatpush2.msra.mxu0 0.0
    %824 = vmatprep.subr.mxu0 0.0
    %825 = vmatpush2.msra.mxu0 0.0
    %826 = vmatprep.subr.mxu0 0.0
    %827 = vmatpush2.msra.mxu0 0.0
    %828 = vmatprep.subr.mxu0 0.0
    %829 = vmatpush2.msra.mxu0 0.0
    %830 = vmatprep.mubr.f32.mxu0 0.0
    %831 = vmatmul.mubr.f32.gmra.mxu0 %v764
    %v832 = vpop.f32.mrf.mxu0
    %v833 = vadd.f32 0.0, %v832
    %v834 = vpop.f32.mrf.mxu0
    %835 = vdwg.mxu0
    %v836 = vadd.f32 %v640, %v833
    %v837 = vtanh.pop %v836
    %v838 = vxor.u32 %v836, 2147483648
    %v839 = vmul.f32 %v838, 1.442695
    %v840 = vpow.pop %v839
    %v841 = vadd.f32 %v840, 1.0
    %v842 = vrcp.pop %v841
    %v843 = vmul.f32 1.0, %v842
    %v844 = vsel %vm734, %v837, %v843
    %v845 = vmul.f32 %v844, 0.0
    %847 = vrot.lane.b32.xlu0 %v844, 64
    %v848 = vpop.permute.xlu0 %847
    %v850 = vmul.f32 %v844, %v848
    %852 = vrot.lane.b32.xlu0 %v850, 32
    %v853 = vpop.permute.xlu0 %852
    %v855 = vadd.f32 %v845, %v853
    %v856 = vtanh.pop %v855
    %858 = vrot.lane.b32.xlu0 %v856, 64
    %v859 = vpop.permute.xlu0 %858
    %v861 = vmul.f32 %v844, %v859
    %862 = vmatprep.subr.mxu0 0.0
    %863 = vmatpush1.msra.mxu0 0.0
    %864 = vmatprep.subr.mxu0 0.0
    %865 = vmatpush1.msra.mxu0 0.0
    %866 = vmatprep.subr.mxu0 0.0
    %867 = vmatpush1.msra.mxu0 0.0
    %868 = vmatprep.subr.mxu0 0.0
    %869 = vmatpush1.msra.mxu0 0.0
    %870 = vmatprep.subr.mxu0 0.0
    %871 = vmatpush1.msra.mxu0 0.0
    %872 = vmatprep.subr.mxu0 0.0
    %873 = vmatpush1.msra.mxu0 0.0
    %874 = vmatprep.subr.mxu0 0.0
    %875 = vmatpush1.msra.mxu0 0.0
    %876 = vmatprep.subr.mxu0 0.0
    %877 = vmatpush1.msra.mxu0 0.0
    %878 = vmatprep.subr.mxu0 0.0
    %879 = vmatpush1.msra.mxu0 0.0
    %880 = vmatprep.subr.mxu0 0.0
    %881 = vmatpush1.msra.mxu0 0.0
    %882 = vmatprep.subr.mxu0 0.0
    %883 = vmatpush1.msra.mxu0 0.0
    %884 = vmatprep.subr.mxu0 0.0
    %885 = vmatpush1.msra.mxu0 0.0
    %886 = vmatprep.subr.mxu0 0.0
    %887 = vmatpush1.msra.mxu0 %v745
    %888 = vmatprep.subr.mxu0 0.0
    %889 = vmatpush1.msra.mxu0 %v744
    %890 = vmatprep.subr.mxu0 0.0
    %891 = vmatpush1.msra.mxu0 %v743
    %892 = vmatprep.subr.mxu0 0.0
    %893 = vmatpush1.msra.mxu0 %v742
    %894 = vmatprep.subr.mxu0 0.0
    %895 = vmatpush2.msra.mxu0 0.0
    %896 = vmatprep.subr.mxu0 0.0
    %897 = vmatpush2.msra.mxu0 0.0
    %898 = vmatprep.subr.mxu0 0.0
    %899 = vmatpush2.msra.mxu0 0.0
    %900 = vmatprep.subr.mxu0 0.0
    %901 = vmatpush2.msra.mxu0 0.0
    %902 = vmatprep.subr.mxu0 0.0
    %903 = vmatpush2.msra.mxu0 0.0
    %904 = vmatprep.subr.mxu0 0.0
    %905 = vmatpush2.msra.mxu0 0.0
    %906 = vmatprep.subr.mxu0 0.0
    %907 = vmatpush2.msra.mxu0 0.0
    %908 = vmatprep.subr.mxu0 0.0
    %909 = vmatpush2.msra.mxu0 0.0
    %910 = vmatprep.subr.mxu0 0.0
    %911 = vmatpush2.msra.mxu0 0.0
    %912 = vmatprep.subr.mxu0 0.0
    %913 = vmatpush2.msra.mxu0 0.0
    %914 = vmatprep.subr.mxu0 0.0
    %915 = vmatpush2.msra.mxu0 0.0
    %916 = vmatprep.subr.mxu0 0.0
    %917 = vmatpush2.msra.mxu0 0.0
    %918 = vmatprep.subr.mxu0 0.0
    %919 = vmatpush2.msra.mxu0 0.0
    %920 = vmatprep.subr.mxu0 0.0
    %921 = vmatpush2.msra.mxu0 0.0
    %922 = vmatprep.subr.mxu0 0.0
    %923 = vmatpush2.msra.mxu0 0.0
    %924 = vmatprep.subr.mxu0 0.0
    %925 = vmatpush2.msra.mxu0 0.0
    %926 = vmatprep.mubr.f32.mxu0 0.0
    %927 = vmatmul.mubr.f32.gmra.mxu0 %v764
    %v928 = vpop.f32.mrf.mxu0
    %v929 = vadd.f32 0.0, %v928
    %v930 = vpop.f32.mrf.mxu0
    %931 = vdwg.mxu0
    %v932 = vadd.f32 %v727, %v929
    %v933 = vtanh.pop %v932
    %v934 = vxor.u32 %v932, 2147483648
    %v935 = vmul.f32 %v934, 1.442695
    %v936 = vpow.pop %v935
    %v937 = vadd.f32 %v936, 1.0
    %v938 = vrcp.pop %v937
    %v939 = vmul.f32 1.0, %v938
    %v940 = vsel %vm734, %v933, %v939
    %v941 = vmul.f32 %v940, 0.0
    %943 = vrot.lane.b32.xlu0 %v940, 64
    %v944 = vpop.permute.xlu0 %943
    %v946 = vmul.f32 %v940, %v944
    %948 = vrot.lane.b32.xlu0 %v946, 32
    %v949 = vpop.permute.xlu0 %948
    %v951 = vadd.f32 %v941, %v949
    %v952 = vtanh.pop %v951
    %954 = vrot.lane.b32.xlu0 %v952, 64
    %v955 = vpop.permute.xlu0 %954
    %v957 = vmul.f32 %v940, %v955
    %959 = vrot.lane.b32.xlu0 %v861, 32
    %v960 = vpop.permute.xlu0 %959
    %963 = vrot.lane.b32.xlu0 %v957, 64
    %v964 = vpop.permute.xlu0 %963
    %v966 = vsel %vm292, %v960, %v964
    %v968 = vlaneseq
    %v969 = vshrl.u32 %v968, 7
    %v970 = vsub.s32 0, %v969
    %v971 = vrot.slane %v762, %v970
    %v972 = vlaneseq
    %v973 = vshrl.u32 %v972, 7
    %v974 = vsub.s32 1, %v973
    %v975 = vrot.slane %v762, %v974
    %v979 = vsel %vm197, %v966, 0
    %981 = vmatprep.subr.mxu0 0.0
    %982 = vmatpush1.msra.mxu0 0.0
    %983 = vmatprep.subr.mxu0 0.0
    %984 = vmatpush1.msra.mxu0 0.0
    %985 = vmatprep.subr.mxu0 0.0
    %986 = vmatpush1.msra.mxu0 0.0
    %987 = vmatprep.subr.mxu0 0.0
    %988 = vmatpush1.msra.mxu0 0.0
    %989 = vmatprep.subr.mxu0 0.0
    %990 = vmatpush1.msra.mxu0 0.0
    %991 = vmatprep.subr.mxu0 0.0
    %992 = vmatpush1.msra.mxu0 0.0
    %993 = vmatprep.subr.mxu0 0.0
    %994 = vmatpush1.msra.mxu0 0.0
    %995 = vmatprep.subr.mxu0 0.0
    %996 = vmatpush1.msra.mxu0 0.0
    %997 = vmatprep.subr.mxu0 %v761
    %998 = vmatpush1.msra.mxu0 %v760
    %999 = vmatprep.subr.mxu0 %v759
    %1000 = vmatpush1.msra.mxu0 %v758
    %1001 = vmatprep.subr.mxu0 %v757
    %1002 = vmatpush1.msra.mxu0 %v756
    %1003 = vmatprep.subr.mxu0 %v755
    %1004 = vmatpush1.msra.mxu0 %v754
    %1005 = vmatprep.subr.mxu0 %v753
    %1006 = vmatpush1.msra.mxu0 %v752
    %1007 = vmatprep.subr.mxu0 %v751
    %1008 = vmatpush1.msra.mxu0 %v750
    %1009 = vmatprep.subr.mxu0 %v749
    %1010 = vmatpush1.msra.mxu0 %v748
    %1011 = vmatprep.subr.mxu0 %v747
    %1012 = vmatpush1.msra.mxu0 %v746
    %1013 = vmatprep.subr.mxu0 0.0
    %1014 = vmatpush2.msra.mxu0 0.0
    %1015 = vmatprep.subr.mxu0 0.0
    %1016 = vmatpush2.msra.mxu0 0.0
    %1017 = vmatprep.subr.mxu0 0.0
    %1018 = vmatpush2.msra.mxu0 0.0
    %1019 = vmatprep.subr.mxu0 0.0
    %1020 = vmatpush2.msra.mxu0 0.0
    %1021 = vmatprep.subr.mxu0 0.0
    %1022 = vmatpush2.msra.mxu0 0.0
    %1023 = vmatprep.subr.mxu0 0.0
    %1024 = vmatpush2.msra.mxu0 0.0
    %1025 = vmatprep.subr.mxu0 0.0
    %1026 = vmatpush2.msra.mxu0 0.0
    %1027 = vmatprep.subr.mxu0 0.0
    %1028 = vmatpush2.msra.mxu0 0.0
    %1029 = vmatprep.subr.mxu0 0.0
    %1030 = vmatpush2.msra.mxu0 0.0
    %1031 = vmatprep.subr.mxu0 0.0
    %1032 = vmatpush2.msra.mxu0 0.0
    %1033 = vmatprep.subr.mxu0 0.0
    %1034 = vmatpush2.msra.mxu0 0.0
    %1035 = vmatprep.subr.mxu0 0.0
    %1036 = vmatpush2.msra.mxu0 0.0
    %1037 = vmatprep.subr.mxu0 0.0
    %1038 = vmatpush2.msra.mxu0 0.0
    %1039 = vmatprep.subr.mxu0 0.0
    %1040 = vmatpush2.msra.mxu0 0.0
    %1041 = vmatprep.subr.mxu0 0.0
    %1042 = vmatpush2.msra.mxu0 0.0
    %1043 = vmatprep.subr.mxu0 0.0
    %1044 = vmatpush2.msra.mxu0 0.0
    %1045 = vmatprep.mubr.f32.mxu0 0.0
    %1046 = vmatmul.mubr.f32.gmra.mxu0 %v979
    %v1047 = vpop.f32.mrf.mxu0
    %v1048 = vadd.f32 %v971, %v1047
    %v1049 = vpop.f32.mrf.mxu0
    %v1050 = vadd.f32 %v975, %v1049
    %1051 = vdwg.mxu0
    %v1052 = vtanh.pop %v1048
    %v1053 = vtanh.pop %v1050
    %v1054 = vsel %vm736, %v1052, %v1048
    %v1055 = vsel %vm737, %v1053, %v1050
    %v1058 = vcombine.low %v1054, %v1055
    %v1060 = vunpack.c.l.s4 1966171168
    %v1061 = vunpack.c.0.s8 %v1060
    %v1062 = vlaneseq
    %v1063 = vshrl.u32 %v1062, 7
    %v1064 = vsub.s32 %v1061, %v1063
    %v1065 = vrot.slane %v1058, %v1064
    %v1066 = vcombine.high %v1065, %v1065
    %v1068 = vunpack.c.l.s4 1966171168
    %v1069 = vunpack.c.0.s8 %v1068
    %v1070 = vlaneseq
    %v1071 = vshrl.u32 %v1070, 7
    %v1072 = vsub.s32 %v1069, %v1071
    %v1073 = vrot.slane %v1065, %v1072
    %v1075 = vunpack.c.l.s4 1966171168
    %v1076 = vunpack.c.0.s8 %v1075
    %v1077 = vlaneseq
    %v1078 = vshrl.u32 %v1077, 7
    %v1079 = vsub.s32 %v1076, %v1078
    %v1080 = vrot.slane %v1066, %v1079
    %v1083 = vlaneseq
    %vm1084 = vcmp.ge.s32.totalorder %v1083, 0
    %vm1085 = vcmp.lt.s32.totalorder %v1083, 256
    %vm1086 = vmand %vm1084, %vm1085
    %1087 = vst.msk [vmem:[#allocation19] ss:$8 sm:$0x3] %vm1086, %v1073
    %1088 = vst.msk [vmem:[#allocation19] ss:$8 sm:$0x0] %vm1086, %v1073
    %s1089 = scalar_lea.vmem [#allocation19], 16
    %1090 = vst.msk [vmem:[%s1089] ss:$8 sm:$0x3] %vm1086, %v1080
    %1091 = vst.msk [vmem:[%s1089] ss:$8 sm:$0x0] %vm1086, %v1080
    %v1092 = vsel %vm292, %v960, 0
    %1094 = vmatprep.subr.mxu0 0.0
    %1095 = vmatpush1.msra.mxu0 0.0
    %1096 = vmatprep.subr.mxu0 0.0
    %1097 = vmatpush1.msra.mxu0 0.0
    %1098 = vmatprep.subr.mxu0 0.0
    %1099 = vmatpush1.msra.mxu0 0.0
    %1100 = vmatprep.subr.mxu0 0.0
    %1101 = vmatpush1.msra.mxu0 0.0
    %1102 = vmatprep.subr.mxu0 0.0
    %1103 = vmatpush1.msra.mxu0 0.0
    %1104 = vmatprep.subr.mxu0 0.0
    %1105 = vmatpush1.msra.mxu0 0.0
    %1106 = vmatprep.subr.mxu0 0.0
    %1107 = vmatpush1.msra.mxu0 0.0
    %1108 = vmatprep.subr.mxu0 0.0
    %1109 = vmatpush1.msra.mxu0 0.0
    %1110 = vmatprep.subr.mxu0 0.0
    %1111 = vmatpush1.msra.mxu0 0.0
    %1112 = vmatprep.subr.mxu0 0.0
    %1113 = vmatpush1.msra.mxu0 0.0
    %1114 = vmatprep.subr.mxu0 0.0
    %1115 = vmatpush1.msra.mxu0 0.0
    %1116 = vmatprep.subr.mxu0 0.0
    %1117 = vmatpush1.msra.mxu0 0.0
    %1118 = vmatprep.subr.mxu0 0.0
    %1119 = vmatpush1.msra.mxu0 %v741
    %1120 = vmatprep.subr.mxu0 0.0
    %1121 = vmatpush1.msra.mxu0 %v740
    %1122 = vmatprep.subr.mxu0 0.0
    %1123 = vmatpush1.msra.mxu0 %v739
    %1124 = vmatprep.subr.mxu0 0.0
    %1125 = vmatpush1.msra.mxu0 %v738
    %1126 = vmatprep.subr.mxu0 0.0
    %1127 = vmatpush2.msra.mxu0 0.0
    %1128 = vmatprep.subr.mxu0 0.0
    %1129 = vmatpush2.msra.mxu0 0.0
    %1130 = vmatprep.subr.mxu0 0.0
    %1131 = vmatpush2.msra.mxu0 0.0
    %1132 = vmatprep.subr.mxu0 0.0
    %1133 = vmatpush2.msra.mxu0 0.0
    %1134 = vmatprep.subr.mxu0 0.0
    %1135 = vmatpush2.msra.mxu0 0.0
    %1136 = vmatprep.subr.mxu0 0.0
    %1137 = vmatpush2.msra.mxu0 0.0
    %1138 = vmatprep.subr.mxu0 0.0
    %1139 = vmatpush2.msra.mxu0 0.0
    %1140 = vmatprep.subr.mxu0 0.0
    %1141 = vmatpush2.msra.mxu0 0.0
    %1142 = vmatprep.subr.mxu0 0.0
    %1143 = vmatpush2.msra.mxu0 0.0
    %1144 = vmatprep.subr.mxu0 0.0
    %1145 = vmatpush2.msra.mxu0 0.0
    %1146 = vmatprep.subr.mxu0 0.0
    %1147 = vmatpush2.msra.mxu0 0.0
    %1148 = vmatprep.subr.mxu0 0.0
    %1149 = vmatpush2.msra.mxu0 0.0
    %1150 = vmatprep.subr.mxu0 0.0
    %1151 = vmatpush2.msra.mxu0 0.0
    %1152 = vmatprep.subr.mxu0 0.0
    %1153 = vmatpush2.msra.mxu0 0.0
    %1154 = vmatprep.subr.mxu0 0.0
    %1155 = vmatpush2.msra.mxu0 0.0
    %1156 = vmatprep.subr.mxu0 0.0
    %1157 = vmatpush2.msra.mxu0 0.0
    %1158 = vmatprep.mubr.f32.mxu0 0.0
    %1159 = vmatmul.mubr.f32.gmra.mxu0 %v1092
    %v1160 = vpop.f32.mrf.mxu0
    %v1161 = vadd.f32 0.0, %v1160
    %v1162 = vpop.f32.mrf.mxu0
    %1163 = vdwg.mxu0
    %v1164 = vadd.f32 %v640, %v1161
    %v1165 = vtanh.pop %v1164
    %v1166 = vxor.u32 %v1164, 2147483648
    %v1167 = vmul.f32 %v1166, 1.442695
    %v1168 = vpow.pop %v1167
    %v1169 = vadd.f32 %v1168, 1.0
    %v1170 = vrcp.pop %v1169
    %v1171 = vmul.f32 1.0, %v1170
    %v1172 = vsel %vm734, %v1165, %v1171
    %v1173 = vmul.f32 %v1172, %v855
    %1175 = vrot.lane.b32.xlu0 %v1172, 64
    %v1176 = vpop.permute.xlu0 %1175
    %v1178 = vmul.f32 %v1172, %v1176
    %1180 = vrot.lane.b32.xlu0 %v1178, 32
    %v1181 = vpop.permute.xlu0 %1180
    %v1183 = vadd.f32 %v1173, %v1181
    %v1184 = vtanh.pop %v1183
    %1186 = vrot.lane.b32.xlu0 %v1184, 64
    %v1187 = vpop.permute.xlu0 %1186
    %v1189 = vmul.f32 %v1172, %v1187
    %1190 = vrot.lane.b32.xlu0 %v957, 32
    %v1191 = vpop.permute.xlu0 %1190
    %v1192 = vsel %vm292, %v1191, 0
    %1194 = vmatprep.subr.mxu0 0.0
    %1195 = vmatpush1.msra.mxu0 0.0
    %1196 = vmatprep.subr.mxu0 0.0
    %1197 = vmatpush1.msra.mxu0 0.0
    %1198 = vmatprep.subr.mxu0 0.0
    %1199 = vmatpush1.msra.mxu0 0.0
    %1200 = vmatprep.subr.mxu0 0.0
    %1201 = vmatpush1.msra.mxu0 0.0
    %1202 = vmatprep.subr.mxu0 0.0
    %1203 = vmatpush1.msra.mxu0 0.0
    %1204 = vmatprep.subr.mxu0 0.0
    %1205 = vmatpush1.msra.mxu0 0.0
    %1206 = vmatprep.subr.mxu0 0.0
    %1207 = vmatpush1.msra.mxu0 0.0
    %1208 = vmatprep.subr.mxu0 0.0
    %1209 = vmatpush1.msra.mxu0 0.0
    %1210 = vmatprep.subr.mxu0 0.0
    %1211 = vmatpush1.msra.mxu0 0.0
    %1212 = vmatprep.subr.mxu0 0.0
    %1213 = vmatpush1.msra.mxu0 0.0
    %1214 = vmatprep.subr.mxu0 0.0
    %1215 = vmatpush1.msra.mxu0 0.0
    %1216 = vmatprep.subr.mxu0 0.0
    %1217 = vmatpush1.msra.mxu0 0.0
    %1218 = vmatprep.subr.mxu0 0.0
    %1219 = vmatpush1.msra.mxu0 %v745
    %1220 = vmatprep.subr.mxu0 0.0
    %1221 = vmatpush1.msra.mxu0 %v744
    %1222 = vmatprep.subr.mxu0 0.0
    %1223 = vmatpush1.msra.mxu0 %v743
    %1224 = vmatprep.subr.mxu0 0.0
    %1225 = vmatpush1.msra.mxu0 %v742
    %1226 = vmatprep.subr.mxu0 0.0
    %1227 = vmatpush2.msra.mxu0 0.0
    %1228 = vmatprep.subr.mxu0 0.0
    %1229 = vmatpush2.msra.mxu0 0.0
    %1230 = vmatprep.subr.mxu0 0.0
    %1231 = vmatpush2.msra.mxu0 0.0
    %1232 = vmatprep.subr.mxu0 0.0
    %1233 = vmatpush2.msra.mxu0 0.0
    %1234 = vmatprep.subr.mxu0 0.0
    %1235 = vmatpush2.msra.mxu0 0.0
    %1236 = vmatprep.subr.mxu0 0.0
    %1237 = vmatpush2.msra.mxu0 0.0
    %1238 = vmatprep.subr.mxu0 0.0
    %1239 = vmatpush2.msra.mxu0 0.0
    %1240 = vmatprep.subr.mxu0 0.0
    %1241 = vmatpush2.msra.mxu0 0.0
    %1242 = vmatprep.subr.mxu0 0.0
    %1243 = vmatpush2.msra.mxu0 0.0
    %1244 = vmatprep.subr.mxu0 0.0
    %1245 = vmatpush2.msra.mxu0 0.0
    %1246 = vmatprep.subr.mxu0 0.0
    %1247 = vmatpush2.msra.mxu0 0.0
    %1248 = vmatprep.subr.mxu0 0.0
    %1249 = vmatpush2.msra.mxu0 0.0
    %1250 = vmatprep.subr.mxu0 0.0
    %1251 = vmatpush2.msra.mxu0 0.0
    %1252 = vmatprep.subr.mxu0 0.0
    %1253 = vmatpush2.msra.mxu0 0.0
    %1254 = vmatprep.subr.mxu0 0.0
    %1255 = vmatpush2.msra.mxu0 0.0
    %1256 = vmatprep.subr.mxu0 0.0
    %1257 = vmatpush2.msra.mxu0 0.0
    %1258 = vmatprep.mubr.f32.mxu0 0.0
    %1259 = vmatmul.mubr.f32.gmra.mxu0 %v1192
    %v1260 = vpop.f32.mrf.mxu0
    %v1261 = vadd.f32 0.0, %v1260
    %v1262 = vpop.f32.mrf.mxu0
    %1263 = vdwg.mxu0
    %v1264 = vadd.f32 %v727, %v1261
    %v1265 = vtanh.pop %v1264
    %v1266 = vxor.u32 %v1264, 2147483648
    %v1267 = vmul.f32 %v1266, 1.442695
    %v1268 = vpow.pop %v1267
    %v1269 = vadd.f32 %v1268, 1.0
    %v1270 = vrcp.pop %v1269
    %v1271 = vmul.f32 1.0, %v1270
    %v1272 = vsel %vm734, %v1265, %v1271
    %v1273 = vmul.f32 %v1272, %v951
    %1275 = vrot.lane.b32.xlu0 %v1272, 64
    %v1276 = vpop.permute.xlu0 %1275
    %v1278 = vmul.f32 %v1272, %v1276
    %1280 = vrot.lane.b32.xlu0 %v1278, 32
    %v1281 = vpop.permute.xlu0 %1280
    %v1283 = vadd.f32 %v1273, %v1281
    %v1284 = vtanh.pop %v1283
    %1286 = vrot.lane.b32.xlu0 %v1284, 64
    %v1287 = vpop.permute.xlu0 %1286
    %v1289 = vmul.f32 %v1272, %v1287
    %1291 = vrot.lane.b32.xlu0 %v1189, 32
    %v1292 = vpop.permute.xlu0 %1291
    %1295 = vrot.lane.b32.xlu0 %v1289, 64
    %v1296 = vpop.permute.xlu0 %1295
    %v1298 = vsel %vm292, %v1292, %v1296
    %v1300 = vsel %vm197, %v1298, 0
    %1302 = vmatprep.subr.mxu0 0.0
    %1303 = vmatpush1.msra.mxu0 0.0
    %1304 = vmatprep.subr.mxu0 0.0
    %1305 = vmatpush1.msra.mxu0 0.0
    %1306 = vmatprep.subr.mxu0 0.0
    %1307 = vmatpush1.msra.mxu0 0.0
    %1308 = vmatprep.subr.mxu0 0.0
    %1309 = vmatpush1.msra.mxu0 0.0
    %1310 = vmatprep.subr.mxu0 0.0
    %1311 = vmatpush1.msra.mxu0 0.0
    %1312 = vmatprep.subr.mxu0 0.0
    %1313 = vmatpush1.msra.mxu0 0.0
    %1314 = vmatprep.subr.mxu0 0.0
    %1315 = vmatpush1.msra.mxu0 0.0
    %1316 = vmatprep.subr.mxu0 0.0
    %1317 = vmatpush1.msra.mxu0 0.0
    %1318 = vmatprep.subr.mxu0 %v761
    %1319 = vmatpush1.msra.mxu0 %v760
    %1320 = vmatprep.subr.mxu0 %v759
    %1321 = vmatpush1.msra.mxu0 %v758
    %1322 = vmatprep.subr.mxu0 %v757
    %1323 = vmatpush1.msra.mxu0 %v756
    %1324 = vmatprep.subr.mxu0 %v755
    %1325 = vmatpush1.msra.mxu0 %v754
    %1326 = vmatprep.subr.mxu0 %v753
    %1327 = vmatpush1.msra.mxu0 %v752
    %1328 = vmatprep.subr.mxu0 %v751
    %1329 = vmatpush1.msra.mxu0 %v750
    %1330 = vmatprep.subr.mxu0 %v749
    %1331 = vmatpush1.msra.mxu0 %v748
    %1332 = vmatprep.subr.mxu0 %v747
    %1333 = vmatpush1.msra.mxu0 %v746
    %1334 = vmatprep.subr.mxu0 0.0
    %1335 = vmatpush2.msra.mxu0 0.0
    %1336 = vmatprep.subr.mxu0 0.0
    %1337 = vmatpush2.msra.mxu0 0.0
    %1338 = vmatprep.subr.mxu0 0.0
    %1339 = vmatpush2.msra.mxu0 0.0
    %1340 = vmatprep.subr.mxu0 0.0
    %1341 = vmatpush2.msra.mxu0 0.0
    %1342 = vmatprep.subr.mxu0 0.0
    %1343 = vmatpush2.msra.mxu0 0.0
    %1344 = vmatprep.subr.mxu0 0.0
    %1345 = vmatpush2.msra.mxu0 0.0
    %1346 = vmatprep.subr.mxu0 0.0
    %1347 = vmatpush2.msra.mxu0 0.0
    %1348 = vmatprep.subr.mxu0 0.0
    %1349 = vmatpush2.msra.mxu0 0.0
    %1350 = vmatprep.subr.mxu0 0.0
    %1351 = vmatpush2.msra.mxu0 0.0
    %1352 = vmatprep.subr.mxu0 0.0
    %1353 = vmatpush2.msra.mxu0 0.0
    %1354 = vmatprep.subr.mxu0 0.0
    %1355 = vmatpush2.msra.mxu0 0.0
    %1356 = vmatprep.subr.mxu0 0.0
    %1357 = vmatpush2.msra.mxu0 0.0
    %1358 = vmatprep.subr.mxu0 0.0
    %1359 = vmatpush2.msra.mxu0 0.0
    %1360 = vmatprep.subr.mxu0 0.0
    %1361 = vmatpush2.msra.mxu0 0.0
    %1362 = vmatprep.subr.mxu0 0.0
    %1363 = vmatpush2.msra.mxu0 0.0
    %1364 = vmatprep.subr.mxu0 0.0
    %1365 = vmatpush2.msra.mxu0 0.0
    %1366 = vmatprep.mubr.f32.mxu0 0.0
    %1367 = vmatmul.mubr.f32.gmra.mxu0 %v1300
    %v1368 = vpop.f32.mrf.mxu0
    %v1369 = vadd.f32 %v971, %v1368
    %v1370 = vpop.f32.mrf.mxu0
    %v1371 = vadd.f32 %v975, %v1370
    %1372 = vdwg.mxu0
    %v1373 = vtanh.pop %v1369
    %v1374 = vtanh.pop %v1371
    %v1375 = vsel %vm736, %v1373, %v1369
    %v1376 = vsel %vm737, %v1374, %v1371
    %v1379 = vcombine.low %v1375, %v1376
    %v1381 = vunpack.c.l.s4 1966171168
    %v1382 = vunpack.c.0.s8 %v1381
    %v1383 = vlaneseq
    %v1384 = vshrl.u32 %v1383, 7
    %v1385 = vsub.s32 %v1382, %v1384
    %v1386 = vrot.slane %v1379, %v1385
    %v1387 = vcombine.high %v1386, %v1386
    %v1389 = vunpack.c.l.s4 1966171168
    %v1390 = vunpack.c.0.s8 %v1389
    %v1391 = vlaneseq
    %v1392 = vshrl.u32 %v1391, 7
    %v1393 = vsub.s32 %v1390, %v1392
    %v1394 = vrot.slane %v1386, %v1393
    %v1396 = vunpack.c.l.s4 1966171168
    %v1397 = vunpack.c.0.s8 %v1396
    %v1398 = vlaneseq
    %v1399 = vshrl.u32 %v1398, 7
    %v1400 = vsub.s32 %v1397, %v1399
    %v1401 = vrot.slane %v1387, %v1400
    %s1404 = scalar_lea.vmem [#allocation19], 1
    %1405 = vst.msk [vmem:[%s1404] ss:$8 sm:$0x3] %vm1086, %v1394
    %1406 = vst.msk [vmem:[%s1404] ss:$8 sm:$0x0] %vm1086, %v1394
    %s1407 = scalar_lea.vmem [#allocation19], 17
    %1408 = vst.msk [vmem:[%s1407] ss:$8 sm:$0x3] %vm1086, %v1401
    %1409 = vst.msk [vmem:[%s1407] ss:$8 sm:$0x0] %vm1086, %v1401
    %v1410 = vsel %vm292, %v1292, 0
    %1412 = vmatprep.subr.mxu0 0.0
    %1413 = vmatpush1.msra.mxu0 0.0
    %1414 = vmatprep.subr.mxu0 0.0
    %1415 = vmatpush1.msra.mxu0 0.0
    %1416 = vmatprep.subr.mxu0 0.0
    %1417 = vmatpush1.msra.mxu0 0.0
    %1418 = vmatprep.subr.mxu0 0.0
    %1419 = vmatpush1.msra.mxu0 0.0
    %1420 = vmatprep.subr.mxu0 0.0
    %1421 = vmatpush1.msra.mxu0 0.0
    %1422 = vmatprep.subr.mxu0 0.0
    %1423 = vmatpush1.msra.mxu0 0.0
    %1424 = vmatprep.subr.mxu0 0.0
    %1425 = vmatpush1.msra.mxu0 0.0
    %1426 = vmatprep.subr.mxu0 0.0
    %1427 = vmatpush1.msra.mxu0 0.0
    %1428 = vmatprep.subr.mxu0 0.0
    %1429 = vmatpush1.msra.mxu0 0.0
    %1430 = vmatprep.subr.mxu0 0.0
    %1431 = vmatpush1.msra.mxu0 0.0
    %1432 = vmatprep.subr.mxu0 0.0
    %1433 = vmatpush1.msra.mxu0 0.0
    %1434 = vmatprep.subr.mxu0 0.0
    %1435 = vmatpush1.msra.mxu0 0.0
    %1436 = vmatprep.subr.mxu0 0.0
    %1437 = vmatpush1.msra.mxu0 %v741
    %1438 = vmatprep.subr.mxu0 0.0
    %1439 = vmatpush1.msra.mxu0 %v740
    %1440 = vmatprep.subr.mxu0 0.0
    %1441 = vmatpush1.msra.mxu0 %v739
    %1442 = vmatprep.subr.mxu0 0.0
    %1443 = vmatpush1.msra.mxu0 %v738
    %1444 = vmatprep.subr.mxu0 0.0
    %1445 = vmatpush2.msra.mxu0 0.0
    %1446 = vmatprep.subr.mxu0 0.0
    %1447 = vmatpush2.msra.mxu0 0.0
    %1448 = vmatprep.subr.mxu0 0.0
    %1449 = vmatpush2.msra.mxu0 0.0
    %1450 = vmatprep.subr.mxu0 0.0
    %1451 = vmatpush2.msra.mxu0 0.0
    %1452 = vmatprep.subr.mxu0 0.0
    %1453 = vmatpush2.msra.mxu0 0.0
    %1454 = vmatprep.subr.mxu0 0.0
    %1455 = vmatpush2.msra.mxu0 0.0
    %1456 = vmatprep.subr.mxu0 0.0
    %1457 = vmatpush2.msra.mxu0 0.0
    %1458 = vmatprep.subr.mxu0 0.0
    %1459 = vmatpush2.msra.mxu0 0.0
    %1460 = vmatprep.subr.mxu0 0.0
    %1461 = vmatpush2.msra.mxu0 0.0
    %1462 = vmatprep.subr.mxu0 0.0
    %1463 = vmatpush2.msra.mxu0 0.0
    %1464 = vmatprep.subr.mxu0 0.0
    %1465 = vmatpush2.msra.mxu0 0.0
    %1466 = vmatprep.subr.mxu0 0.0
    %1467 = vmatpush2.msra.mxu0 0.0
    %1468 = vmatprep.subr.mxu0 0.0
    %1469 = vmatpush2.msra.mxu0 0.0
    %1470 = vmatprep.subr.mxu0 0.0
    %1471 = vmatpush2.msra.mxu0 0.0
    %1472 = vmatprep.subr.mxu0 0.0
    %1473 = vmatpush2.msra.mxu0 0.0
    %1474 = vmatprep.subr.mxu0 0.0
    %1475 = vmatpush2.msra.mxu0 0.0
    %1476 = vmatprep.mubr.f32.mxu0 0.0
    %1477 = vmatmul.mubr.f32.gmra.mxu0 %v1410
    %v1478 = vpop.f32.mrf.mxu0
    %v1479 = vadd.f32 0.0, %v1478
    %v1480 = vpop.f32.mrf.mxu0
    %1481 = vdwg.mxu0
    %v1482 = vadd.f32 %v640, %v1479
    %v1483 = vtanh.pop %v1482
    %v1484 = vxor.u32 %v1482, 2147483648
    %v1485 = vmul.f32 %v1484, 1.442695
    %v1486 = vpow.pop %v1485
    %v1487 = vadd.f32 %v1486, 1.0
    %v1488 = vrcp.pop %v1487
    %v1489 = vmul.f32 1.0, %v1488
    %v1490 = vsel %vm734, %v1483, %v1489
    %v1491 = vmul.f32 %v1490, %v1183
    %1493 = vrot.lane.b32.xlu0 %v1490, 64
    %v1494 = vpop.permute.xlu0 %1493
    %v1496 = vmul.f32 %v1490, %v1494
    %1498 = vrot.lane.b32.xlu0 %v1496, 32
    %v1499 = vpop.permute.xlu0 %1498
    %v1501 = vadd.f32 %v1491, %v1499
    %v1502 = vtanh.pop %v1501
    %1504 = vrot.lane.b32.xlu0 %v1502, 64
    %v1505 = vpop.permute.xlu0 %1504
    %v1507 = vmul.f32 %v1490, %v1505
    %1508 = vrot.lane.b32.xlu0 %v1289, 32
    %v1509 = vpop.permute.xlu0 %1508
    %v1510 = vsel %vm292, %v1509, 0
    %1512 = vmatprep.subr.mxu0 0.0
    %1513 = vmatpush1.msra.mxu0 0.0
    %1514 = vmatprep.subr.mxu0 0.0
    %1515 = vmatpush1.msra.mxu0 0.0
    %1516 = vmatprep.subr.mxu0 0.0
    %1517 = vmatpush1.msra.mxu0 0.0
    %1518 = vmatprep.subr.mxu0 0.0
    %1519 = vmatpush1.msra.mxu0 0.0
    %1520 = vmatprep.subr.mxu0 0.0
    %1521 = vmatpush1.msra.mxu0 0.0
    %1522 = vmatprep.subr.mxu0 0.0
    %1523 = vmatpush1.msra.mxu0 0.0
    %1524 = vmatprep.subr.mxu0 0.0
    %1525 = vmatpush1.msra.mxu0 0.0
    %1526 = vmatprep.subr.mxu0 0.0
    %1527 = vmatpush1.msra.mxu0 0.0
    %1528 = vmatprep.subr.mxu0 0.0
    %1529 = vmatpush1.msra.mxu0 0.0
    %1530 = vmatprep.subr.mxu0 0.0
    %1531 = vmatpush1.msra.mxu0 0.0
    %1532 = vmatprep.subr.mxu0 0.0
    %1533 = vmatpush1.msra.mxu0 0.0
    %1534 = vmatprep.subr.mxu0 0.0
    %1535 = vmatpush1.msra.mxu0 0.0
    %1536 = vmatprep.subr.mxu0 0.0
    %1537 = vmatpush1.msra.mxu0 %v745
    %1538 = vmatprep.subr.mxu0 0.0
    %1539 = vmatpush1.msra.mxu0 %v744
    %1540 = vmatprep.subr.mxu0 0.0
    %1541 = vmatpush1.msra.mxu0 %v743
    %1542 = vmatprep.subr.mxu0 0.0
    %1543 = vmatpush1.msra.mxu0 %v742
    %1544 = vmatprep.subr.mxu0 0.0
    %1545 = vmatpush2.msra.mxu0 0.0
    %1546 = vmatprep.subr.mxu0 0.0
    %1547 = vmatpush2.msra.mxu0 0.0
    %1548 = vmatprep.subr.mxu0 0.0
    %1549 = vmatpush2.msra.mxu0 0.0
    %1550 = vmatprep.subr.mxu0 0.0
    %1551 = vmatpush2.msra.mxu0 0.0
    %1552 = vmatprep.subr.mxu0 0.0
    %1553 = vmatpush2.msra.mxu0 0.0
    %1554 = vmatprep.subr.mxu0 0.0
    %1555 = vmatpush2.msra.mxu0 0.0
    %1556 = vmatprep.subr.mxu0 0.0
    %1557 = vmatpush2.msra.mxu0 0.0
    %1558 = vmatprep.subr.mxu0 0.0
    %1559 = vmatpush2.msra.mxu0 0.0
    %1560 = vmatprep.subr.mxu0 0.0
    %1561 = vmatpush2.msra.mxu0 0.0
    %1562 = vmatprep.subr.mxu0 0.0
    %1563 = vmatpush2.msra.mxu0 0.0
    %1564 = vmatprep.subr.mxu0 0.0
    %1565 = vmatpush2.msra.mxu0 0.0
    %1566 = vmatprep.subr.mxu0 0.0
    %1567 = vmatpush2.msra.mxu0 0.0
    %1568 = vmatprep.subr.mxu0 0.0
    %1569 = vmatpush2.msra.mxu0 0.0
    %1570 = vmatprep.subr.mxu0 0.0
    %1571 = vmatpush2.msra.mxu0 0.0
    %1572 = vmatprep.subr.mxu0 0.0
    %1573 = vmatpush2.msra.mxu0 0.0
    %1574 = vmatprep.subr.mxu0 0.0
    %1575 = vmatpush2.msra.mxu0 0.0
    %1576 = vmatprep.mubr.f32.mxu0 0.0
    %1577 = vmatmul.mubr.f32.gmra.mxu0 %v1510
    %v1578 = vpop.f32.mrf.mxu0
    %v1579 = vadd.f32 0.0, %v1578
    %v1580 = vpop.f32.mrf.mxu0
    %1581 = vdwg.mxu0
    %v1582 = vadd.f32 %v727, %v1579
    %v1583 = vtanh.pop %v1582
    %v1584 = vxor.u32 %v1582, 2147483648
    %v1585 = vmul.f32 %v1584, 1.442695
    %v1586 = vpow.pop %v1585
    %v1587 = vadd.f32 %v1586, 1.0
    %v1588 = vrcp.pop %v1587
    %v1589 = vmul.f32 1.0, %v1588
    %v1590 = vsel %vm734, %v1583, %v1589
    %v1591 = vmul.f32 %v1590, %v1283
    %1593 = vrot.lane.b32.xlu0 %v1590, 64
    %v1594 = vpop.permute.xlu0 %1593
    %v1596 = vmul.f32 %v1590, %v1594
    %1598 = vrot.lane.b32.xlu0 %v1596, 32
    %v1599 = vpop.permute.xlu0 %1598
    %v1601 = vadd.f32 %v1591, %v1599
    %v1602 = vtanh.pop %v1601
    %1604 = vrot.lane.b32.xlu0 %v1602, 64
    %v1605 = vpop.permute.xlu0 %1604
    %v1607 = vmul.f32 %v1590, %v1605
    %1609 = vrot.lane.b32.xlu0 %v1507, 32
    %v1610 = vpop.permute.xlu0 %1609
    %1613 = vrot.lane.b32.xlu0 %v1607, 64
    %v1614 = vpop.permute.xlu0 %1613
    %v1616 = vsel %vm292, %v1610, %v1614
    %v1618 = vsel %vm197, %v1616, 0
    %1620 = vmatprep.subr.mxu0 0.0
    %1621 = vmatpush1.msra.mxu0 0.0
    %1622 = vmatprep.subr.mxu0 0.0
    %1623 = vmatpush1.msra.mxu0 0.0
    %1624 = vmatprep.subr.mxu0 0.0
    %1625 = vmatpush1.msra.mxu0 0.0
    %1626 = vmatprep.subr.mxu0 0.0
    %1627 = vmatpush1.msra.mxu0 0.0
    %1628 = vmatprep.subr.mxu0 0.0
    %1629 = vmatpush1.msra.mxu0 0.0
    %1630 = vmatprep.subr.mxu0 0.0
    %1631 = vmatpush1.msra.mxu0 0.0
    %1632 = vmatprep.subr.mxu0 0.0
    %1633 = vmatpush1.msra.mxu0 0.0
    %1634 = vmatprep.subr.mxu0 0.0
    %1635 = vmatpush1.msra.mxu0 0.0
    %1636 = vmatprep.subr.mxu0 %v761
    %1637 = vmatpush1.msra.mxu0 %v760
    %1638 = vmatprep.subr.mxu0 %v759
    %1639 = vmatpush1.msra.mxu0 %v758
    %1640 = vmatprep.subr.mxu0 %v757
    %1641 = vmatpush1.msra.mxu0 %v756
    %1642 = vmatprep.subr.mxu0 %v755
    %1643 = vmatpush1.msra.mxu0 %v754
    %1644 = vmatprep.subr.mxu0 %v753
    %1645 = vmatpush1.msra.mxu0 %v752
    %1646 = vmatprep.subr.mxu0 %v751
    %1647 = vmatpush1.msra.mxu0 %v750
    %1648 = vmatprep.subr.mxu0 %v749
    %1649 = vmatpush1.msra.mxu0 %v748
    %1650 = vmatprep.subr.mxu0 %v747
    %1651 = vmatpush1.msra.mxu0 %v746
    %1652 = vmatprep.subr.mxu0 0.0
    %1653 = vmatpush2.msra.mxu0 0.0
    %1654 = vmatprep.subr.mxu0 0.0
    %1655 = vmatpush2.msra.mxu0 0.0
    %1656 = vmatprep.subr.mxu0 0.0
    %1657 = vmatpush2.msra.mxu0 0.0
    %1658 = vmatprep.subr.mxu0 0.0
    %1659 = vmatpush2.msra.mxu0 0.0
    %1660 = vmatprep.subr.mxu0 0.0
    %1661 = vmatpush2.msra.mxu0 0.0
    %1662 = vmatprep.subr.mxu0 0.0
    %1663 = vmatpush2.msra.mxu0 0.0
    %1664 = vmatprep.subr.mxu0 0.0
    %1665 = vmatpush2.msra.mxu0 0.0
    %1666 = vmatprep.subr.mxu0 0.0
    %1667 = vmatpush2.msra.mxu0 0.0
    %1668 = vmatprep.subr.mxu0 0.0
    %1669 = vmatpush2.msra.mxu0 0.0
    %1670 = vmatprep.subr.mxu0 0.0
    %1671 = vmatpush2.msra.mxu0 0.0
    %1672 = vmatprep.subr.mxu0 0.0
    %1673 = vmatpush2.msra.mxu0 0.0
    %1674 = vmatprep.subr.mxu0 0.0
    %1675 = vmatpush2.msra.mxu0 0.0
    %1676 = vmatprep.subr.mxu0 0.0
    %1677 = vmatpush2.msra.mxu0 0.0
    %1678 = vmatprep.subr.mxu0 0.0
    %1679 = vmatpush2.msra.mxu0 0.0
    %1680 = vmatprep.subr.mxu0 0.0
    %1681 = vmatpush2.msra.mxu0 0.0
    %1682 = vmatprep.subr.mxu0 0.0
    %1683 = vmatpush2.msra.mxu0 0.0
    %1684 = vmatprep.mubr.f32.mxu0 0.0
    %1685 = vmatmul.mubr.f32.gmra.mxu0 %v1618
    %v1686 = vpop.f32.mrf.mxu0
    %v1687 = vadd.f32 %v971, %v1686
    %v1688 = vpop.f32.mrf.mxu0
    %v1689 = vadd.f32 %v975, %v1688
    %1690 = vdwg.mxu0
    %v1691 = vtanh.pop %v1687
    %v1692 = vtanh.pop %v1689
    %v1693 = vsel %vm736, %v1691, %v1687
    %v1694 = vsel %vm737, %v1692, %v1689
    %v1697 = vcombine.low %v1693, %v1694
    %v1699 = vunpack.c.l.s4 1966171168
    %v1700 = vunpack.c.0.s8 %v1699
    %v1701 = vlaneseq
    %v1702 = vshrl.u32 %v1701, 7
    %v1703 = vsub.s32 %v1700, %v1702
    %v1704 = vrot.slane %v1697, %v1703
    %v1705 = vcombine.high %v1704, %v1704
    %v1707 = vunpack.c.l.s4 1966171168
    %v1708 = vunpack.c.0.s8 %v1707
    %v1709 = vlaneseq
    %v1710 = vshrl.u32 %v1709, 7
    %v1711 = vsub.s32 %v1708, %v1710
    %v1712 = vrot.slane %v1704, %v1711
    %v1714 = vunpack.c.l.s4 1966171168
    %v1715 = vunpack.c.0.s8 %v1714
    %v1716 = vlaneseq
    %v1717 = vshrl.u32 %v1716, 7
    %v1718 = vsub.s32 %v1715, %v1717
    %v1719 = vrot.slane %v1705, %v1718
    %s1722 = scalar_lea.vmem [#allocation19], 2
    %1723 = vst.msk [vmem:[%s1722] ss:$8 sm:$0x3] %vm1086, %v1712
    %1724 = vst.msk [vmem:[%s1722] ss:$8 sm:$0x0] %vm1086, %v1712
    %s1725 = scalar_lea.vmem [#allocation19], 18
    %1726 = vst.msk [vmem:[%s1725] ss:$8 sm:$0x3] %vm1086, %v1719
    %1727 = vst.msk [vmem:[%s1725] ss:$8 sm:$0x0] %vm1086, %v1719
    %v1728 = vsel %vm292, %v1610, 0
    %1730 = vmatprep.subr.mxu0 0.0
    %1731 = vmatpush1.msra.mxu0 0.0
    %1732 = vmatprep.subr.mxu0 0.0
    %1733 = vmatpush1.msra.mxu0 0.0
    %1734 = vmatprep.subr.mxu0 0.0
    %1735 = vmatpush1.msra.mxu0 0.0
    %1736 = vmatprep.subr.mxu0 0.0
    %1737 = vmatpush1.msra.mxu0 0.0
    %1738 = vmatprep.subr.mxu0 0.0
    %1739 = vmatpush1.msra.mxu0 0.0
    %1740 = vmatprep.subr.mxu0 0.0
    %1741 = vmatpush1.msra.mxu0 0.0
    %1742 = vmatprep.subr.mxu0 0.0
    %1743 = vmatpush1.msra.mxu0 0.0
    %1744 = vmatprep.subr.mxu0 0.0
    %1745 = vmatpush1.msra.mxu0 0.0
    %1746 = vmatprep.subr.mxu0 0.0
    %1747 = vmatpush1.msra.mxu0 0.0
    %1748 = vmatprep.subr.mxu0 0.0
    %1749 = vmatpush1.msra.mxu0 0.0
    %1750 = vmatprep.subr.mxu0 0.0
    %1751 = vmatpush1.msra.mxu0 0.0
    %1752 = vmatprep.subr.mxu0 0.0
    %1753 = vmatpush1.msra.mxu0 0.0
    %1754 = vmatprep.subr.mxu0 0.0
    %1755 = vmatpush1.msra.mxu0 %v741
    %1756 = vmatprep.subr.mxu0 0.0
    %1757 = vmatpush1.msra.mxu0 %v740
    %1758 = vmatprep.subr.mxu0 0.0
    %1759 = vmatpush1.msra.mxu0 %v739
    %1760 = vmatprep.subr.mxu0 0.0
    %1761 = vmatpush1.msra.mxu0 %v738
    %1762 = vmatprep.subr.mxu0 0.0
    %1763 = vmatpush2.msra.mxu0 0.0
    %1764 = vmatprep.subr.mxu0 0.0
    %1765 = vmatpush2.msra.mxu0 0.0
    %1766 = vmatprep.subr.mxu0 0.0
    %1767 = vmatpush2.msra.mxu0 0.0
    %1768 = vmatprep.subr.mxu0 0.0
    %1769 = vmatpush2.msra.mxu0 0.0
    %1770 = vmatprep.subr.mxu0 0.0
    %1771 = vmatpush2.msra.mxu0 0.0
    %1772 = vmatprep.subr.mxu0 0.0
    %1773 = vmatpush2.msra.mxu0 0.0
    %1774 = vmatprep.subr.mxu0 0.0
    %1775 = vmatpush2.msra.mxu0 0.0
    %1776 = vmatprep.subr.mxu0 0.0
    %1777 = vmatpush2.msra.mxu0 0.0
    %1778 = vmatprep.subr.mxu0 0.0
    %1779 = vmatpush2.msra.mxu0 0.0
    %1780 = vmatprep.subr.mxu0 0.0
    %1781 = vmatpush2.msra.mxu0 0.0
    %1782 = vmatprep.subr.mxu0 0.0
    %1783 = vmatpush2.msra.mxu0 0.0
    %1784 = vmatprep.subr.mxu0 0.0
    %1785 = vmatpush2.msra.mxu0 0.0
    %1786 = vmatprep.subr.mxu0 0.0
    %1787 = vmatpush2.msra.mxu0 0.0
    %1788 = vmatprep.subr.mxu0 0.0
    %1789 = vmatpush2.msra.mxu0 0.0
    %1790 = vmatprep.subr.mxu0 0.0
    %1791 = vmatpush2.msra.mxu0 0.0
    %1792 = vmatprep.subr.mxu0 0.0
    %1793 = vmatpush2.msra.mxu0 0.0
    %1794 = vmatprep.mubr.f32.mxu0 0.0
    %1795 = vmatmul.mubr.f32.gmra.mxu0 %v1728
    %v1796 = vpop.f32.mrf.mxu0
    %v1797 = vadd.f32 0.0, %v1796
    %v1798 = vpop.f32.mrf.mxu0
    %1799 = vdwg.mxu0
    %v1800 = vadd.f32 %v640, %v1797
    %v1801 = vtanh.pop %v1800
    %v1802 = vxor.u32 %v1800, 2147483648
    %v1803 = vmul.f32 %v1802, 1.442695
    %v1804 = vpow.pop %v1803
    %v1805 = vadd.f32 %v1804, 1.0
    %v1806 = vrcp.pop %v1805
    %v1807 = vmul.f32 1.0, %v1806
    %v1808 = vsel %vm734, %v1801, %v1807
    %v1809 = vmul.f32 %v1808, %v1501
    %1811 = vrot.lane.b32.xlu0 %v1808, 64
    %v1812 = vpop.permute.xlu0 %1811
    %v1814 = vmul.f32 %v1808, %v1812
    %1816 = vrot.lane.b32.xlu0 %v1814, 32
    %v1817 = vpop.permute.xlu0 %1816
    %v1819 = vadd.f32 %v1809, %v1817
    %v1820 = vtanh.pop %v1819
    %1822 = vrot.lane.b32.xlu0 %v1820, 64
    %v1823 = vpop.permute.xlu0 %1822
    %v1825 = vmul.f32 %v1808, %v1823
    %1826 = vrot.lane.b32.xlu0 %v1607, 32
    %v1827 = vpop.permute.xlu0 %1826
    %v1828 = vsel %vm292, %v1827, 0
    %1830 = vmatprep.subr.mxu0 0.0
    %1831 = vmatpush1.msra.mxu0 0.0
    %1832 = vmatprep.subr.mxu0 0.0
    %1833 = vmatpush1.msra.mxu0 0.0
    %1834 = vmatprep.subr.mxu0 0.0
    %1835 = vmatpush1.msra.mxu0 0.0
    %1836 = vmatprep.subr.mxu0 0.0
    %1837 = vmatpush1.msra.mxu0 0.0
    %1838 = vmatprep.subr.mxu0 0.0
    %1839 = vmatpush1.msra.mxu0 0.0
    %1840 = vmatprep.subr.mxu0 0.0
    %1841 = vmatpush1.msra.mxu0 0.0
    %1842 = vmatprep.subr.mxu0 0.0
    %1843 = vmatpush1.msra.mxu0 0.0
    %1844 = vmatprep.subr.mxu0 0.0
    %1845 = vmatpush1.msra.mxu0 0.0
    %1846 = vmatprep.subr.mxu0 0.0
    %1847 = vmatpush1.msra.mxu0 0.0
    %1848 = vmatprep.subr.mxu0 0.0
    %1849 = vmatpush1.msra.mxu0 0.0
    %1850 = vmatprep.subr.mxu0 0.0
    %1851 = vmatpush1.msra.mxu0 0.0
    %1852 = vmatprep.subr.mxu0 0.0
    %1853 = vmatpush1.msra.mxu0 0.0
    %1854 = vmatprep.subr.mxu0 0.0
    %1855 = vmatpush1.msra.mxu0 %v745
    %1856 = vmatprep.subr.mxu0 0.0
    %1857 = vmatpush1.msra.mxu0 %v744
    %1858 = vmatprep.subr.mxu0 0.0
    %1859 = vmatpush1.msra.mxu0 %v743
    %1860 = vmatprep.subr.mxu0 0.0
    %1861 = vmatpush1.msra.mxu0 %v742
    %1862 = vmatprep.subr.mxu0 0.0
    %1863 = vmatpush2.msra.mxu0 0.0
    %1864 = vmatprep.subr.mxu0 0.0
    %1865 = vmatpush2.msra.mxu0 0.0
    %1866 = vmatprep.subr.mxu0 0.0
    %1867 = vmatpush2.msra.mxu0 0.0
    %1868 = vmatprep.subr.mxu0 0.0
    %1869 = vmatpush2.msra.mxu0 0.0
    %1870 = vmatprep.subr.mxu0 0.0
    %1871 = vmatpush2.msra.mxu0 0.0
    %1872 = vmatprep.subr.mxu0 0.0
    %1873 = vmatpush2.msra.mxu0 0.0
    %1874 = vmatprep.subr.mxu0 0.0
    %1875 = vmatpush2.msra.mxu0 0.0
    %1876 = vmatprep.subr.mxu0 0.0
    %1877 = vmatpush2.msra.mxu0 0.0
    %1878 = vmatprep.subr.mxu0 0.0
    %1879 = vmatpush2.msra.mxu0 0.0
    %1880 = vmatprep.subr.mxu0 0.0
    %1881 = vmatpush2.msra.mxu0 0.0
    %1882 = vmatprep.subr.mxu0 0.0
    %1883 = vmatpush2.msra.mxu0 0.0
    %1884 = vmatprep.subr.mxu0 0.0
    %1885 = vmatpush2.msra.mxu0 0.0
    %1886 = vmatprep.subr.mxu0 0.0
    %1887 = vmatpush2.msra.mxu0 0.0
    %1888 = vmatprep.subr.mxu0 0.0
    %1889 = vmatpush2.msra.mxu0 0.0
    %1890 = vmatprep.subr.mxu0 0.0
    %1891 = vmatpush2.msra.mxu0 0.0
    %1892 = vmatprep.subr.mxu0 0.0
    %1893 = vmatpush2.msra.mxu0 0.0
    %1894 = vmatprep.mubr.f32.mxu0 0.0
    %1895 = vmatmul.mubr.f32.gmra.mxu0 %v1828
    %v1896 = vpop.f32.mrf.mxu0
    %v1897 = vadd.f32 0.0, %v1896
    %v1898 = vpop.f32.mrf.mxu0
    %1899 = vdwg.mxu0
    %v1900 = vadd.f32 %v727, %v1897
    %v1901 = vtanh.pop %v1900
    %v1902 = vxor.u32 %v1900, 2147483648
    %v1903 = vmul.f32 %v1902, 1.442695
    %v1904 = vpow.pop %v1903
    %v1905 = vadd.f32 %v1904, 1.0
    %v1906 = vrcp.pop %v1905
    %v1907 = vmul.f32 1.0, %v1906
    %v1908 = vsel %vm734, %v1901, %v1907
    %v1909 = vmul.f32 %v1908, %v1601
    %1911 = vrot.lane.b32.xlu0 %v1908, 64
    %v1912 = vpop.permute.xlu0 %1911
    %v1914 = vmul.f32 %v1908, %v1912
    %1916 = vrot.lane.b32.xlu0 %v1914, 32
    %v1917 = vpop.permute.xlu0 %1916
    %v1919 = vadd.f32 %v1909, %v1917
    %v1920 = vtanh.pop %v1919
    %1922 = vrot.lane.b32.xlu0 %v1920, 64
    %v1923 = vpop.permute.xlu0 %1922
    %v1925 = vmul.f32 %v1908, %v1923
    %1927 = vrot.lane.b32.xlu0 %v1825, 32
    %v1928 = vpop.permute.xlu0 %1927
    %1931 = vrot.lane.b32.xlu0 %v1925, 64
    %v1932 = vpop.permute.xlu0 %1931
    %v1934 = vsel %vm292, %v1928, %v1932
    %v1936 = vsel %vm197, %v1934, 0
    %1938 = vmatprep.subr.mxu0 0.0
    %1939 = vmatpush1.msra.mxu0 0.0
    %1940 = vmatprep.subr.mxu0 0.0
    %1941 = vmatpush1.msra.mxu0 0.0
    %1942 = vmatprep.subr.mxu0 0.0
    %1943 = vmatpush1.msra.mxu0 0.0
    %1944 = vmatprep.subr.mxu0 0.0
    %1945 = vmatpush1.msra.mxu0 0.0
    %1946 = vmatprep.subr.mxu0 0.0
    %1947 = vmatpush1.msra.mxu0 0.0
    %1948 = vmatprep.subr.mxu0 0.0
    %1949 = vmatpush1.msra.mxu0 0.0
    %1950 = vmatprep.subr.mxu0 0.0
    %1951 = vmatpush1.msra.mxu0 0.0
    %1952 = vmatprep.subr.mxu0 0.0
    %1953 = vmatpush1.msra.mxu0 0.0
    %1954 = vmatprep.subr.mxu0 %v761
    %1955 = vmatpush1.msra.mxu0 %v760
    %1956 = vmatprep.subr.mxu0 %v759
    %1957 = vmatpush1.msra.mxu0 %v758
    %1958 = vmatprep.subr.mxu0 %v757
    %1959 = vmatpush1.msra.mxu0 %v756
    %1960 = vmatprep.subr.mxu0 %v755
    %1961 = vmatpush1.msra.mxu0 %v754
    %1962 = vmatprep.subr.mxu0 %v753
    %1963 = vmatpush1.msra.mxu0 %v752
    %1964 = vmatprep.subr.mxu0 %v751
    %1965 = vmatpush1.msra.mxu0 %v750
    %1966 = vmatprep.subr.mxu0 %v749
    %1967 = vmatpush1.msra.mxu0 %v748
    %1968 = vmatprep.subr.mxu0 %v747
    %1969 = vmatpush1.msra.mxu0 %v746
    %1970 = vmatprep.subr.mxu0 0.0
    %1971 = vmatpush2.msra.mxu0 0.0
    %1972 = vmatprep.subr.mxu0 0.0
    %1973 = vmatpush2.msra.mxu0 0.0
    %1974 = vmatprep.subr.mxu0 0.0
    %1975 = vmatpush2.msra.mxu0 0.0
    %1976 = vmatprep.subr.mxu0 0.0
    %1977 = vmatpush2.msra.mxu0 0.0
    %1978 = vmatprep.subr.mxu0 0.0
    %1979 = vmatpush2.msra.mxu0 0.0
    %1980 = vmatprep.subr.mxu0 0.0
    %1981 = vmatpush2.msra.mxu0 0.0
    %1982 = vmatprep.subr.mxu0 0.0
    %1983 = vmatpush2.msra.mxu0 0.0
    %1984 = vmatprep.subr.mxu0 0.0
    %1985 = vmatpush2.msra.mxu0 0.0
    %1986 = vmatprep.subr.mxu0 0.0
    %1987 = vmatpush2.msra.mxu0 0.0
    %1988 = vmatprep.subr.mxu0 0.0
    %1989 = vmatpush2.msra.mxu0 0.0
    %1990 = vmatprep.subr.mxu0 0.0
    %1991 = vmatpush2.msra.mxu0 0.0
    %1992 = vmatprep.subr.mxu0 0.0
    %1993 = vmatpush2.msra.mxu0 0.0
    %1994 = vmatprep.subr.mxu0 0.0
    %1995 = vmatpush2.msra.mxu0 0.0
    %1996 = vmatprep.subr.mxu0 0.0
    %1997 = vmatpush2.msra.mxu0 0.0
    %1998 = vmatprep.subr.mxu0 0.0
    %1999 = vmatpush2.msra.mxu0 0.0
    %2000 = vmatprep.subr.mxu0 0.0
    %2001 = vmatpush2.msra.mxu0 0.0
    %2002 = vmatprep.mubr.f32.mxu0 0.0
    %2003 = vmatmul.mubr.f32.gmra.mxu0 %v1936
    %v2004 = vpop.f32.mrf.mxu0
    %v2005 = vadd.f32 %v971, %v2004
    %v2006 = vpop.f32.mrf.mxu0
    %v2007 = vadd.f32 %v975, %v2006
    %2008 = vdwg.mxu0
    %v2009 = vtanh.pop %v2005
    %v2010 = vtanh.pop %v2007
    %v2011 = vsel %vm736, %v2009, %v2005
    %v2012 = vsel %vm737, %v2010, %v2007
    %v2015 = vcombine.low %v2011, %v2012
    %v2017 = vunpack.c.l.s4 1966171168
    %v2018 = vunpack.c.0.s8 %v2017
    %v2019 = vlaneseq
    %v2020 = vshrl.u32 %v2019, 7
    %v2021 = vsub.s32 %v2018, %v2020
    %v2022 = vrot.slane %v2015, %v2021
    %v2023 = vcombine.high %v2022, %v2022
    %v2025 = vunpack.c.l.s4 1966171168
    %v2026 = vunpack.c.0.s8 %v2025
    %v2027 = vlaneseq
    %v2028 = vshrl.u32 %v2027, 7
    %v2029 = vsub.s32 %v2026, %v2028
    %v2030 = vrot.slane %v2022, %v2029
    %v2032 = vunpack.c.l.s4 1966171168
    %v2033 = vunpack.c.0.s8 %v2032
    %v2034 = vlaneseq
    %v2035 = vshrl.u32 %v2034, 7
    %v2036 = vsub.s32 %v2033, %v2035
    %v2037 = vrot.slane %v2023, %v2036
    %s2040 = scalar_lea.vmem [#allocation19], 3
    %2041 = vst.msk [vmem:[%s2040] ss:$8 sm:$0x3] %vm1086, %v2030
    %2042 = vst.msk [vmem:[%s2040] ss:$8 sm:$0x0] %vm1086, %v2030
    %s2043 = scalar_lea.vmem [#allocation19], 19
    %2044 = vst.msk [vmem:[%s2043] ss:$8 sm:$0x3] %vm1086, %v2037
    %2045 = vst.msk [vmem:[%s2043] ss:$8 sm:$0x0] %vm1086, %v2037
    %v2046 = vsel %vm292, %v1928, 0
    %2048 = vmatprep.subr.mxu0 0.0
    %2049 = vmatpush1.msra.mxu0 0.0
    %2050 = vmatprep.subr.mxu0 0.0
    %2051 = vmatpush1.msra.mxu0 0.0
    %2052 = vmatprep.subr.mxu0 0.0
    %2053 = vmatpush1.msra.mxu0 0.0
    %2054 = vmatprep.subr.mxu0 0.0
    %2055 = vmatpush1.msra.mxu0 0.0
    %2056 = vmatprep.subr.mxu0 0.0
    %2057 = vmatpush1.msra.mxu0 0.0
    %2058 = vmatprep.subr.mxu0 0.0
    %2059 = vmatpush1.msra.mxu0 0.0
    %2060 = vmatprep.subr.mxu0 0.0
    %2061 = vmatpush1.msra.mxu0 0.0
    %2062 = vmatprep.subr.mxu0 0.0
    %2063 = vmatpush1.msra.mxu0 0.0
    %2064 = vmatprep.subr.mxu0 0.0
    %2065 = vmatpush1.msra.mxu0 0.0
    %2066 = vmatprep.subr.mxu0 0.0
    %2067 = vmatpush1.msra.mxu0 0.0
    %2068 = vmatprep.subr.mxu0 0.0
    %2069 = vmatpush1.msra.mxu0 0.0
    %2070 = vmatprep.subr.mxu0 0.0
    %2071 = vmatpush1.msra.mxu0 0.0
    %2072 = vmatprep.subr.mxu0 0.0
    %2073 = vmatpush1.msra.mxu0 %v741
    %2074 = vmatprep.subr.mxu0 0.0
    %2075 = vmatpush1.msra.mxu0 %v740
    %2076 = vmatprep.subr.mxu0 0.0
    %2077 = vmatpush1.msra.mxu0 %v739
    %2078 = vmatprep.subr.mxu0 0.0
    %2079 = vmatpush1.msra.mxu0 %v738
    %2080 = vmatprep.subr.mxu0 0.0
    %2081 = vmatpush2.msra.mxu0 0.0
    %2082 = vmatprep.subr.mxu0 0.0
    %2083 = vmatpush2.msra.mxu0 0.0
    %2084 = vmatprep.subr.mxu0 0.0
    %2085 = vmatpush2.msra.mxu0 0.0
    %2086 = vmatprep.subr.mxu0 0.0
    %2087 = vmatpush2.msra.mxu0 0.0
    %2088 = vmatprep.subr.mxu0 0.0
    %2089 = vmatpush2.msra.mxu0 0.0
    %2090 = vmatprep.subr.mxu0 0.0
    %2091 = vmatpush2.msra.mxu0 0.0
    %2092 = vmatprep.subr.mxu0 0.0
    %2093 = vmatpush2.msra.mxu0 0.0
    %2094 = vmatprep.subr.mxu0 0.0
    %2095 = vmatpush2.msra.mxu0 0.0
    %2096 = vmatprep.subr.mxu0 0.0
    %2097 = vmatpush2.msra.mxu0 0.0
    %2098 = vmatprep.subr.mxu0 0.0
    %2099 = vmatpush2.msra.mxu0 0.0
    %2100 = vmatprep.subr.mxu0 0.0
    %2101 = vmatpush2.msra.mxu0 0.0
    %2102 = vmatprep.subr.mxu0 0.0
    %2103 = vmatpush2.msra.mxu0 0.0
    %2104 = vmatprep.subr.mxu0 0.0
    %2105 = vmatpush2.msra.mxu0 0.0
    %2106 = vmatprep.subr.mxu0 0.0
    %2107 = vmatpush2.msra.mxu0 0.0
    %2108 = vmatprep.subr.mxu0 0.0
    %2109 = vmatpush2.msra.mxu0 0.0
    %2110 = vmatprep.subr.mxu0 0.0
    %2111 = vmatpush2.msra.mxu0 0.0
    %2112 = vmatprep.mubr.f32.mxu0 0.0
    %2113 = vmatmul.mubr.f32.gmra.mxu0 %v2046
    %v2114 = vpop.f32.mrf.mxu0
    %v2115 = vadd.f32 0.0, %v2114
    %v2116 = vpop.f32.mrf.mxu0
    %2117 = vdwg.mxu0
    %v2118 = vadd.f32 %v640, %v2115
    %v2119 = vtanh.pop %v2118
    %v2120 = vxor.u32 %v2118, 2147483648
    %v2121 = vmul.f32 %v2120, 1.442695
    %v2122 = vpow.pop %v2121
    %v2123 = vadd.f32 %v2122, 1.0
    %v2124 = vrcp.pop %v2123
    %v2125 = vmul.f32 1.0, %v2124
    %v2126 = vsel %vm734, %v2119, %v2125
    %v2127 = vmul.f32 %v2126, %v1819
    %2129 = vrot.lane.b32.xlu0 %v2126, 64
    %v2130 = vpop.permute.xlu0 %2129
    %v2132 = vmul.f32 %v2126, %v2130
    %2134 = vrot.lane.b32.xlu0 %v2132, 32
    %v2135 = vpop.permute.xlu0 %2134
    %v2137 = vadd.f32 %v2127, %v2135
    %v2138 = vtanh.pop %v2137
    %2140 = vrot.lane.b32.xlu0 %v2138, 64
    %v2141 = vpop.permute.xlu0 %2140
    %v2143 = vmul.f32 %v2126, %v2141
    %2144 = vrot.lane.b32.xlu0 %v1925, 32
    %v2145 = vpop.permute.xlu0 %2144
    %v2146 = vsel %vm292, %v2145, 0
    %2148 = vmatprep.subr.mxu0 0.0
    %2149 = vmatpush1.msra.mxu0 0.0
    %2150 = vmatprep.subr.mxu0 0.0
    %2151 = vmatpush1.msra.mxu0 0.0
    %2152 = vmatprep.subr.mxu0 0.0
    %2153 = vmatpush1.msra.mxu0 0.0
    %2154 = vmatprep.subr.mxu0 0.0
    %2155 = vmatpush1.msra.mxu0 0.0
    %2156 = vmatprep.subr.mxu0 0.0
    %2157 = vmatpush1.msra.mxu0 0.0
    %2158 = vmatprep.subr.mxu0 0.0
    %2159 = vmatpush1.msra.mxu0 0.0
    %2160 = vmatprep.subr.mxu0 0.0
    %2161 = vmatpush1.msra.mxu0 0.0
    %2162 = vmatprep.subr.mxu0 0.0
    %2163 = vmatpush1.msra.mxu0 0.0
    %2164 = vmatprep.subr.mxu0 0.0
    %2165 = vmatpush1.msra.mxu0 0.0
    %2166 = vmatprep.subr.mxu0 0.0
    %2167 = vmatpush1.msra.mxu0 0.0
    %2168 = vmatprep.subr.mxu0 0.0
    %2169 = vmatpush1.msra.mxu0 0.0
    %2170 = vmatprep.subr.mxu0 0.0
    %2171 = vmatpush1.msra.mxu0 0.0
    %2172 = vmatprep.subr.mxu0 0.0
    %2173 = vmatpush1.msra.mxu0 %v745
    %2174 = vmatprep.subr.mxu0 0.0
    %2175 = vmatpush1.msra.mxu0 %v744
    %2176 = vmatprep.subr.mxu0 0.0
    %2177 = vmatpush1.msra.mxu0 %v743
    %2178 = vmatprep.subr.mxu0 0.0
    %2179 = vmatpush1.msra.mxu0 %v742
    %2180 = vmatprep.subr.mxu0 0.0
    %2181 = vmatpush2.msra.mxu0 0.0
    %2182 = vmatprep.subr.mxu0 0.0
    %2183 = vmatpush2.msra.mxu0 0.0
    %2184 = vmatprep.subr.mxu0 0.0
    %2185 = vmatpush2.msra.mxu0 0.0
    %2186 = vmatprep.subr.mxu0 0.0
    %2187 = vmatpush2.msra.mxu0 0.0
    %2188 = vmatprep.subr.mxu0 0.0
    %2189 = vmatpush2.msra.mxu0 0.0
    %2190 = vmatprep.subr.mxu0 0.0
    %2191 = vmatpush2.msra.mxu0 0.0
    %2192 = vmatprep.subr.mxu0 0.0
    %2193 = vmatpush2.msra.mxu0 0.0
    %2194 = vmatprep.subr.mxu0 0.0
    %2195 = vmatpush2.msra.mxu0 0.0
    %2196 = vmatprep.subr.mxu0 0.0
    %2197 = vmatpush2.msra.mxu0 0.0
    %2198 = vmatprep.subr.mxu0 0.0
    %2199 = vmatpush2.msra.mxu0 0.0
    %2200 = vmatprep.subr.mxu0 0.0
    %2201 = vmatpush2.msra.mxu0 0.0
    %2202 = vmatprep.subr.mxu0 0.0
    %2203 = vmatpush2.msra.mxu0 0.0
    %2204 = vmatprep.subr.mxu0 0.0
    %2205 = vmatpush2.msra.mxu0 0.0
    %2206 = vmatprep.subr.mxu0 0.0
    %2207 = vmatpush2.msra.mxu0 0.0
    %2208 = vmatprep.subr.mxu0 0.0
    %2209 = vmatpush2.msra.mxu0 0.0
    %2210 = vmatprep.subr.mxu0 0.0
    %2211 = vmatpush2.msra.mxu0 0.0
    %2212 = vmatprep.mubr.f32.mxu0 0.0
    %2213 = vmatmul.mubr.f32.gmra.mxu0 %v2146
    %v2214 = vpop.f32.mrf.mxu0
    %v2215 = vadd.f32 0.0, %v2214
    %v2216 = vpop.f32.mrf.mxu0
    %2217 = vdwg.mxu0
    %v2218 = vadd.f32 %v727, %v2215
    %v2219 = vtanh.pop %v2218
    %v2220 = vxor.u32 %v2218, 2147483648
    %v2221 = vmul.f32 %v2220, 1.442695
    %v2222 = vpow.pop %v2221
    %v2223 = vadd.f32 %v2222, 1.0
    %v2224 = vrcp.pop %v2223
    %v2225 = vmul.f32 1.0, %v2224
    %v2226 = vsel %vm734, %v2219, %v2225
    %v2227 = vmul.f32 %v2226, %v1919
    %2229 = vrot.lane.b32.xlu0 %v2226, 64
    %v2230 = vpop.permute.xlu0 %2229
    %v2232 = vmul.f32 %v2226, %v2230
    %2234 = vrot.lane.b32.xlu0 %v2232, 32
    %v2235 = vpop.permute.xlu0 %2234
    %v2237 = vadd.f32 %v2227, %v2235
    %v2238 = vtanh.pop %v2237
    %2240 = vrot.lane.b32.xlu0 %v2238, 64
    %v2241 = vpop.permute.xlu0 %2240
    %v2243 = vmul.f32 %v2226, %v2241
    %2245 = vrot.lane.b32.xlu0 %v2143, 32
    %v2246 = vpop.permute.xlu0 %2245
    %2249 = vrot.lane.b32.xlu0 %v2243, 64
    %v2250 = vpop.permute.xlu0 %2249
    %v2252 = vsel %vm292, %v2246, %v2250
    %v2254 = vsel %vm197, %v2252, 0
    %2256 = vmatprep.subr.mxu0 0.0
    %2257 = vmatpush1.msra.mxu0 0.0
    %2258 = vmatprep.subr.mxu0 0.0
    %2259 = vmatpush1.msra.mxu0 0.0
    %2260 = vmatprep.subr.mxu0 0.0
    %2261 = vmatpush1.msra.mxu0 0.0
    %2262 = vmatprep.subr.mxu0 0.0
    %2263 = vmatpush1.msra.mxu0 0.0
    %2264 = vmatprep.subr.mxu0 0.0
    %2265 = vmatpush1.msra.mxu0 0.0
    %2266 = vmatprep.subr.mxu0 0.0
    %2267 = vmatpush1.msra.mxu0 0.0
    %2268 = vmatprep.subr.mxu0 0.0
    %2269 = vmatpush1.msra.mxu0 0.0
    %2270 = vmatprep.subr.mxu0 0.0
    %2271 = vmatpush1.msra.mxu0 0.0
    %2272 = vmatprep.subr.mxu0 %v761
    %2273 = vmatpush1.msra.mxu0 %v760
    %2274 = vmatprep.subr.mxu0 %v759
    %2275 = vmatpush1.msra.mxu0 %v758
    %2276 = vmatprep.subr.mxu0 %v757
    %2277 = vmatpush1.msra.mxu0 %v756
    %2278 = vmatprep.subr.mxu0 %v755
    %2279 = vmatpush1.msra.mxu0 %v754
    %2280 = vmatprep.subr.mxu0 %v753
    %2281 = vmatpush1.msra.mxu0 %v752
    %2282 = vmatprep.subr.mxu0 %v751
    %2283 = vmatpush1.msra.mxu0 %v750
    %2284 = vmatprep.subr.mxu0 %v749
    %2285 = vmatpush1.msra.mxu0 %v748
    %2286 = vmatprep.subr.mxu0 %v747
    %2287 = vmatpush1.msra.mxu0 %v746
    %2288 = vmatprep.subr.mxu0 0.0
    %2289 = vmatpush2.msra.mxu0 0.0
    %2290 = vmatprep.subr.mxu0 0.0
    %2291 = vmatpush2.msra.mxu0 0.0
    %2292 = vmatprep.subr.mxu0 0.0
    %2293 = vmatpush2.msra.mxu0 0.0
    %2294 = vmatprep.subr.mxu0 0.0
    %2295 = vmatpush2.msra.mxu0 0.0
    %2296 = vmatprep.subr.mxu0 0.0
    %2297 = vmatpush2.msra.mxu0 0.0
    %2298 = vmatprep.subr.mxu0 0.0
    %2299 = vmatpush2.msra.mxu0 0.0
    %2300 = vmatprep.subr.mxu0 0.0
    %2301 = vmatpush2.msra.mxu0 0.0
    %2302 = vmatprep.subr.mxu0 0.0
    %2303 = vmatpush2.msra.mxu0 0.0
    %2304 = vmatprep.subr.mxu0 0.0
    %2305 = vmatpush2.msra.mxu0 0.0
    %2306 = vmatprep.subr.mxu0 0.0
    %2307 = vmatpush2.msra.mxu0 0.0
    %2308 = vmatprep.subr.mxu0 0.0
    %2309 = vmatpush2.msra.mxu0 0.0
    %2310 = vmatprep.subr.mxu0 0.0
    %2311 = vmatpush2.msra.mxu0 0.0
    %2312 = vmatprep.subr.mxu0 0.0
    %2313 = vmatpush2.msra.mxu0 0.0
    %2314 = vmatprep.subr.mxu0 0.0
    %2315 = vmatpush2.msra.mxu0 0.0
    %2316 = vmatprep.subr.mxu0 0.0
    %2317 = vmatpush2.msra.mxu0 0.0
    %2318 = vmatprep.subr.mxu0 0.0
    %2319 = vmatpush2.msra.mxu0 0.0
    %2320 = vmatprep.mubr.f32.mxu0 0.0
    %2321 = vmatmul.mubr.f32.gmra.mxu0 %v2254
    %v2322 = vpop.f32.mrf.mxu0
    %v2323 = vadd.f32 %v971, %v2322
    %v2324 = vpop.f32.mrf.mxu0
    %v2325 = vadd.f32 %v975, %v2324
    %2326 = vdwg.mxu0
    %v2327 = vtanh.pop %v2323
    %v2328 = vtanh.pop %v2325
    %v2329 = vsel %vm736, %v2327, %v2323
    %v2330 = vsel %vm737, %v2328, %v2325
    %v2333 = vcombine.low %v2329, %v2330
    %v2335 = vunpack.c.l.s4 1966171168
    %v2336 = vunpack.c.0.s8 %v2335
    %v2337 = vlaneseq
    %v2338 = vshrl.u32 %v2337, 7
    %v2339 = vsub.s32 %v2336, %v2338
    %v2340 = vrot.slane %v2333, %v2339
    %v2341 = vcombine.high %v2340, %v2340
    %v2343 = vunpack.c.l.s4 1966171168
    %v2344 = vunpack.c.0.s8 %v2343
    %v2345 = vlaneseq
    %v2346 = vshrl.u32 %v2345, 7
    %v2347 = vsub.s32 %v2344, %v2346
    %v2348 = vrot.slane %v2340, %v2347
    %v2350 = vunpack.c.l.s4 1966171168
    %v2351 = vunpack.c.0.s8 %v2350
    %v2352 = vlaneseq
    %v2353 = vshrl.u32 %v2352, 7
    %v2354 = vsub.s32 %v2351, %v2353
    %v2355 = vrot.slane %v2341, %v2354
    %s2358 = scalar_lea.vmem [#allocation19], 4
    %2359 = vst.msk [vmem:[%s2358] ss:$8 sm:$0x3] %vm1086, %v2348
    %2360 = vst.msk [vmem:[%s2358] ss:$8 sm:$0x0] %vm1086, %v2348
    %s2361 = scalar_lea.vmem [#allocation19], 20
    %2362 = vst.msk [vmem:[%s2361] ss:$8 sm:$0x3] %vm1086, %v2355
    %2363 = vst.msk [vmem:[%s2361] ss:$8 sm:$0x0] %vm1086, %v2355
    %v2364 = vsel %vm292, %v2246, 0
    %2366 = vmatprep.subr.mxu0 0.0
    %2367 = vmatpush1.msra.mxu0 0.0
    %2368 = vmatprep.subr.mxu0 0.0
    %2369 = vmatpush1.msra.mxu0 0.0
    %2370 = vmatprep.subr.mxu0 0.0
    %2371 = vmatpush1.msra.mxu0 0.0
    %2372 = vmatprep.subr.mxu0 0.0
    %2373 = vmatpush1.msra.mxu0 0.0
    %2374 = vmatprep.subr.mxu0 0.0
    %2375 = vmatpush1.msra.mxu0 0.0
    %2376 = vmatprep.subr.mxu0 0.0
    %2377 = vmatpush1.msra.mxu0 0.0
    %2378 = vmatprep.subr.mxu0 0.0
    %2379 = vmatpush1.msra.mxu0 0.0
    %2380 = vmatprep.subr.mxu0 0.0
    %2381 = vmatpush1.msra.mxu0 0.0
    %2382 = vmatprep.subr.mxu0 0.0
    %2383 = vmatpush1.msra.mxu0 0.0
    %2384 = vmatprep.subr.mxu0 0.0
    %2385 = vmatpush1.msra.mxu0 0.0
    %2386 = vmatprep.subr.mxu0 0.0
    %2387 = vmatpush1.msra.mxu0 0.0
    %2388 = vmatprep.subr.mxu0 0.0
    %2389 = vmatpush1.msra.mxu0 0.0
    %2390 = vmatprep.subr.mxu0 0.0
    %2391 = vmatpush1.msra.mxu0 %v741
    %2392 = vmatprep.subr.mxu0 0.0
    %2393 = vmatpush1.msra.mxu0 %v740
    %2394 = vmatprep.subr.mxu0 0.0
    %2395 = vmatpush1.msra.mxu0 %v739
    %2396 = vmatprep.subr.mxu0 0.0
    %2397 = vmatpush1.msra.mxu0 %v738
    %2398 = vmatprep.subr.mxu0 0.0
    %2399 = vmatpush2.msra.mxu0 0.0
    %2400 = vmatprep.subr.mxu0 0.0
    %2401 = vmatpush2.msra.mxu0 0.0
    %2402 = vmatprep.subr.mxu0 0.0
    %2403 = vmatpush2.msra.mxu0 0.0
    %2404 = vmatprep.subr.mxu0 0.0
    %2405 = vmatpush2.msra.mxu0 0.0
    %2406 = vmatprep.subr.mxu0 0.0
    %2407 = vmatpush2.msra.mxu0 0.0
    %2408 = vmatprep.subr.mxu0 0.0
    %2409 = vmatpush2.msra.mxu0 0.0
    %2410 = vmatprep.subr.mxu0 0.0
    %2411 = vmatpush2.msra.mxu0 0.0
    %2412 = vmatprep.subr.mxu0 0.0
    %2413 = vmatpush2.msra.mxu0 0.0
    %2414 = vmatprep.subr.mxu0 0.0
    %2415 = vmatpush2.msra.mxu0 0.0
    %2416 = vmatprep.subr.mxu0 0.0
    %2417 = vmatpush2.msra.mxu0 0.0
    %2418 = vmatprep.subr.mxu0 0.0
    %2419 = vmatpush2.msra.mxu0 0.0
    %2420 = vmatprep.subr.mxu0 0.0
    %2421 = vmatpush2.msra.mxu0 0.0
    %2422 = vmatprep.subr.mxu0 0.0
    %2423 = vmatpush2.msra.mxu0 0.0
    %2424 = vmatprep.subr.mxu0 0.0
    %2425 = vmatpush2.msra.mxu0 0.0
    %2426 = vmatprep.subr.mxu0 0.0
    %2427 = vmatpush2.msra.mxu0 0.0
    %2428 = vmatprep.subr.mxu0 0.0
    %2429 = vmatpush2.msra.mxu0 0.0
    %2430 = vmatprep.mubr.f32.mxu0 0.0
    %2431 = vmatmul.mubr.f32.gmra.mxu0 %v2364
    %v2432 = vpop.f32.mrf.mxu0
    %v2433 = vadd.f32 0.0, %v2432
    %v2434 = vpop.f32.mrf.mxu0
    %2435 = vdwg.mxu0
    %v2436 = vadd.f32 %v640, %v2433
    %v2437 = vtanh.pop %v2436
    %v2438 = vxor.u32 %v2436, 2147483648
    %v2439 = vmul.f32 %v2438, 1.442695
    %v2440 = vpow.pop %v2439
    %v2441 = vadd.f32 %v2440, 1.0
    %v2442 = vrcp.pop %v2441
    %v2443 = vmul.f32 1.0, %v2442
    %v2444 = vsel %vm734, %v2437, %v2443
    %v2445 = vmul.f32 %v2444, %v2137
    %2447 = vrot.lane.b32.xlu0 %v2444, 64
    %v2448 = vpop.permute.xlu0 %2447
    %v2450 = vmul.f32 %v2444, %v2448
    %2452 = vrot.lane.b32.xlu0 %v2450, 32
    %v2453 = vpop.permute.xlu0 %2452
    %v2455 = vadd.f32 %v2445, %v2453
    %v2456 = vtanh.pop %v2455
    %2458 = vrot.lane.b32.xlu0 %v2456, 64
    %v2459 = vpop.permute.xlu0 %2458
    %v2461 = vmul.f32 %v2444, %v2459
    %2462 = vrot.lane.b32.xlu0 %v2243, 32
    %v2463 = vpop.permute.xlu0 %2462
    %v2464 = vsel %vm292, %v2463, 0
    %2466 = vmatprep.subr.mxu0 0.0
    %2467 = vmatpush1.msra.mxu0 0.0
    %2468 = vmatprep.subr.mxu0 0.0
    %2469 = vmatpush1.msra.mxu0 0.0
    %2470 = vmatprep.subr.mxu0 0.0
    %2471 = vmatpush1.msra.mxu0 0.0
    %2472 = vmatprep.subr.mxu0 0.0
    %2473 = vmatpush1.msra.mxu0 0.0
    %2474 = vmatprep.subr.mxu0 0.0
    %2475 = vmatpush1.msra.mxu0 0.0
    %2476 = vmatprep.subr.mxu0 0.0
    %2477 = vmatpush1.msra.mxu0 0.0
    %2478 = vmatprep.subr.mxu0 0.0
    %2479 = vmatpush1.msra.mxu0 0.0
    %2480 = vmatprep.subr.mxu0 0.0
    %2481 = vmatpush1.msra.mxu0 0.0
    %2482 = vmatprep.subr.mxu0 0.0
    %2483 = vmatpush1.msra.mxu0 0.0
    %2484 = vmatprep.subr.mxu0 0.0
    %2485 = vmatpush1.msra.mxu0 0.0
    %2486 = vmatprep.subr.mxu0 0.0
    %2487 = vmatpush1.msra.mxu0 0.0
    %2488 = vmatprep.subr.mxu0 0.0
    %2489 = vmatpush1.msra.mxu0 0.0
    %2490 = vmatprep.subr.mxu0 0.0
    %2491 = vmatpush1.msra.mxu0 %v745
    %2492 = vmatprep.subr.mxu0 0.0
    %2493 = vmatpush1.msra.mxu0 %v744
    %2494 = vmatprep.subr.mxu0 0.0
    %2495 = vmatpush1.msra.mxu0 %v743
    %2496 = vmatprep.subr.mxu0 0.0
    %2497 = vmatpush1.msra.mxu0 %v742
    %2498 = vmatprep.subr.mxu0 0.0
    %2499 = vmatpush2.msra.mxu0 0.0
    %2500 = vmatprep.subr.mxu0 0.0
    %2501 = vmatpush2.msra.mxu0 0.0
    %2502 = vmatprep.subr.mxu0 0.0
    %2503 = vmatpush2.msra.mxu0 0.0
    %2504 = vmatprep.subr.mxu0 0.0
    %2505 = vmatpush2.msra.mxu0 0.0
    %2506 = vmatprep.subr.mxu0 0.0
    %2507 = vmatpush2.msra.mxu0 0.0
    %2508 = vmatprep.subr.mxu0 0.0
    %2509 = vmatpush2.msra.mxu0 0.0
    %2510 = vmatprep.subr.mxu0 0.0
    %2511 = vmatpush2.msra.mxu0 0.0
    %2512 = vmatprep.subr.mxu0 0.0
    %2513 = vmatpush2.msra.mxu0 0.0
    %2514 = vmatprep.subr.mxu0 0.0
    %2515 = vmatpush2.msra.mxu0 0.0
    %2516 = vmatprep.subr.mxu0 0.0
    %2517 = vmatpush2.msra.mxu0 0.0
    %2518 = vmatprep.subr.mxu0 0.0
    %2519 = vmatpush2.msra.mxu0 0.0
    %2520 = vmatprep.subr.mxu0 0.0
    %2521 = vmatpush2.msra.mxu0 0.0
    %2522 = vmatprep.subr.mxu0 0.0
    %2523 = vmatpush2.msra.mxu0 0.0
    %2524 = vmatprep.subr.mxu0 0.0
    %2525 = vmatpush2.msra.mxu0 0.0
    %2526 = vmatprep.subr.mxu0 0.0
    %2527 = vmatpush2.msra.mxu0 0.0
    %2528 = vmatprep.subr.mxu0 0.0
    %2529 = vmatpush2.msra.mxu0 0.0
    %2530 = vmatprep.mubr.f32.mxu0 0.0
    %2531 = vmatmul.mubr.f32.gmra.mxu0 %v2464
    %v2532 = vpop.f32.mrf.mxu0
    %v2533 = vadd.f32 0.0, %v2532
    %v2534 = vpop.f32.mrf.mxu0
    %2535 = vdwg.mxu0
    %v2536 = vadd.f32 %v727, %v2533
    %v2537 = vtanh.pop %v2536
    %v2538 = vxor.u32 %v2536, 2147483648
    %v2539 = vmul.f32 %v2538, 1.442695
    %v2540 = vpow.pop %v2539
    %v2541 = vadd.f32 %v2540, 1.0
    %v2542 = vrcp.pop %v2541
    %v2543 = vmul.f32 1.0, %v2542
    %v2544 = vsel %vm734, %v2537, %v2543
    %v2545 = vmul.f32 %v2544, %v2237
    %2547 = vrot.lane.b32.xlu0 %v2544, 64
    %v2548 = vpop.permute.xlu0 %2547
    %v2550 = vmul.f32 %v2544, %v2548
    %2552 = vrot.lane.b32.xlu0 %v2550, 32
    %v2553 = vpop.permute.xlu0 %2552
    %v2555 = vadd.f32 %v2545, %v2553
    %v2556 = vtanh.pop %v2555
    %2558 = vrot.lane.b32.xlu0 %v2556, 64
    %v2559 = vpop.permute.xlu0 %2558
    %v2561 = vmul.f32 %v2544, %v2559
    %2563 = vrot.lane.b32.xlu0 %v2461, 32
    %v2564 = vpop.permute.xlu0 %2563
    %2567 = vrot.lane.b32.xlu0 %v2561, 64
    %v2568 = vpop.permute.xlu0 %2567
    %v2570 = vsel %vm292, %v2564, %v2568
    %v2572 = vsel %vm197, %v2570, 0
    %2574 = vmatprep.subr.mxu0 0.0
    %2575 = vmatpush1.msra.mxu0 0.0
    %2576 = vmatprep.subr.mxu0 0.0
    %2577 = vmatpush1.msra.mxu0 0.0
    %2578 = vmatprep.subr.mxu0 0.0
    %2579 = vmatpush1.msra.mxu0 0.0
    %2580 = vmatprep.subr.mxu0 0.0
    %2581 = vmatpush1.msra.mxu0 0.0
    %2582 = vmatprep.subr.mxu0 0.0
    %2583 = vmatpush1.msra.mxu0 0.0
    %2584 = vmatprep.subr.mxu0 0.0
    %2585 = vmatpush1.msra.mxu0 0.0
    %2586 = vmatprep.subr.mxu0 0.0
    %2587 = vmatpush1.msra.mxu0 0.0
    %2588 = vmatprep.subr.mxu0 0.0
    %2589 = vmatpush1.msra.mxu0 0.0
    %2590 = vmatprep.subr.mxu0 %v761
    %2591 = vmatpush1.msra.mxu0 %v760
    %2592 = vmatprep.subr.mxu0 %v759
    %2593 = vmatpush1.msra.mxu0 %v758
    %2594 = vmatprep.subr.mxu0 %v757
    %2595 = vmatpush1.msra.mxu0 %v756
    %2596 = vmatprep.subr.mxu0 %v755
    %2597 = vmatpush1.msra.mxu0 %v754
    %2598 = vmatprep.subr.mxu0 %v753
    %2599 = vmatpush1.msra.mxu0 %v752
    %2600 = vmatprep.subr.mxu0 %v751
    %2601 = vmatpush1.msra.mxu0 %v750
    %2602 = vmatprep.subr.mxu0 %v749
    %2603 = vmatpush1.msra.mxu0 %v748
    %2604 = vmatprep.subr.mxu0 %v747
    %2605 = vmatpush1.msra.mxu0 %v746
    %2606 = vmatprep.subr.mxu0 0.0
    %2607 = vmatpush2.msra.mxu0 0.0
    %2608 = vmatprep.subr.mxu0 0.0
    %2609 = vmatpush2.msra.mxu0 0.0
    %2610 = vmatprep.subr.mxu0 0.0
    %2611 = vmatpush2.msra.mxu0 0.0
    %2612 = vmatprep.subr.mxu0 0.0
    %2613 = vmatpush2.msra.mxu0 0.0
    %2614 = vmatprep.subr.mxu0 0.0
    %2615 = vmatpush2.msra.mxu0 0.0
    %2616 = vmatprep.subr.mxu0 0.0
    %2617 = vmatpush2.msra.mxu0 0.0
    %2618 = vmatprep.subr.mxu0 0.0
    %2619 = vmatpush2.msra.mxu0 0.0
    %2620 = vmatprep.subr.mxu0 0.0
    %2621 = vmatpush2.msra.mxu0 0.0
    %2622 = vmatprep.subr.mxu0 0.0
    %2623 = vmatpush2.msra.mxu0 0.0
    %2624 = vmatprep.subr.mxu0 0.0
    %2625 = vmatpush2.msra.mxu0 0.0
    %2626 = vmatprep.subr.mxu0 0.0
    %2627 = vmatpush2.msra.mxu0 0.0
    %2628 = vmatprep.subr.mxu0 0.0
    %2629 = vmatpush2.msra.mxu0 0.0
    %2630 = vmatprep.subr.mxu0 0.0
    %2631 = vmatpush2.msra.mxu0 0.0
    %2632 = vmatprep.subr.mxu0 0.0
    %2633 = vmatpush2.msra.mxu0 0.0
    %2634 = vmatprep.subr.mxu0 0.0
    %2635 = vmatpush2.msra.mxu0 0.0
    %2636 = vmatprep.subr.mxu0 0.0
    %2637 = vmatpush2.msra.mxu0 0.0
    %2638 = vmatprep.mubr.f32.mxu0 0.0
    %2639 = vmatmul.mubr.f32.gmra.mxu0 %v2572
    %v2640 = vpop.f32.mrf.mxu0
    %v2641 = vadd.f32 %v971, %v2640
    %v2642 = vpop.f32.mrf.mxu0
    %v2643 = vadd.f32 %v975, %v2642
    %2644 = vdwg.mxu0
    %v2645 = vtanh.pop %v2641
    %v2646 = vtanh.pop %v2643
    %v2647 = vsel %vm736, %v2645, %v2641
    %v2648 = vsel %vm737, %v2646, %v2643
    %v2651 = vcombine.low %v2647, %v2648
    %v2653 = vunpack.c.l.s4 1966171168
    %v2654 = vunpack.c.0.s8 %v2653
    %v2655 = vlaneseq
    %v2656 = vshrl.u32 %v2655, 7
    %v2657 = vsub.s32 %v2654, %v2656
    %v2658 = vrot.slane %v2651, %v2657
    %v2659 = vcombine.high %v2658, %v2658
    %v2661 = vunpack.c.l.s4 1966171168
    %v2662 = vunpack.c.0.s8 %v2661
    %v2663 = vlaneseq
    %v2664 = vshrl.u32 %v2663, 7
    %v2665 = vsub.s32 %v2662, %v2664
    %v2666 = vrot.slane %v2658, %v2665
    %v2668 = vunpack.c.l.s4 1966171168
    %v2669 = vunpack.c.0.s8 %v2668
    %v2670 = vlaneseq
    %v2671 = vshrl.u32 %v2670, 7
    %v2672 = vsub.s32 %v2669, %v2671
    %v2673 = vrot.slane %v2659, %v2672
    %s2676 = scalar_lea.vmem [#allocation19], 5
    %2677 = vst.msk [vmem:[%s2676] ss:$8 sm:$0x3] %vm1086, %v2666
    %2678 = vst.msk [vmem:[%s2676] ss:$8 sm:$0x0] %vm1086, %v2666
    %s2679 = scalar_lea.vmem [#allocation19], 21
    %2680 = vst.msk [vmem:[%s2679] ss:$8 sm:$0x3] %vm1086, %v2673
    %2681 = vst.msk [vmem:[%s2679] ss:$8 sm:$0x0] %vm1086, %v2673
    %v2682 = vsel %vm292, %v2564, 0
    %2684 = vmatprep.subr.mxu0 0.0
    %2685 = vmatpush1.msra.mxu0 0.0
    %2686 = vmatprep.subr.mxu0 0.0
    %2687 = vmatpush1.msra.mxu0 0.0
    %2688 = vmatprep.subr.mxu0 0.0
    %2689 = vmatpush1.msra.mxu0 0.0
    %2690 = vmatprep.subr.mxu0 0.0
    %2691 = vmatpush1.msra.mxu0 0.0
    %2692 = vmatprep.subr.mxu0 0.0
    %2693 = vmatpush1.msra.mxu0 0.0
    %2694 = vmatprep.subr.mxu0 0.0
    %2695 = vmatpush1.msra.mxu0 0.0
    %2696 = vmatprep.subr.mxu0 0.0
    %2697 = vmatpush1.msra.mxu0 0.0
    %2698 = vmatprep.subr.mxu0 0.0
    %2699 = vmatpush1.msra.mxu0 0.0
    %2700 = vmatprep.subr.mxu0 0.0
    %2701 = vmatpush1.msra.mxu0 0.0
    %2702 = vmatprep.subr.mxu0 0.0
    %2703 = vmatpush1.msra.mxu0 0.0
    %2704 = vmatprep.subr.mxu0 0.0
    %2705 = vmatpush1.msra.mxu0 0.0
    %2706 = vmatprep.subr.mxu0 0.0
    %2707 = vmatpush1.msra.mxu0 0.0
    %2708 = vmatprep.subr.mxu0 0.0
    %2709 = vmatpush1.msra.mxu0 %v741
    %2710 = vmatprep.subr.mxu0 0.0
    %2711 = vmatpush1.msra.mxu0 %v740
    %2712 = vmatprep.subr.mxu0 0.0
    %2713 = vmatpush1.msra.mxu0 %v739
    %2714 = vmatprep.subr.mxu0 0.0
    %2715 = vmatpush1.msra.mxu0 %v738
    %2716 = vmatprep.subr.mxu0 0.0
    %2717 = vmatpush2.msra.mxu0 0.0
    %2718 = vmatprep.subr.mxu0 0.0
    %2719 = vmatpush2.msra.mxu0 0.0
    %2720 = vmatprep.subr.mxu0 0.0
    %2721 = vmatpush2.msra.mxu0 0.0
    %2722 = vmatprep.subr.mxu0 0.0
    %2723 = vmatpush2.msra.mxu0 0.0
    %2724 = vmatprep.subr.mxu0 0.0
    %2725 = vmatpush2.msra.mxu0 0.0
    %2726 = vmatprep.subr.mxu0 0.0
    %2727 = vmatpush2.msra.mxu0 0.0
    %2728 = vmatprep.subr.mxu0 0.0
    %2729 = vmatpush2.msra.mxu0 0.0
    %2730 = vmatprep.subr.mxu0 0.0
    %2731 = vmatpush2.msra.mxu0 0.0
    %2732 = vmatprep.subr.mxu0 0.0
    %2733 = vmatpush2.msra.mxu0 0.0
    %2734 = vmatprep.subr.mxu0 0.0
    %2735 = vmatpush2.msra.mxu0 0.0
    %2736 = vmatprep.subr.mxu0 0.0
    %2737 = vmatpush2.msra.mxu0 0.0
    %2738 = vmatprep.subr.mxu0 0.0
    %2739 = vmatpush2.msra.mxu0 0.0
    %2740 = vmatprep.subr.mxu0 0.0
    %2741 = vmatpush2.msra.mxu0 0.0
    %2742 = vmatprep.subr.mxu0 0.0
    %2743 = vmatpush2.msra.mxu0 0.0
    %2744 = vmatprep.subr.mxu0 0.0
    %2745 = vmatpush2.msra.mxu0 0.0
    %2746 = vmatprep.subr.mxu0 0.0
    %2747 = vmatpush2.msra.mxu0 0.0
    %2748 = vmatprep.mubr.f32.mxu0 0.0
    %2749 = vmatmul.mubr.f32.gmra.mxu0 %v2682
    %v2750 = vpop.f32.mrf.mxu0
    %v2751 = vadd.f32 0.0, %v2750
    %v2752 = vpop.f32.mrf.mxu0
    %2753 = vdwg.mxu0
    %v2754 = vadd.f32 %v640, %v2751
    %v2755 = vtanh.pop %v2754
    %v2756 = vxor.u32 %v2754, 2147483648
    %v2757 = vmul.f32 %v2756, 1.442695
    %v2758 = vpow.pop %v2757
    %v2759 = vadd.f32 %v2758, 1.0
    %v2760 = vrcp.pop %v2759
    %v2761 = vmul.f32 1.0, %v2760
    %v2762 = vsel %vm734, %v2755, %v2761
    %v2763 = vmul.f32 %v2762, %v2455
    %2765 = vrot.lane.b32.xlu0 %v2762, 64
    %v2766 = vpop.permute.xlu0 %2765
    %v2768 = vmul.f32 %v2762, %v2766
    %2770 = vrot.lane.b32.xlu0 %v2768, 32
    %v2771 = vpop.permute.xlu0 %2770
    %v2773 = vadd.f32 %v2763, %v2771
    %v2774 = vtanh.pop %v2773
    %2776 = vrot.lane.b32.xlu0 %v2774, 64
    %v2777 = vpop.permute.xlu0 %2776
    %v2779 = vmul.f32 %v2762, %v2777
    %2780 = vrot.lane.b32.xlu0 %v2561, 32
    %v2781 = vpop.permute.xlu0 %2780
    %v2782 = vsel %vm292, %v2781, 0
    %2784 = vmatprep.subr.mxu0 0.0
    %2785 = vmatpush1.msra.mxu0 0.0
    %2786 = vmatprep.subr.mxu0 0.0
    %2787 = vmatpush1.msra.mxu0 0.0
    %2788 = vmatprep.subr.mxu0 0.0
    %2789 = vmatpush1.msra.mxu0 0.0
    %2790 = vmatprep.subr.mxu0 0.0
    %2791 = vmatpush1.msra.mxu0 0.0
    %2792 = vmatprep.subr.mxu0 0.0
    %2793 = vmatpush1.msra.mxu0 0.0
    %2794 = vmatprep.subr.mxu0 0.0
    %2795 = vmatpush1.msra.mxu0 0.0
    %2796 = vmatprep.subr.mxu0 0.0
    %2797 = vmatpush1.msra.mxu0 0.0
    %2798 = vmatprep.subr.mxu0 0.0
    %2799 = vmatpush1.msra.mxu0 0.0
    %2800 = vmatprep.subr.mxu0 0.0
    %2801 = vmatpush1.msra.mxu0 0.0
    %2802 = vmatprep.subr.mxu0 0.0
    %2803 = vmatpush1.msra.mxu0 0.0
    %2804 = vmatprep.subr.mxu0 0.0
    %2805 = vmatpush1.msra.mxu0 0.0
    %2806 = vmatprep.subr.mxu0 0.0
    %2807 = vmatpush1.msra.mxu0 0.0
    %2808 = vmatprep.subr.mxu0 0.0
    %2809 = vmatpush1.msra.mxu0 %v745
    %2810 = vmatprep.subr.mxu0 0.0
    %2811 = vmatpush1.msra.mxu0 %v744
    %2812 = vmatprep.subr.mxu0 0.0
    %2813 = vmatpush1.msra.mxu0 %v743
    %2814 = vmatprep.subr.mxu0 0.0
    %2815 = vmatpush1.msra.mxu0 %v742
    %2816 = vmatprep.subr.mxu0 0.0
    %2817 = vmatpush2.msra.mxu0 0.0
    %2818 = vmatprep.subr.mxu0 0.0
    %2819 = vmatpush2.msra.mxu0 0.0
    %2820 = vmatprep.subr.mxu0 0.0
    %2821 = vmatpush2.msra.mxu0 0.0
    %2822 = vmatprep.subr.mxu0 0.0
    %2823 = vmatpush2.msra.mxu0 0.0
    %2824 = vmatprep.subr.mxu0 0.0
    %2825 = vmatpush2.msra.mxu0 0.0
    %2826 = vmatprep.subr.mxu0 0.0
    %2827 = vmatpush2.msra.mxu0 0.0
    %2828 = vmatprep.subr.mxu0 0.0
    %2829 = vmatpush2.msra.mxu0 0.0
    %2830 = vmatprep.subr.mxu0 0.0
    %2831 = vmatpush2.msra.mxu0 0.0
    %2832 = vmatprep.subr.mxu0 0.0
    %2833 = vmatpush2.msra.mxu0 0.0
    %2834 = vmatprep.subr.mxu0 0.0
    %2835 = vmatpush2.msra.mxu0 0.0
    %2836 = vmatprep.subr.mxu0 0.0
    %2837 = vmatpush2.msra.mxu0 0.0
    %2838 = vmatprep.subr.mxu0 0.0
    %2839 = vmatpush2.msra.mxu0 0.0
    %2840 = vmatprep.subr.mxu0 0.0
    %2841 = vmatpush2.msra.mxu0 0.0
    %2842 = vmatprep.subr.mxu0 0.0
    %2843 = vmatpush2.msra.mxu0 0.0
    %2844 = vmatprep.subr.mxu0 0.0
    %2845 = vmatpush2.msra.mxu0 0.0
    %2846 = vmatprep.subr.mxu0 0.0
    %2847 = vmatpush2.msra.mxu0 0.0
    %2848 = vmatprep.mubr.f32.mxu0 0.0
    %2849 = vmatmul.mubr.f32.gmra.mxu0 %v2782
    %v2850 = vpop.f32.mrf.mxu0
    %v2851 = vadd.f32 0.0, %v2850
    %v2852 = vpop.f32.mrf.mxu0
    %2853 = vdwg.mxu0
    %v2854 = vadd.f32 %v727, %v2851
    %v2855 = vtanh.pop %v2854
    %v2856 = vxor.u32 %v2854, 2147483648
    %v2857 = vmul.f32 %v2856, 1.442695
    %v2858 = vpow.pop %v2857
    %v2859 = vadd.f32 %v2858, 1.0
    %v2860 = vrcp.pop %v2859
    %v2861 = vmul.f32 1.0, %v2860
    %v2862 = vsel %vm734, %v2855, %v2861
    %v2863 = vmul.f32 %v2862, %v2555
    %2865 = vrot.lane.b32.xlu0 %v2862, 64
    %v2866 = vpop.permute.xlu0 %2865
    %v2868 = vmul.f32 %v2862, %v2866
    %2870 = vrot.lane.b32.xlu0 %v2868, 32
    %v2871 = vpop.permute.xlu0 %2870
    %v2873 = vadd.f32 %v2863, %v2871
    %v2874 = vtanh.pop %v2873
    %2876 = vrot.lane.b32.xlu0 %v2874, 64
    %v2877 = vpop.permute.xlu0 %2876
    %v2879 = vmul.f32 %v2862, %v2877
    %2881 = vrot.lane.b32.xlu0 %v2779, 32
    %v2882 = vpop.permute.xlu0 %2881
    %2885 = vrot.lane.b32.xlu0 %v2879, 64
    %v2886 = vpop.permute.xlu0 %2885
    %v2888 = vsel %vm292, %v2882, %v2886
    %v2890 = vsel %vm197, %v2888, 0
    %2892 = vmatprep.subr.mxu0 0.0
    %2893 = vmatpush1.msra.mxu0 0.0
    %2894 = vmatprep.subr.mxu0 0.0
    %2895 = vmatpush1.msra.mxu0 0.0
    %2896 = vmatprep.subr.mxu0 0.0
    %2897 = vmatpush1.msra.mxu0 0.0
    %2898 = vmatprep.subr.mxu0 0.0
    %2899 = vmatpush1.msra.mxu0 0.0
    %2900 = vmatprep.subr.mxu0 0.0
    %2901 = vmatpush1.msra.mxu0 0.0
    %2902 = vmatprep.subr.mxu0 0.0
    %2903 = vmatpush1.msra.mxu0 0.0
    %2904 = vmatprep.subr.mxu0 0.0
    %2905 = vmatpush1.msra.mxu0 0.0
    %2906 = vmatprep.subr.mxu0 0.0
    %2907 = vmatpush1.msra.mxu0 0.0
    %2908 = vmatprep.subr.mxu0 %v761
    %2909 = vmatpush1.msra.mxu0 %v760
    %2910 = vmatprep.subr.mxu0 %v759
    %2911 = vmatpush1.msra.mxu0 %v758
    %2912 = vmatprep.subr.mxu0 %v757
    %2913 = vmatpush1.msra.mxu0 %v756
    %2914 = vmatprep.subr.mxu0 %v755
    %2915 = vmatpush1.msra.mxu0 %v754
    %2916 = vmatprep.subr.mxu0 %v753
    %2917 = vmatpush1.msra.mxu0 %v752
    %2918 = vmatprep.subr.mxu0 %v751
    %2919 = vmatpush1.msra.mxu0 %v750
    %2920 = vmatprep.subr.mxu0 %v749
    %2921 = vmatpush1.msra.mxu0 %v748
    %2922 = vmatprep.subr.mxu0 %v747
    %2923 = vmatpush1.msra.mxu0 %v746
    %2924 = vmatprep.subr.mxu0 0.0
    %2925 = vmatpush2.msra.mxu0 0.0
    %2926 = vmatprep.subr.mxu0 0.0
    %2927 = vmatpush2.msra.mxu0 0.0
    %2928 = vmatprep.subr.mxu0 0.0
    %2929 = vmatpush2.msra.mxu0 0.0
    %2930 = vmatprep.subr.mxu0 0.0
    %2931 = vmatpush2.msra.mxu0 0.0
    %2932 = vmatprep.subr.mxu0 0.0
    %2933 = vmatpush2.msra.mxu0 0.0
    %2934 = vmatprep.subr.mxu0 0.0
    %2935 = vmatpush2.msra.mxu0 0.0
    %2936 = vmatprep.subr.mxu0 0.0
    %2937 = vmatpush2.msra.mxu0 0.0
    %2938 = vmatprep.subr.mxu0 0.0
    %2939 = vmatpush2.msra.mxu0 0.0
    %2940 = vmatprep.subr.mxu0 0.0
    %2941 = vmatpush2.msra.mxu0 0.0
    %2942 = vmatprep.subr.mxu0 0.0
    %2943 = vmatpush2.msra.mxu0 0.0
    %2944 = vmatprep.subr.mxu0 0.0
    %2945 = vmatpush2.msra.mxu0 0.0
    %2946 = vmatprep.subr.mxu0 0.0
    %2947 = vmatpush2.msra.mxu0 0.0
    %2948 = vmatprep.subr.mxu0 0.0
    %2949 = vmatpush2.msra.mxu0 0.0
    %2950 = vmatprep.subr.mxu0 0.0
    %2951 = vmatpush2.msra.mxu0 0.0
    %2952 = vmatprep.subr.mxu0 0.0
    %2953 = vmatpush2.msra.mxu0 0.0
    %2954 = vmatprep.subr.mxu0 0.0
    %2955 = vmatpush2.msra.mxu0 0.0
    %2956 = vmatprep.mubr.f32.mxu0 0.0
    %2957 = vmatmul.mubr.f32.gmra.mxu0 %v2890
    %v2958 = vpop.f32.mrf.mxu0
    %v2959 = vadd.f32 %v971, %v2958
    %v2960 = vpop.f32.mrf.mxu0
    %v2961 = vadd.f32 %v975, %v2960
    %2962 = vdwg.mxu0
    %v2963 = vtanh.pop %v2959
    %v2964 = vtanh.pop %v2961
    %v2965 = vsel %vm736, %v2963, %v2959
    %v2966 = vsel %vm737, %v2964, %v2961
    %v2969 = vcombine.low %v2965, %v2966
    %v2971 = vunpack.c.l.s4 1966171168
    %v2972 = vunpack.c.0.s8 %v2971
    %v2973 = vlaneseq
    %v2974 = vshrl.u32 %v2973, 7
    %v2975 = vsub.s32 %v2972, %v2974
    %v2976 = vrot.slane %v2969, %v2975
    %v2977 = vcombine.high %v2976, %v2976
    %v2979 = vunpack.c.l.s4 1966171168
    %v2980 = vunpack.c.0.s8 %v2979
    %v2981 = vlaneseq
    %v2982 = vshrl.u32 %v2981, 7
    %v2983 = vsub.s32 %v2980, %v2982
    %v2984 = vrot.slane %v2976, %v2983
    %v2986 = vunpack.c.l.s4 1966171168
    %v2987 = vunpack.c.0.s8 %v2986
    %v2988 = vlaneseq
    %v2989 = vshrl.u32 %v2988, 7
    %v2990 = vsub.s32 %v2987, %v2989
    %v2991 = vrot.slane %v2977, %v2990
    %s2994 = scalar_lea.vmem [#allocation19], 6
    %2995 = vst.msk [vmem:[%s2994] ss:$8 sm:$0x3] %vm1086, %v2984
    %2996 = vst.msk [vmem:[%s2994] ss:$8 sm:$0x0] %vm1086, %v2984
    %s2997 = scalar_lea.vmem [#allocation19], 22
    %2998 = vst.msk [vmem:[%s2997] ss:$8 sm:$0x3] %vm1086, %v2991
    %2999 = vst.msk [vmem:[%s2997] ss:$8 sm:$0x0] %vm1086, %v2991
    %v3000 = vsel %vm292, %v2882, 0
    %3002 = vmatprep.subr.mxu0 0.0
    %3003 = vmatpush1.msra.mxu0 0.0
    %3004 = vmatprep.subr.mxu0 0.0
    %3005 = vmatpush1.msra.mxu0 0.0
    %3006 = vmatprep.subr.mxu0 0.0
    %3007 = vmatpush1.msra.mxu0 0.0
    %3008 = vmatprep.subr.mxu0 0.0
    %3009 = vmatpush1.msra.mxu0 0.0
    %3010 = vmatprep.subr.mxu0 0.0
    %3011 = vmatpush1.msra.mxu0 0.0
    %3012 = vmatprep.subr.mxu0 0.0
    %3013 = vmatpush1.msra.mxu0 0.0
    %3014 = vmatprep.subr.mxu0 0.0
    %3015 = vmatpush1.msra.mxu0 0.0
    %3016 = vmatprep.subr.mxu0 0.0
    %3017 = vmatpush1.msra.mxu0 0.0
    %3018 = vmatprep.subr.mxu0 0.0
    %3019 = vmatpush1.msra.mxu0 0.0
    %3020 = vmatprep.subr.mxu0 0.0
    %3021 = vmatpush1.msra.mxu0 0.0
    %3022 = vmatprep.subr.mxu0 0.0
    %3023 = vmatpush1.msra.mxu0 0.0
    %3024 = vmatprep.subr.mxu0 0.0
    %3025 = vmatpush1.msra.mxu0 0.0
    %3026 = vmatprep.subr.mxu0 0.0
    %3027 = vmatpush1.msra.mxu0 %v741
    %3028 = vmatprep.subr.mxu0 0.0
    %3029 = vmatpush1.msra.mxu0 %v740
    %3030 = vmatprep.subr.mxu0 0.0
    %3031 = vmatpush1.msra.mxu0 %v739
    %3032 = vmatprep.subr.mxu0 0.0
    %3033 = vmatpush1.msra.mxu0 %v738
    %3034 = vmatprep.subr.mxu0 0.0
    %3035 = vmatpush2.msra.mxu0 0.0
    %3036 = vmatprep.subr.mxu0 0.0
    %3037 = vmatpush2.msra.mxu0 0.0
    %3038 = vmatprep.subr.mxu0 0.0
    %3039 = vmatpush2.msra.mxu0 0.0
    %3040 = vmatprep.subr.mxu0 0.0
    %3041 = vmatpush2.msra.mxu0 0.0
    %3042 = vmatprep.subr.mxu0 0.0
    %3043 = vmatpush2.msra.mxu0 0.0
    %3044 = vmatprep.subr.mxu0 0.0
    %3045 = vmatpush2.msra.mxu0 0.0
    %3046 = vmatprep.subr.mxu0 0.0
    %3047 = vmatpush2.msra.mxu0 0.0
    %3048 = vmatprep.subr.mxu0 0.0
    %3049 = vmatpush2.msra.mxu0 0.0
    %3050 = vmatprep.subr.mxu0 0.0
    %3051 = vmatpush2.msra.mxu0 0.0
    %3052 = vmatprep.subr.mxu0 0.0
    %3053 = vmatpush2.msra.mxu0 0.0
    %3054 = vmatprep.subr.mxu0 0.0
    %3055 = vmatpush2.msra.mxu0 0.0
    %3056 = vmatprep.subr.mxu0 0.0
    %3057 = vmatpush2.msra.mxu0 0.0
    %3058 = vmatprep.subr.mxu0 0.0
    %3059 = vmatpush2.msra.mxu0 0.0
    %3060 = vmatprep.subr.mxu0 0.0
    %3061 = vmatpush2.msra.mxu0 0.0
    %3062 = vmatprep.subr.mxu0 0.0
    %3063 = vmatpush2.msra.mxu0 0.0
    %3064 = vmatprep.subr.mxu0 0.0
    %3065 = vmatpush2.msra.mxu0 0.0
    %3066 = vmatprep.mubr.f32.mxu0 0.0
    %3067 = vmatmul.mubr.f32.gmra.mxu0 %v3000
    %v3068 = vpop.f32.mrf.mxu0
    %v3069 = vadd.f32 0.0, %v3068
    %v3070 = vpop.f32.mrf.mxu0
    %3071 = vdwg.mxu0
    %v3072 = vadd.f32 %v640, %v3069
    %v3073 = vtanh.pop %v3072
    %v3074 = vxor.u32 %v3072, 2147483648
    %v3075 = vmul.f32 %v3074, 1.442695
    %v3076 = vpow.pop %v3075
    %v3077 = vadd.f32 %v3076, 1.0
    %v3078 = vrcp.pop %v3077
    %v3079 = vmul.f32 1.0, %v3078
    %v3080 = vsel %vm734, %v3073, %v3079
    %v3081 = vmul.f32 %v3080, %v2773
    %3083 = vrot.lane.b32.xlu0 %v3080, 64
    %v3084 = vpop.permute.xlu0 %3083
    %v3086 = vmul.f32 %v3080, %v3084
    %3088 = vrot.lane.b32.xlu0 %v3086, 32
    %v3089 = vpop.permute.xlu0 %3088
    %v3091 = vadd.f32 %v3081, %v3089
    %v3092 = vtanh.pop %v3091
    %3094 = vrot.lane.b32.xlu0 %v3092, 64
    %v3095 = vpop.permute.xlu0 %3094
    %v3097 = vmul.f32 %v3080, %v3095
    %3098 = vrot.lane.b32.xlu0 %v2879, 32
    %v3099 = vpop.permute.xlu0 %3098
    %v3100 = vsel %vm292, %v3099, 0
    %3102 = vmatprep.subr.mxu0 0.0
    %3103 = vmatpush1.msra.mxu0 0.0
    %3104 = vmatprep.subr.mxu0 0.0
    %3105 = vmatpush1.msra.mxu0 0.0
    %3106 = vmatprep.subr.mxu0 0.0
    %3107 = vmatpush1.msra.mxu0 0.0
    %3108 = vmatprep.subr.mxu0 0.0
    %3109 = vmatpush1.msra.mxu0 0.0
    %3110 = vmatprep.subr.mxu0 0.0
    %3111 = vmatpush1.msra.mxu0 0.0
    %3112 = vmatprep.subr.mxu0 0.0
    %3113 = vmatpush1.msra.mxu0 0.0
    %3114 = vmatprep.subr.mxu0 0.0
    %3115 = vmatpush1.msra.mxu0 0.0
    %3116 = vmatprep.subr.mxu0 0.0
    %3117 = vmatpush1.msra.mxu0 0.0
    %3118 = vmatprep.subr.mxu0 0.0
    %3119 = vmatpush1.msra.mxu0 0.0
    %3120 = vmatprep.subr.mxu0 0.0
    %3121 = vmatpush1.msra.mxu0 0.0
    %3122 = vmatprep.subr.mxu0 0.0
    %3123 = vmatpush1.msra.mxu0 0.0
    %3124 = vmatprep.subr.mxu0 0.0
    %3125 = vmatpush1.msra.mxu0 0.0
    %3126 = vmatprep.subr.mxu0 0.0
    %3127 = vmatpush1.msra.mxu0 %v745
    %3128 = vmatprep.subr.mxu0 0.0
    %3129 = vmatpush1.msra.mxu0 %v744
    %3130 = vmatprep.subr.mxu0 0.0
    %3131 = vmatpush1.msra.mxu0 %v743
    %3132 = vmatprep.subr.mxu0 0.0
    %3133 = vmatpush1.msra.mxu0 %v742
    %3134 = vmatprep.subr.mxu0 0.0
    %3135 = vmatpush2.msra.mxu0 0.0
    %3136 = vmatprep.subr.mxu0 0.0
    %3137 = vmatpush2.msra.mxu0 0.0
    %3138 = vmatprep.subr.mxu0 0.0
    %3139 = vmatpush2.msra.mxu0 0.0
    %3140 = vmatprep.subr.mxu0 0.0
    %3141 = vmatpush2.msra.mxu0 0.0
    %3142 = vmatprep.subr.mxu0 0.0
    %3143 = vmatpush2.msra.mxu0 0.0
    %3144 = vmatprep.subr.mxu0 0.0
    %3145 = vmatpush2.msra.mxu0 0.0
    %3146 = vmatprep.subr.mxu0 0.0
    %3147 = vmatpush2.msra.mxu0 0.0
    %3148 = vmatprep.subr.mxu0 0.0
    %3149 = vmatpush2.msra.mxu0 0.0
    %3150 = vmatprep.subr.mxu0 0.0
    %3151 = vmatpush2.msra.mxu0 0.0
    %3152 = vmatprep.subr.mxu0 0.0
    %3153 = vmatpush2.msra.mxu0 0.0
    %3154 = vmatprep.subr.mxu0 0.0
    %3155 = vmatpush2.msra.mxu0 0.0
    %3156 = vmatprep.subr.mxu0 0.0
    %3157 = vmatpush2.msra.mxu0 0.0
    %3158 = vmatprep.subr.mxu0 0.0
    %3159 = vmatpush2.msra.mxu0 0.0
    %3160 = vmatprep.subr.mxu0 0.0
    %3161 = vmatpush2.msra.mxu0 0.0
    %3162 = vmatprep.subr.mxu0 0.0
    %3163 = vmatpush2.msra.mxu0 0.0
    %3164 = vmatprep.subr.mxu0 0.0
    %3165 = vmatpush2.msra.mxu0 0.0
    %3166 = vmatprep.mubr.f32.mxu0 0.0
    %3167 = vmatmul.mubr.f32.gmra.mxu0 %v3100
    %v3168 = vpop.f32.mrf.mxu0
    %v3169 = vadd.f32 0.0, %v3168
    %v3170 = vpop.f32.mrf.mxu0
    %3171 = vdwg.mxu0
    %v3172 = vadd.f32 %v727, %v3169
    %v3173 = vtanh.pop %v3172
    %v3174 = vxor.u32 %v3172, 2147483648
    %v3175 = vmul.f32 %v3174, 1.442695
    %v3176 = vpow.pop %v3175
    %v3177 = vadd.f32 %v3176, 1.0
    %v3178 = vrcp.pop %v3177
    %v3179 = vmul.f32 1.0, %v3178
    %v3180 = vsel %vm734, %v3173, %v3179
    %v3181 = vmul.f32 %v3180, %v2873
    %3183 = vrot.lane.b32.xlu0 %v3180, 64
    %v3184 = vpop.permute.xlu0 %3183
    %v3186 = vmul.f32 %v3180, %v3184
    %3188 = vrot.lane.b32.xlu0 %v3186, 32
    %v3189 = vpop.permute.xlu0 %3188
    %v3191 = vadd.f32 %v3181, %v3189
    %v3192 = vtanh.pop %v3191
    %3194 = vrot.lane.b32.xlu0 %v3192, 64
    %v3195 = vpop.permute.xlu0 %3194
    %v3197 = vmul.f32 %v3180, %v3195
    %3199 = vrot.lane.b32.xlu0 %v3097, 32
    %v3200 = vpop.permute.xlu0 %3199
    %3203 = vrot.lane.b32.xlu0 %v3197, 64
    %v3204 = vpop.permute.xlu0 %3203
    %v3206 = vsel %vm292, %v3200, %v3204
    %v3208 = vsel %vm197, %v3206, 0
    %3210 = vmatprep.subr.mxu0 0.0
    %3211 = vmatpush1.msra.mxu0 0.0
    %3212 = vmatprep.subr.mxu0 0.0
    %3213 = vmatpush1.msra.mxu0 0.0
    %3214 = vmatprep.subr.mxu0 0.0
    %3215 = vmatpush1.msra.mxu0 0.0
    %3216 = vmatprep.subr.mxu0 0.0
    %3217 = vmatpush1.msra.mxu0 0.0
    %3218 = vmatprep.subr.mxu0 0.0
    %3219 = vmatpush1.msra.mxu0 0.0
    %3220 = vmatprep.subr.mxu0 0.0
    %3221 = vmatpush1.msra.mxu0 0.0
    %3222 = vmatprep.subr.mxu0 0.0
    %3223 = vmatpush1.msra.mxu0 0.0
    %3224 = vmatprep.subr.mxu0 0.0
    %3225 = vmatpush1.msra.mxu0 0.0
    %3226 = vmatprep.subr.mxu0 %v761
    %3227 = vmatpush1.msra.mxu0 %v760
    %3228 = vmatprep.subr.mxu0 %v759
    %3229 = vmatpush1.msra.mxu0 %v758
    %3230 = vmatprep.subr.mxu0 %v757
    %3231 = vmatpush1.msra.mxu0 %v756
    %3232 = vmatprep.subr.mxu0 %v755
    %3233 = vmatpush1.msra.mxu0 %v754
    %3234 = vmatprep.subr.mxu0 %v753
    %3235 = vmatpush1.msra.mxu0 %v752
    %3236 = vmatprep.subr.mxu0 %v751
    %3237 = vmatpush1.msra.mxu0 %v750
    %3238 = vmatprep.subr.mxu0 %v749
    %3239 = vmatpush1.msra.mxu0 %v748
    %3240 = vmatprep.subr.mxu0 %v747
    %3241 = vmatpush1.msra.mxu0 %v746
    %3242 = vmatprep.subr.mxu0 0.0
    %3243 = vmatpush2.msra.mxu0 0.0
    %3244 = vmatprep.subr.mxu0 0.0
    %3245 = vmatpush2.msra.mxu0 0.0
    %3246 = vmatprep.subr.mxu0 0.0
    %3247 = vmatpush2.msra.mxu0 0.0
    %3248 = vmatprep.subr.mxu0 0.0
    %3249 = vmatpush2.msra.mxu0 0.0
    %3250 = vmatprep.subr.mxu0 0.0
    %3251 = vmatpush2.msra.mxu0 0.0
    %3252 = vmatprep.subr.mxu0 0.0
    %3253 = vmatpush2.msra.mxu0 0.0
    %3254 = vmatprep.subr.mxu0 0.0
    %3255 = vmatpush2.msra.mxu0 0.0
    %3256 = vmatprep.subr.mxu0 0.0
    %3257 = vmatpush2.msra.mxu0 0.0
    %3258 = vmatprep.subr.mxu0 0.0
    %3259 = vmatpush2.msra.mxu0 0.0
    %3260 = vmatprep.subr.mxu0 0.0
    %3261 = vmatpush2.msra.mxu0 0.0
    %3262 = vmatprep.subr.mxu0 0.0
    %3263 = vmatpush2.msra.mxu0 0.0
    %3264 = vmatprep.subr.mxu0 0.0
    %3265 = vmatpush2.msra.mxu0 0.0
    %3266 = vmatprep.subr.mxu0 0.0
    %3267 = vmatpush2.msra.mxu0 0.0
    %3268 = vmatprep.subr.mxu0 0.0
    %3269 = vmatpush2.msra.mxu0 0.0
    %3270 = vmatprep.subr.mxu0 0.0
    %3271 = vmatpush2.msra.mxu0 0.0
    %3272 = vmatprep.subr.mxu0 0.0
    %3273 = vmatpush2.msra.mxu0 0.0
    %3274 = vmatprep.mubr.f32.mxu0 0.0
    %3275 = vmatmul.mubr.f32.gmra.mxu0 %v3208
    %v3276 = vpop.f32.mrf.mxu0
    %v3277 = vadd.f32 %v971, %v3276
    %v3278 = vpop.f32.mrf.mxu0
    %v3279 = vadd.f32 %v975, %v3278
    %3280 = vdwg.mxu0
    %v3281 = vtanh.pop %v3277
    %v3282 = vtanh.pop %v3279
    %v3283 = vsel %vm736, %v3281, %v3277
    %v3284 = vsel %vm737, %v3282, %v3279
    %v3287 = vcombine.low %v3283, %v3284
    %v3289 = vunpack.c.l.s4 1966171168
    %v3290 = vunpack.c.0.s8 %v3289
    %v3291 = vlaneseq
    %v3292 = vshrl.u32 %v3291, 7
    %v3293 = vsub.s32 %v3290, %v3292
    %v3294 = vrot.slane %v3287, %v3293
    %v3295 = vcombine.high %v3294, %v3294
    %v3297 = vunpack.c.l.s4 1966171168
    %v3298 = vunpack.c.0.s8 %v3297
    %v3299 = vlaneseq
    %v3300 = vshrl.u32 %v3299, 7
    %v3301 = vsub.s32 %v3298, %v3300
    %v3302 = vrot.slane %v3294, %v3301
    %v3304 = vunpack.c.l.s4 1966171168
    %v3305 = vunpack.c.0.s8 %v3304
    %v3306 = vlaneseq
    %v3307 = vshrl.u32 %v3306, 7
    %v3308 = vsub.s32 %v3305, %v3307
    %v3309 = vrot.slane %v3295, %v3308
    %s3312 = scalar_lea.vmem [#allocation19], 7
    %3313 = vst.msk [vmem:[%s3312] ss:$8 sm:$0x3] %vm1086, %v3302
    %3314 = vst.msk [vmem:[%s3312] ss:$8 sm:$0x0] %vm1086, %v3302
    %s3315 = scalar_lea.vmem [#allocation19], 23
    %3316 = vst.msk [vmem:[%s3315] ss:$8 sm:$0x3] %vm1086, %v3309
    %3317 = vst.msk [vmem:[%s3315] ss:$8 sm:$0x0] %vm1086, %v3309
    // Predicated region
    $region110: #{tpu_custom_call.1} parent=1 // pred_check
      _
    $region111: #{tpu_custom_call.1} parent=1 // pred_check_branch
      %3319 = sbr.rel (0) target = $region113
    $region112: #{tpu_custom_call.1} parent=1 // pred_region
      %s3321 = ssub.s32 512, 512
      %3322 = vsyncadd [#allocation4], %s3321
      %s3323 = sshll.u32 [#allocation19], 4
      %s3324 = int_to_ptr.vmem [resolvable:$true] %s3323
      %3329 = dma.vmem_to_hbm [thread:$0]  %s3324, 512, %s17, [#allocation4], 256, 256, 16
    $region113: #{tpu_custom_call.1} parent=1 // pred_fallthru
      _
    // Predicated region
    $region114: #{tpu_custom_call.1} parent=1 // pred_check
      _
    $region115: #{tpu_custom_call.1} parent=1 // pred_check_branch
      %3331 = sbr.rel (0) target = $region117
    $region116: #{tpu_custom_call.1} parent=1 // pred_region
      %3332 = dma.done [#allocation4], 512
    $region117: #{tpu_custom_call.1} parent=1 // pred_fallthru
      _
    %3333 = vsyncpa [#allocation3], 1
    %3334 = vsyncpa [#allocation6], 1
    %3335 = vsyncpa [#allocation9], 1
    %3336 = vsyncpa [#allocation12], 1
    %3337 = vsyncpa [#allocation15], 1
    %3338 = vsyncpa [#allocation18], 1
    %3339 = vsyncpa [#allocation4], 1

</llo_original>
